<compile_context>
chip_gen: v7x
topology: tpu7x:2x2x1
jax: 0.10.0
libtpu: 0.0.40
codegen_flags: <defaults>
</compile_context>

<pallas_src>
import functools

import jax
import jax.numpy as jnp
from jax.experimental import pallas as pl
from jax.experimental.pallas import tpu as pltpu

# ---------------- model hyper-parameters (small, synthetic) ----------------
VOCAB = 50
EMB_DIM = 16
HIDDEN = 32
OUT_DIM = 2
N_LAYERS = 2
PAD_IDX = 0
T_LEN = 8
BATCH = 4

VMEM_SPEC = pl.BlockSpec(memory_space=pltpu.MemorySpace.VMEM)


# ---------------- fused Pallas kernel ----------------
def _fused_lstm_kernel(len_ref, x_ref, *refs, T, B, H, n_layers):
    """Fused bidirectional multi-layer LSTM + final Linear.

    len_ref : (B, 1)    int32  sequence lengths
    x_ref   : (T*B, E)  f32    embedded input, flattened over (time, batch)
    per layer (5 refs): W_ih_fwd (Din,4H), W_ih_bwd (Din,4H),
                        b_fwd (1,4H), b_bwd (1,4H), W_hh_stack (2H,4H)
    then fc_w (2H, OUT), fc_b (1, OUT), out_ref (B, OUT), 6 scratch refs.
    Gate column order within 4H is PyTorch's (i, f, g, o).
    """
    nw = 5 * n_layers
    layer_refs = [refs[5 * l:5 * l + 5] for l in range(n_layers)]
    fc_w_ref = refs[nw]
    fc_b_ref = refs[nw + 1]
    out_ref = refs[nw + 2]
    h_sc, c_sc, yf_sc, yb_sc, gxf_sc, gxb_sc = refs[nw + 3:]

    H4 = 4 * H

    # ---- loop-invariant values, hoisted once ----
    lens = len_ref[...]                                           # (B, 1) int32
    lens2 = jnp.concatenate([lens, lens], axis=0)                 # (2B, 1) int32
    lane = jax.lax.broadcasted_iota(jnp.int32, (2 * B, H4), 1)
    is_g_lane = (lane >= 2 * H) & (lane < 3 * H)                  # tanh (g) lanes
    row = jax.lax.broadcasted_iota(jnp.int32, (2 * B, H), 0)
    is_fwd_row = row < B                                          # (2B, H) bool
    rowc = jax.lax.broadcasted_iota(jnp.int32, (2 * B, 1), 0)
    is_fwd_col = rowc < B                                         # (2B, 1) bool

    for layer in range(n_layers):
        wih_f_ref, wih_b_ref, b_f_ref, b_b_ref, whh_ref = layer_refs[layer]
        last = layer == n_layers - 1

        # ---- input projection hoisted out of the recurrence:
        #      one matmul per direction over all T timesteps, bias folded in.
        if layer == 0:
            xin = x_ref[...]                                      # (T*B, E)
        else:
            xin = jnp.concatenate([yf_sc[...], yb_sc[...]], axis=1)   # (T*B, 2H)
        gxf_sc[...] = (jnp.dot(xin, wih_f_ref[...],
                               preferred_element_type=jnp.float32) + b_f_ref[...])
        gxb_sc[...] = (jnp.dot(xin, wih_b_ref[...],
                               preferred_element_type=jnp.float32) + b_b_ref[...])

        whh = whh_ref[...]                                        # (2H, 4H), hoisted
        h_sc[...] = jnp.zeros_like(h_sc)
        c_sc[...] = jnp.zeros_like(c_sc)

        for s in range(T):                                        # static unroll (T small)
            r = T - 1 - s                                         # backward time index
            # Direction folded into sublanes: rows [0:B] = fwd @ time s,
            # rows [B:2B] = bwd @ time r  ->  (2B, 4H) = one f32 vreg.
            gx = jnp.concatenate([gxf_sc[s * B:(s + 1) * B, :],
                                  gxb_sc[r * B:(r + 1) * B, :]], axis=0)
            h = h_sc[...]                                         # (2B, H)
            # One recurrent matmul for both directions:
            # fwd rows: [h_f | 0] @ [Whh_f ; Whh_b] = h_f @ Whh_f ; bwd rows analogous.
            hd = jnp.concatenate([jnp.where(is_fwd_row, h, 0.0),
                                  jnp.where(is_fwd_row, 0.0, h)], axis=1)   # (2B, 2H)
            gates = gx + jnp.dot(hd, whh, preferred_element_type=jnp.float32)  # (2B,4H)

            # Full-width activations on the EUP, lane-select the tanh'd g gate.
            act = jnp.where(is_g_lane, jnp.tanh(gates), jax.nn.sigmoid(gates))
            i_g = act[:, 0 * H:1 * H]
            f_g = act[:, 1 * H:2 * H]
            g_g = act[:, 2 * H:3 * H]
            o_g = act[:, 3 * H:4 * H]
            c_new = f_g * c_sc[...] + i_g * g_g
            h_new = o_g * jnp.tanh(c_new)

            # packed-sequence semantics: freeze state past each sequence's length.
            t_idx = jnp.where(is_fwd_col, s, r)                   # (2B, 1) int32
            m = lens2 > t_idx                                     # (2B, 1) bool
            h_upd = jnp.where(m, h_new, h)
            c_upd = jnp.where(m, c_new, c_sc[...])
            h_sc[...] = h_upd
            c_sc[...] = c_upd

            if not last:
                # pad_packed_sequence zero-pads; store the per-timestep output in
                # *original* time order for the next layer to consume.
                y = jnp.where(m, h_upd, 0.0)                      # (2B, H)
                yf_sc[s * B:(s + 1) * B, :] = y[0:B, :]
                yb_sc[r * B:(r + 1) * B, :] = y[B:2 * B, :]

    # hidden = cat(last-layer fwd final h, last-layer bwd final h); dropout = id.
    h = h_sc[...]
    hidden = jnp.concatenate([h[0:B, :], h[B:2 * B, :]], axis=1)  # (B, 2H)
    out_ref[...] = (jnp.dot(hidden, fc_w_ref[...],
                            preferred_element_type=jnp.float32) + fc_b_ref[...])


# ---------------- wrapper ----------------
def lstm_forward(params, text, text_lengths):
    """text: (T, B) int32; text_lengths: (B,) int32 (sorted descending, as PyTorch
    pack_padded_sequence requires). Returns (B, OUT_DIM) float32."""
    T, B = text.shape

    # Embedding gather is plain-JAX glue (no clean Pallas equivalent at this size).
    embedded = params["embedding"][text]                          # (T, B, E)
    # self.dropout(...) -> identity (eval mode)
    x_flat = embedded.reshape(T * B, EMB_DIM)
    lens = text_lengths.reshape(B, 1).astype(jnp.int32)

    inputs = [lens, x_flat]
    for layer in range(N_LAYERS):
        p = params["lstm"][layer]
        wih_f, whh_f, b_f = p["fwd"]
        wih_b, whh_b, b_b = p["bwd"]
        whh_stack = jnp.concatenate([whh_f, whh_b], axis=0)       # (2H, 4H)
        inputs += [wih_f, wih_b, b_f, b_b, whh_stack]
    inputs += [params["fc_w"], params["fc_b"]]

    kern = functools.partial(_fused_lstm_kernel, T=T, B=B, H=HIDDEN,
                             n_layers=N_LAYERS)
    out = pl.pallas_call(
        kern,
        out_shape=jax.ShapeDtypeStruct((B, OUT_DIM), jnp.float32),
        in_specs=[VMEM_SPEC] * len(inputs),
        out_specs=VMEM_SPEC,
        scratch_shapes=[
            pltpu.VMEM((2 * B, HIDDEN), jnp.float32),             # h state (fwd|bwd)
            pltpu.VMEM((2 * B, HIDDEN), jnp.float32),             # c state (fwd|bwd)
            pltpu.VMEM((T * B, HIDDEN), jnp.float32),             # layer out, fwd half
            pltpu.VMEM((T * B, HIDDEN), jnp.float32),             # layer out, bwd half
            pltpu.VMEM((T * B, 4 * HIDDEN), jnp.float32),         # gx fwd (input proj)
            pltpu.VMEM((T * B, 4 * HIDDEN), jnp.float32),         # gx bwd (input proj)
        ],
    )(*inputs)
    return out


def init_params(key):
    kiter = iter(jax.random.split(key, 64))

    def nrm(shape, scale=0.1):
        return scale * jax.random.normal(next(kiter), shape, dtype=jnp.float32)

    emb = nrm((VOCAB, EMB_DIM))
    emb = emb.at[PAD_IDX].set(0.0)                                # padding_idx row is zero

    lstm = []
    for layer in range(N_LAYERS):
        din = EMB_DIM if layer == 0 else 2 * HIDDEN
        layer_p = {}
        for d in ("fwd", "bwd"):
            layer_p[d] = (nrm((din, 4 * HIDDEN)),                 # W_ih^T  (gates i,f,g,o)
                          nrm((HIDDEN, 4 * HIDDEN)),              # W_hh^T
                          nrm((1, 4 * HIDDEN)))                   # b_ih + b_hh
        lstm.append(layer_p)

    fc_w = nrm((2 * HIDDEN, OUT_DIM))
    fc_b = nrm((1, OUT_DIM))
    return {"embedding": emb, "lstm": lstm, "fc_w": fc_w, "fc_b": fc_b}


if __name__ == "__main__":
    key = jax.random.PRNGKey(0)
    k_param, k_text = jax.random.split(key)

    params = init_params(k_param)

    # lengths sorted descending (pack_padded_sequence enforce_sorted=True)
    text_lengths = jnp.array([8, 6, 5, 3], dtype=jnp.int32)
    text = jax.random.randint(k_text, (T_LEN, BATCH), 1, VOCAB, dtype=jnp.int32)
    t_idx = jnp.arange(T_LEN)[:, None]
    text = jnp.where(t_idx < text_lengths[None, :], text, PAD_IDX)

    out = lstm_forward(params, text, text_lengths)
    out = jax.block_until_ready(out)
    assert out.shape == (BATCH, OUT_DIM)
    assert bool(jnp.all(jnp.isfinite(out)))
    print("KERNEL_OK")
</pallas_src>

<mosaic_0001>
module attributes {stable_mosaic.version = 11 : i64} {
  func.func @_fused_lstm_kernel(%arg0: memref<4x1xi32, #tpu.memory_space<vmem>>, %arg1: memref<32x16xf32, #tpu.memory_space<vmem>>, %arg2: memref<16x128xf32, #tpu.memory_space<vmem>>, %arg3: memref<16x128xf32, #tpu.memory_space<vmem>>, %arg4: memref<1x128xf32, #tpu.memory_space<vmem>>, %arg5: memref<1x128xf32, #tpu.memory_space<vmem>>, %arg6: memref<64x128xf32, #tpu.memory_space<vmem>>, %arg7: memref<64x128xf32, #tpu.memory_space<vmem>>, %arg8: memref<64x128xf32, #tpu.memory_space<vmem>>, %arg9: memref<1x128xf32, #tpu.memory_space<vmem>>, %arg10: memref<1x128xf32, #tpu.memory_space<vmem>>, %arg11: memref<64x128xf32, #tpu.memory_space<vmem>>, %arg12: memref<64x2xf32, #tpu.memory_space<vmem>>, %arg13: memref<1x2xf32, #tpu.memory_space<vmem>>, %arg14: memref<4x2xf32, #tpu.memory_space<vmem>>, %arg15: memref<8x32xf32, #tpu.memory_space<vmem>>, %arg16: memref<8x32xf32, #tpu.memory_space<vmem>>, %arg17: memref<32x32xf32, #tpu.memory_space<vmem>>, %arg18: memref<32x32xf32, #tpu.memory_space<vmem>>, %arg19: memref<32x128xf32, #tpu.memory_space<vmem>>, %arg20: memref<32x128xf32, #tpu.memory_space<vmem>>) attributes {dimension_semantics = [], scalar_prefetch = 0 : i64, scratch_operands = 6 : i64, tpu.core_type = #tpu.core_type<tc>} {
    %c0 = arith.constant 0 : index
    %c0_0 = arith.constant 0 : index
    %0 = vector.load %arg0[%c0, %c0_0] : memref<4x1xi32, #tpu.memory_space<vmem>>, vector<4x1xi32>
    %1 = tpu.concatenate %0, %0 in 0 : vector<4x1xi32>, vector<4x1xi32> -> vector<8x1xi32>
    %2 = tpu.iota {dimensions = array<i32: 1>} : vector<8x128xi32>
    %c64_i32 = arith.constant 64 : i32
    %3 = vector.broadcast %c64_i32 : i32 to vector<8x128xi32>
    %4 = arith.cmpi sge, %2, %3 : vector<8x128xi32>
    %c96_i32 = arith.constant 96 : i32
    %5 = vector.broadcast %c96_i32 : i32 to vector<8x128xi32>
    %6 = arith.cmpi slt, %2, %5 : vector<8x128xi32>
    %7 = arith.andi %4, %6 : vector<8x128xi1>
    %8 = tpu.iota {dimensions = array<i32: 0>} : vector<8x32xi32>
    %c4_i32 = arith.constant 4 : i32
    %9 = vector.broadcast %c4_i32 : i32 to vector<8x32xi32>
    %10 = arith.cmpi slt, %8, %9 : vector<8x32xi32>
    %11 = tpu.iota {dimensions = array<i32: 0>} : vector<8x1xi32>
    %c4_i32_1 = arith.constant 4 : i32
    %12 = vector.broadcast %c4_i32_1 : i32 to vector<8x1xi32>
    %13 = arith.cmpi slt, %11, %12 : vector<8x1xi32>
    %c0_2 = arith.constant 0 : index
    %c0_3 = arith.constant 0 : index
    %14 = vector.load %arg1[%c0_2, %c0_3] : memref<32x16xf32, #tpu.memory_space<vmem>>, vector<32x16xf32>
    %c0_4 = arith.constant 0 : index
    %c0_5 = arith.constant 0 : index
    %15 = vector.load %arg2[%c0_4, %c0_5] : memref<16x128xf32, #tpu.memory_space<vmem>>, vector<16x128xf32>
    %cst = arith.constant dense<0.000000e+00> : vector<32x128xf32>
    %16 = tpu.matmul %14, %15, %cst {dimension_numbers = #tpu.dot_dimension_numbers<[1], [0], [0], [1], [0, 0, 1, 1], [], []>} : vector<32x16xf32>, vector<16x128xf32>, vector<32x128xf32> -> vector<32x128xf32>
    %c0_6 = arith.constant 0 : index
    %c0_7 = arith.constant 0 : index
    %17 = vector.load %arg4[%c0_6, %c0_7] : memref<1x128xf32, #tpu.memory_space<vmem>>, vector<1x128xf32>
    %18 = vector.broadcast %17 : vector<1x128xf32> to vector<32x128xf32>
    %19 = arith.addf %16, %18 : vector<32x128xf32>
    %c0_8 = arith.constant 0 : index
    %c0_9 = arith.constant 0 : index
    %20 = vector.load %arg19[%c0_8, %c0_9] : memref<32x128xf32, #tpu.memory_space<vmem>>, vector<32x128xf32>
    tpu.vector_store %arg19[%c0_8, %c0_9], %19 {strides = array<i32>} : memref<32x128xf32, #tpu.memory_space<vmem>>, vector<32x128xf32>,
    %c0_10 = arith.constant 0 : index
    %c0_11 = arith.constant 0 : index
    %21 = vector.load %arg3[%c0_10, %c0_11] : memref<16x128xf32, #tpu.memory_space<vmem>>, vector<16x128xf32>
    %cst_12 = arith.constant dense<0.000000e+00> : vector<32x128xf32>
    %22 = tpu.matmul %14, %21, %cst_12 {dimension_numbers = #tpu.dot_dimension_numbers<[1], [0], [0], [1], [0, 0, 1, 1], [], []>} : vector<32x16xf32>, vector<16x128xf32>, vector<32x128xf32> -> vector<32x128xf32>
    %c0_13 = arith.constant 0 : index
    %c0_14 = arith.constant 0 : index
    %23 = vector.load %arg5[%c0_13, %c0_14] : memref<1x128xf32, #tpu.memory_space<vmem>>, vector<1x128xf32>
    %24 = vector.broadcast %23 : vector<1x128xf32> to vector<32x128xf32>
    %25 = arith.addf %22, %24 : vector<32x128xf32>
    %c0_15 = arith.constant 0 : index
    %c0_16 = arith.constant 0 : index
    %26 = vector.load %arg20[%c0_15, %c0_16] : memref<32x128xf32, #tpu.memory_space<vmem>>, vector<32x128xf32>
    tpu.vector_store %arg20[%c0_15, %c0_16], %25 {strides = array<i32>} : memref<32x128xf32, #tpu.memory_space<vmem>>, vector<32x128xf32>,
    %c0_17 = arith.constant 0 : index
    %c0_18 = arith.constant 0 : index
    %27 = vector.load %arg6[%c0_17, %c0_18] : memref<64x128xf32, #tpu.memory_space<vmem>>, vector<64x128xf32>
    %cst_19 = arith.constant 0.000000e+00 : f32
    %28 = vector.broadcast %cst_19 : f32 to vector<8x32xf32>
    %c0_20 = arith.constant 0 : index
    %c0_21 = arith.constant 0 : index
    %29 = vector.load %arg15[%c0_20, %c0_21] : memref<8x32xf32, #tpu.memory_space<vmem>>, vector<8x32xf32>
    tpu.vector_store %arg15[%c0_20, %c0_21], %28 {strides = array<i32>} : memref<8x32xf32, #tpu.memory_space<vmem>>, vector<8x32xf32>,
    %cst_22 = arith.constant 0.000000e+00 : f32
    %30 = vector.broadcast %cst_22 : f32 to vector<8x32xf32>
    %c0_23 = arith.constant 0 : index
    %c0_24 = arith.constant 0 : index
    %31 = vector.load %arg16[%c0_23, %c0_24] : memref<8x32xf32, #tpu.memory_space<vmem>>, vector<8x32xf32>
    tpu.vector_store %arg16[%c0_23, %c0_24], %30 {strides = array<i32>} : memref<8x32xf32, #tpu.memory_space<vmem>>, vector<8x32xf32>,
    %c0_25 = arith.constant 0 : index
    %c0_26 = arith.constant 0 : index
    %32 = vector.load %arg19[%c0_25, %c0_26] : memref<32x128xf32, #tpu.memory_space<vmem>>, vector<4x128xf32>
    %c28 = arith.constant 28 : index
    %c0_27 = arith.constant 0 : index
    %33 = vector.load %arg20[%c28, %c0_27] : memref<32x128xf32, #tpu.memory_space<vmem>>, vector<4x128xf32>
    %34 = tpu.concatenate %32, %33 in 0 : vector<4x128xf32>, vector<4x128xf32> -> vector<8x128xf32>
    %c0_28 = arith.constant 0 : index
    %c0_29 = arith.constant 0 : index
    %35 = vector.load %arg15[%c0_28, %c0_29] : memref<8x32xf32, #tpu.memory_space<vmem>>, vector<8x32xf32>
    %cst_30 = arith.constant 0.000000e+00 : f32
    %36 = vector.broadcast %cst_30 : f32 to vector<8x32xf32>
    %37 = arith.select %10, %35, %36 : vector<8x32xi1>, vector<8x32xf32>
    %cst_31 = arith.constant 0.000000e+00 : f32
    %38 = vector.broadcast %cst_31 : f32 to vector<8x32xf32>
    %39 = arith.select %10, %38, %35 : vector<8x32xi1>, vector<8x32xf32>
    %40 = tpu.concatenate %37, %39 in 1 : vector<8x32xf32>, vector<8x32xf32> -> vector<8x64xf32>
    %cst_32 = arith.constant dense<0.000000e+00> : vector<8x128xf32>
    %41 = tpu.matmul %40, %27, %cst_32 {dimension_numbers = #tpu.dot_dimension_numbers<[1], [0], [0], [1], [0, 0, 1, 1], [], []>} : vector<8x64xf32>, vector<64x128xf32>, vector<8x128xf32> -> vector<8x128xf32>
    %42 = arith.addf %34, %41 : vector<8x128xf32>
    %43 = math.tanh %42 : vector<8x128xf32>
    %44 = arith.negf %42 : vector<8x128xf32>
    %45 = math.exp %44 : vector<8x128xf32>
    %cst_33 = arith.constant 1.000000e+00 : f32
    %46 = vector.broadcast %cst_33 : f32 to vector<8x128xf32>
    %47 = arith.addf %46, %45 : vector<8x128xf32>
    %48 = arith.divf %46, %47 : vector<8x128xf32>
    %49 = arith.select %7, %43, %48 : vector<8x128xi1>, vector<8x128xf32>
    %50 = vector.extract_strided_slice %49 {offsets = [0, 0], sizes = [8, 32], strides = [1, 1]} : vector<8x128xf32> to vector<8x32xf32>
    %51 = vector.extract_strided_slice %49 {offsets = [0, 32], sizes = [8, 32], strides = [1, 1]} : vector<8x128xf32> to vector<8x32xf32>
    %52 = vector.extract_strided_slice %49 {offsets = [0, 64], sizes = [8, 32], strides = [1, 1]} : vector<8x128xf32> to vector<8x32xf32>
    %53 = vector.extract_strided_slice %49 {offsets = [0, 96], sizes = [8, 32], strides = [1, 1]} : vector<8x128xf32> to vector<8x32xf32>
    %c0_34 = arith.constant 0 : index
    %c0_35 = arith.constant 0 : index
    %54 = vector.load %arg16[%c0_34, %c0_35] : memref<8x32xf32, #tpu.memory_space<vmem>>, vector<8x32xf32>
    %55 = arith.mulf %51, %54 : vector<8x32xf32>
    %56 = arith.mulf %50, %52 : vector<8x32xf32>
    %57 = arith.addf %55, %56 : vector<8x32xf32>
    %58 = math.tanh %57 : vector<8x32xf32>
    %59 = arith.mulf %53, %58 : vector<8x32xf32>
    %c0_i32 = arith.constant 0 : i32
    %c7_i32 = arith.constant 7 : i32
    %60 = vector.broadcast %c0_i32 : i32 to vector<8x1xi32>
    %61 = vector.broadcast %c7_i32 : i32 to vector<8x1xi32>
    %62 = arith.select %13, %60, %61 : vector<8x1xi1>, vector<8x1xi32>
    %63 = arith.cmpi sgt, %1, %62 : vector<8x1xi32>
    %64 = vector.shape_cast %63 : vector<8x1xi1> to vector<8x1xi1>
    %65 = vector.broadcast %64 : vector<8x1xi1> to vector<8x32xi1>
    %66 = arith.select %65, %59, %35 : vector<8x32xi1>, vector<8x32xf32>
    %c0_36 = arith.constant 0 : index
    %c0_37 = arith.constant 0 : index
    %67 = vector.load %arg16[%c0_36, %c0_37] : memref<8x32xf32, #tpu.memory_space<vmem>>, vector<8x32xf32>
    %68 = vector.shape_cast %63 : vector<8x1xi1> to vector<8x1xi1>
    %69 = vector.broadcast %68 : vector<8x1xi1> to vector<8x32xi1>
    %70 = arith.select %69, %57, %67 : vector<8x32xi1>, vector<8x32xf32>
    %c0_38 = arith.constant 0 : index
    %c0_39 = arith.constant 0 : index
    %71 = vector.load %arg15[%c0_38, %c0_39] : memref<8x32xf32, #tpu.memory_space<vmem>>, vector<8x32xf32>
    tpu.vector_store %arg15[%c0_38, %c0_39], %66 {strides = array<i32>} : memref<8x32xf32, #tpu.memory_space<vmem>>, vector<8x32xf32>,
    %c0_40 = arith.constant 0 : index
    %c0_41 = arith.constant 0 : index
    %72 = vector.load %arg16[%c0_40, %c0_41] : memref<8x32xf32, #tpu.memory_space<vmem>>, vector<8x32xf32>
    tpu.vector_store %arg16[%c0_40, %c0_41], %70 {strides = array<i32>} : memref<8x32xf32, #tpu.memory_space<vmem>>, vector<8x32xf32>,
    %cst_42 = arith.constant 0.000000e+00 : f32
    %73 = vector.shape_cast %63 : vector<8x1xi1> to vector<8x1xi1>
    %74 = vector.broadcast %73 : vector<8x1xi1> to vector<8x32xi1>
    %75 = vector.broadcast %cst_42 : f32 to vector<8x32xf32>
    %76 = arith.select %74, %66, %75 : vector<8x32xi1>, vector<8x32xf32>
    %77 = vector.extract_strided_slice %76 {offsets = [0, 0], sizes = [4, 32], strides = [1, 1]} : vector<8x32xf32> to vector<4x32xf32>
    %c0_43 = arith.constant 0 : index
    %c0_44 = arith.constant 0 : index
    %78 = vector.load %arg17[%c0_43, %c0_44] : memref<32x32xf32, #tpu.memory_space<vmem>>, vector<4x32xf32>
    tpu.vector_store %arg17[%c0_43, %c0_44], %77 {strides = array<i32>} : memref<32x32xf32, #tpu.memory_space<vmem>>, vector<4x32xf32>,
    %79 = vector.extract_strided_slice %76 {offsets = [4, 0], sizes = [4, 32], strides = [1, 1]} : vector<8x32xf32> to vector<4x32xf32>
    %c28_45 = arith.constant 28 : index
    %c0_46 = arith.constant 0 : index
    %80 = vector.load %arg18[%c28_45, %c0_46] : memref<32x32xf32, #tpu.memory_space<vmem>>, vector<4x32xf32>
    tpu.vector_store %arg18[%c28_45, %c0_46], %79 {strides = array<i32>} : memref<32x32xf32, #tpu.memory_space<vmem>>, vector<4x32xf32>,
    %c4 = arith.constant 4 : index
    %c0_47 = arith.constant 0 : index
    %81 = vector.load %arg19[%c4, %c0_47] : memref<32x128xf32, #tpu.memory_space<vmem>>, vector<4x128xf32>
    %c24 = arith.constant 24 : index
    %c0_48 = arith.constant 0 : index
    %82 = vector.load %arg20[%c24, %c0_48] : memref<32x128xf32, #tpu.memory_space<vmem>>, vector<4x128xf32>
    %83 = tpu.concatenate %81, %82 in 0 : vector<4x128xf32>, vector<4x128xf32> -> vector<8x128xf32>
    %c0_49 = arith.constant 0 : index
    %c0_50 = arith.constant 0 : index
    %84 = vector.load %arg15[%c0_49, %c0_50] : memref<8x32xf32, #tpu.memory_space<vmem>>, vector<8x32xf32>
    %cst_51 = arith.constant 0.000000e+00 : f32
    %85 = vector.broadcast %cst_51 : f32 to vector<8x32xf32>
    %86 = arith.select %10, %84, %85 : vector<8x32xi1>, vector<8x32xf32>
    %cst_52 = arith.constant 0.000000e+00 : f32
    %87 = vector.broadcast %cst_52 : f32 to vector<8x32xf32>
    %88 = arith.select %10, %87, %84 : vector<8x32xi1>, vector<8x32xf32>
    %89 = tpu.concatenate %86, %88 in 1 : vector<8x32xf32>, vector<8x32xf32> -> vector<8x64xf32>
    %cst_53 = arith.constant dense<0.000000e+00> : vector<8x128xf32>
    %90 = tpu.matmul %89, %27, %cst_53 {dimension_numbers = #tpu.dot_dimension_numbers<[1], [0], [0], [1], [0, 0, 1, 1], [], []>} : vector<8x64xf32>, vector<64x128xf32>, vector<8x128xf32> -> vector<8x128xf32>
    %91 = arith.addf %83, %90 : vector<8x128xf32>
    %92 = math.tanh %91 : vector<8x128xf32>
    %93 = arith.negf %91 : vector<8x128xf32>
    %94 = math.exp %93 : vector<8x128xf32>
    %cst_54 = arith.constant 1.000000e+00 : f32
    %95 = vector.broadcast %cst_54 : f32 to vector<8x128xf32>
    %96 = arith.addf %95, %94 : vector<8x128xf32>
    %97 = arith.divf %95, %96 : vector<8x128xf32>
    %98 = arith.select %7, %92, %97 : vector<8x128xi1>, vector<8x128xf32>
    %99 = vector.extract_strided_slice %98 {offsets = [0, 0], sizes = [8, 32], strides = [1, 1]} : vector<8x128xf32> to vector<8x32xf32>
    %100 = vector.extract_strided_slice %98 {offsets = [0, 32], sizes = [8, 32], strides = [1, 1]} : vector<8x128xf32> to vector<8x32xf32>
    %101 = vector.extract_strided_slice %98 {offsets = [0, 64], sizes = [8, 32], strides = [1, 1]} : vector<8x128xf32> to vector<8x32xf32>
    %102 = vector.extract_strided_slice %98 {offsets = [0, 96], sizes = [8, 32], strides = [1, 1]} : vector<8x128xf32> to vector<8x32xf32>
    %c0_55 = arith.constant 0 : index
    %c0_56 = arith.constant 0 : index
    %103 = vector.load %arg16[%c0_55, %c0_56] : memref<8x32xf32, #tpu.memory_space<vmem>>, vector<8x32xf32>
    %104 = arith.mulf %100, %103 : vector<8x32xf32>
    %105 = arith.mulf %99, %101 : vector<8x32xf32>
    %106 = arith.addf %104, %105 : vector<8x32xf32>
    %107 = math.tanh %106 : vector<8x32xf32>
    %108 = arith.mulf %102, %107 : vector<8x32xf32>
    %c1_i32 = arith.constant 1 : i32
    %c6_i32 = arith.constant 6 : i32
    %109 = vector.broadcast %c1_i32 : i32 to vector<8x1xi32>
    %110 = vector.broadcast %c6_i32 : i32 to vector<8x1xi32>
    %111 = arith.select %13, %109, %110 : vector<8x1xi1>, vector<8x1xi32>
    %112 = arith.cmpi sgt, %1, %111 : vector<8x1xi32>
    %113 = vector.shape_cast %112 : vector<8x1xi1> to vector<8x1xi1>
    %114 = vector.broadcast %113 : vector<8x1xi1> to vector<8x32xi1>
    %115 = arith.select %114, %108, %84 : vector<8x32xi1>, vector<8x32xf32>
    %c0_57 = arith.constant 0 : index
    %c0_58 = arith.constant 0 : index
    %116 = vector.load %arg16[%c0_57, %c0_58] : memref<8x32xf32, #tpu.memory_space<vmem>>, vector<8x32xf32>
    %117 = vector.shape_cast %112 : vector<8x1xi1> to vector<8x1xi1>
    %118 = vector.broadcast %117 : vector<8x1xi1> to vector<8x32xi1>
    %119 = arith.select %118, %106, %116 : vector<8x32xi1>, vector<8x32xf32>
    %c0_59 = arith.constant 0 : index
    %c0_60 = arith.constant 0 : index
    %120 = vector.load %arg15[%c0_59, %c0_60] : memref<8x32xf32, #tpu.memory_space<vmem>>, vector<8x32xf32>
    tpu.vector_store %arg15[%c0_59, %c0_60], %115 {strides = array<i32>} : memref<8x32xf32, #tpu.memory_space<vmem>>, vector<8x32xf32>,
    %c0_61 = arith.constant 0 : index
    %c0_62 = arith.constant 0 : index
    %121 = vector.load %arg16[%c0_61, %c0_62] : memref<8x32xf32, #tpu.memory_space<vmem>>, vector<8x32xf32>
    tpu.vector_store %arg16[%c0_61, %c0_62], %119 {strides = array<i32>} : memref<8x32xf32, #tpu.memory_space<vmem>>, vector<8x32xf32>,
    %cst_63 = arith.constant 0.000000e+00 : f32
    %122 = vector.shape_cast %112 : vector<8x1xi1> to vector<8x1xi1>
    %123 = vector.broadcast %122 : vector<8x1xi1> to vector<8x32xi1>
    %124 = vector.broadcast %cst_63 : f32 to vector<8x32xf32>
    %125 = arith.select %123, %115, %124 : vector<8x32xi1>, vector<8x32xf32>
    %126 = vector.extract_strided_slice %125 {offsets = [0, 0], sizes = [4, 32], strides = [1, 1]} : vector<8x32xf32> to vector<4x32xf32>
    %c4_64 = arith.constant 4 : index
    %c0_65 = arith.constant 0 : index
    %127 = vector.load %arg17[%c4_64, %c0_65] : memref<32x32xf32, #tpu.memory_space<vmem>>, vector<4x32xf32>
    tpu.vector_store %arg17[%c4_64, %c0_65], %126 {strides = array<i32>} : memref<32x32xf32, #tpu.memory_space<vmem>>, vector<4x32xf32>,
    %128 = vector.extract_strided_slice %125 {offsets = [4, 0], sizes = [4, 32], strides = [1, 1]} : vector<8x32xf32> to vector<4x32xf32>
    %c24_66 = arith.constant 24 : index
    %c0_67 = arith.constant 0 : index
    %129 = vector.load %arg18[%c24_66, %c0_67] : memref<32x32xf32, #tpu.memory_space<vmem>>, vector<4x32xf32>
    tpu.vector_store %arg18[%c24_66, %c0_67], %128 {strides = array<i32>} : memref<32x32xf32, #tpu.memory_space<vmem>>, vector<4x32xf32>,
    %c8 = arith.constant 8 : index
    %c0_68 = arith.constant 0 : index
    %130 = vector.load %arg19[%c8, %c0_68] : memref<32x128xf32, #tpu.memory_space<vmem>>, vector<4x128xf32>
    %c20 = arith.constant 20 : index
    %c0_69 = arith.constant 0 : index
    %131 = vector.load %arg20[%c20, %c0_69] : memref<32x128xf32, #tpu.memory_space<vmem>>, vector<4x128xf32>
    %132 = tpu.concatenate %130, %131 in 0 : vector<4x128xf32>, vector<4x128xf32> -> vector<8x128xf32>
    %c0_70 = arith.constant 0 : index
    %c0_71 = arith.constant 0 : index
    %133 = vector.load %arg15[%c0_70, %c0_71] : memref<8x32xf32, #tpu.memory_space<vmem>>, vector<8x32xf32>
    %cst_72 = arith.constant 0.000000e+00 : f32
    %134 = vector.broadcast %cst_72 : f32 to vector<8x32xf32>
    %135 = arith.select %10, %133, %134 : vector<8x32xi1>, vector<8x32xf32>
    %cst_73 = arith.constant 0.000000e+00 : f32
    %136 = vector.broadcast %cst_73 : f32 to vector<8x32xf32>
    %137 = arith.select %10, %136, %133 : vector<8x32xi1>, vector<8x32xf32>
    %138 = tpu.concatenate %135, %137 in 1 : vector<8x32xf32>, vector<8x32xf32> -> vector<8x64xf32>
    %cst_74 = arith.constant dense<0.000000e+00> : vector<8x128xf32>
    %139 = tpu.matmul %138, %27, %cst_74 {dimension_numbers = #tpu.dot_dimension_numbers<[1], [0], [0], [1], [0, 0, 1, 1], [], []>} : vector<8x64xf32>, vector<64x128xf32>, vector<8x128xf32> -> vector<8x128xf32>
    %140 = arith.addf %132, %139 : vector<8x128xf32>
    %141 = math.tanh %140 : vector<8x128xf32>
    %142 = arith.negf %140 : vector<8x128xf32>
    %143 = math.exp %142 : vector<8x128xf32>
    %cst_75 = arith.constant 1.000000e+00 : f32
    %144 = vector.broadcast %cst_75 : f32 to vector<8x128xf32>
    %145 = arith.addf %144, %143 : vector<8x128xf32>
    %146 = arith.divf %144, %145 : vector<8x128xf32>
    %147 = arith.select %7, %141, %146 : vector<8x128xi1>, vector<8x128xf32>
    %148 = vector.extract_strided_slice %147 {offsets = [0, 0], sizes = [8, 32], strides = [1, 1]} : vector<8x128xf32> to vector<8x32xf32>
    %149 = vector.extract_strided_slice %147 {offsets = [0, 32], sizes = [8, 32], strides = [1, 1]} : vector<8x128xf32> to vector<8x32xf32>
    %150 = vector.extract_strided_slice %147 {offsets = [0, 64], sizes = [8, 32], strides = [1, 1]} : vector<8x128xf32> to vector<8x32xf32>
    %151 = vector.extract_strided_slice %147 {offsets = [0, 96], sizes = [8, 32], strides = [1, 1]} : vector<8x128xf32> to vector<8x32xf32>
    %c0_76 = arith.constant 0 : index
    %c0_77 = arith.constant 0 : index
    %152 = vector.load %arg16[%c0_76, %c0_77] : memref<8x32xf32, #tpu.memory_space<vmem>>, vector<8x32xf32>
    %153 = arith.mulf %149, %152 : vector<8x32xf32>
    %154 = arith.mulf %148, %150 : vector<8x32xf32>
    %155 = arith.addf %153, %154 : vector<8x32xf32>
    %156 = math.tanh %155 : vector<8x32xf32>
    %157 = arith.mulf %151, %156 : vector<8x32xf32>
    %c2_i32 = arith.constant 2 : i32
    %c5_i32 = arith.constant 5 : i32
    %158 = vector.broadcast %c2_i32 : i32 to vector<8x1xi32>
    %159 = vector.broadcast %c5_i32 : i32 to vector<8x1xi32>
    %160 = arith.select %13, %158, %159 : vector<8x1xi1>, vector<8x1xi32>
    %161 = arith.cmpi sgt, %1, %160 : vector<8x1xi32>
    %162 = vector.shape_cast %161 : vector<8x1xi1> to vector<8x1xi1>
    %163 = vector.broadcast %162 : vector<8x1xi1> to vector<8x32xi1>
    %164 = arith.select %163, %157, %133 : vector<8x32xi1>, vector<8x32xf32>
    %c0_78 = arith.constant 0 : index
    %c0_79 = arith.constant 0 : index
    %165 = vector.load %arg16[%c0_78, %c0_79] : memref<8x32xf32, #tpu.memory_space<vmem>>, vector<8x32xf32>
    %166 = vector.shape_cast %161 : vector<8x1xi1> to vector<8x1xi1>
    %167 = vector.broadcast %166 : vector<8x1xi1> to vector<8x32xi1>
    %168 = arith.select %167, %155, %165 : vector<8x32xi1>, vector<8x32xf32>
    %c0_80 = arith.constant 0 : index
    %c0_81 = arith.constant 0 : index
    %169 = vector.load %arg15[%c0_80, %c0_81] : memref<8x32xf32, #tpu.memory_space<vmem>>, vector<8x32xf32>
    tpu.vector_store %arg15[%c0_80, %c0_81], %164 {strides = array<i32>} : memref<8x32xf32, #tpu.memory_space<vmem>>, vector<8x32xf32>,
    %c0_82 = arith.constant 0 : index
    %c0_83 = arith.constant 0 : index
    %170 = vector.load %arg16[%c0_82, %c0_83] : memref<8x32xf32, #tpu.memory_space<vmem>>, vector<8x32xf32>
    tpu.vector_store %arg16[%c0_82, %c0_83], %168 {strides = array<i32>} : memref<8x32xf32, #tpu.memory_space<vmem>>, vector<8x32xf32>,
    %cst_84 = arith.constant 0.000000e+00 : f32
    %171 = vector.shape_cast %161 : vector<8x1xi1> to vector<8x1xi1>
    %172 = vector.broadcast %171 : vector<8x1xi1> to vector<8x32xi1>
    %173 = vector.broadcast %cst_84 : f32 to vector<8x32xf32>
    %174 = arith.select %172, %164, %173 : vector<8x32xi1>, vector<8x32xf32>
    %175 = vector.extract_strided_slice %174 {offsets = [0, 0], sizes = [4, 32], strides = [1, 1]} : vector<8x32xf32> to vector<4x32xf32>
    %c8_85 = arith.constant 8 : index
    %c0_86 = arith.constant 0 : index
    %176 = vector.load %arg17[%c8_85, %c0_86] : memref<32x32xf32, #tpu.memory_space<vmem>>, vector<4x32xf32>
    tpu.vector_store %arg17[%c8_85, %c0_86], %175 {strides = array<i32>} : memref<32x32xf32, #tpu.memory_space<vmem>>, vector<4x32xf32>,
    %177 = vector.extract_strided_slice %174 {offsets = [4, 0], sizes = [4, 32], strides = [1, 1]} : vector<8x32xf32> to vector<4x32xf32>
    %c20_87 = arith.constant 20 : index
    %c0_88 = arith.constant 0 : index
    %178 = vector.load %arg18[%c20_87, %c0_88] : memref<32x32xf32, #tpu.memory_space<vmem>>, vector<4x32xf32>
    tpu.vector_store %arg18[%c20_87, %c0_88], %177 {strides = array<i32>} : memref<32x32xf32, #tpu.memory_space<vmem>>, vector<4x32xf32>,
    %c12 = arith.constant 12 : index
    %c0_89 = arith.constant 0 : index
    %179 = vector.load %arg19[%c12, %c0_89] : memref<32x128xf32, #tpu.memory_space<vmem>>, vector<4x128xf32>
    %c16 = arith.constant 16 : index
    %c0_90 = arith.constant 0 : index
    %180 = vector.load %arg20[%c16, %c0_90] : memref<32x128xf32, #tpu.memory_space<vmem>>, vector<4x128xf32>
    %181 = tpu.concatenate %179, %180 in 0 : vector<4x128xf32>, vector<4x128xf32> -> vector<8x128xf32>
    %c0_91 = arith.constant 0 : index
    %c0_92 = arith.constant 0 : index
    %182 = vector.load %arg15[%c0_91, %c0_92] : memref<8x32xf32, #tpu.memory_space<vmem>>, vector<8x32xf32>
    %cst_93 = arith.constant 0.000000e+00 : f32
    %183 = vector.broadcast %cst_93 : f32 to vector<8x32xf32>
    %184 = arith.select %10, %182, %183 : vector<8x32xi1>, vector<8x32xf32>
    %cst_94 = arith.constant 0.000000e+00 : f32
    %185 = vector.broadcast %cst_94 : f32 to vector<8x32xf32>
    %186 = arith.select %10, %185, %182 : vector<8x32xi1>, vector<8x32xf32>
    %187 = tpu.concatenate %184, %186 in 1 : vector<8x32xf32>, vector<8x32xf32> -> vector<8x64xf32>
    %cst_95 = arith.constant dense<0.000000e+00> : vector<8x128xf32>
    %188 = tpu.matmul %187, %27, %cst_95 {dimension_numbers = #tpu.dot_dimension_numbers<[1], [0], [0], [1], [0, 0, 1, 1], [], []>} : vector<8x64xf32>, vector<64x128xf32>, vector<8x128xf32> -> vector<8x128xf32>
    %189 = arith.addf %181, %188 : vector<8x128xf32>
    %190 = math.tanh %189 : vector<8x128xf32>
    %191 = arith.negf %189 : vector<8x128xf32>
    %192 = math.exp %191 : vector<8x128xf32>
    %cst_96 = arith.constant 1.000000e+00 : f32
    %193 = vector.broadcast %cst_96 : f32 to vector<8x128xf32>
    %194 = arith.addf %193, %192 : vector<8x128xf32>
    %195 = arith.divf %193, %194 : vector<8x128xf32>
    %196 = arith.select %7, %190, %195 : vector<8x128xi1>, vector<8x128xf32>
    %197 = vector.extract_strided_slice %196 {offsets = [0, 0], sizes = [8, 32], strides = [1, 1]} : vector<8x128xf32> to vector<8x32xf32>
    %198 = vector.extract_strided_slice %196 {offsets = [0, 32], sizes = [8, 32], strides = [1, 1]} : vector<8x128xf32> to vector<8x32xf32>
    %199 = vector.extract_strided_slice %196 {offsets = [0, 64], sizes = [8, 32], strides = [1, 1]} : vector<8x128xf32> to vector<8x32xf32>
    %200 = vector.extract_strided_slice %196 {offsets = [0, 96], sizes = [8, 32], strides = [1, 1]} : vector<8x128xf32> to vector<8x32xf32>
    %c0_97 = arith.constant 0 : index
    %c0_98 = arith.constant 0 : index
    %201 = vector.load %arg16[%c0_97, %c0_98] : memref<8x32xf32, #tpu.memory_space<vmem>>, vector<8x32xf32>
    %202 = arith.mulf %198, %201 : vector<8x32xf32>
    %203 = arith.mulf %197, %199 : vector<8x32xf32>
    %204 = arith.addf %202, %203 : vector<8x32xf32>
    %205 = math.tanh %204 : vector<8x32xf32>
    %206 = arith.mulf %200, %205 : vector<8x32xf32>
    %c3_i32 = arith.constant 3 : i32
    %c4_i32_99 = arith.constant 4 : i32
    %207 = vector.broadcast %c3_i32 : i32 to vector<8x1xi32>
    %208 = vector.broadcast %c4_i32_99 : i32 to vector<8x1xi32>
    %209 = arith.select %13, %207, %208 : vector<8x1xi1>, vector<8x1xi32>
    %210 = arith.cmpi sgt, %1, %209 : vector<8x1xi32>
    %211 = vector.shape_cast %210 : vector<8x1xi1> to vector<8x1xi1>
    %212 = vector.broadcast %211 : vector<8x1xi1> to vector<8x32xi1>
    %213 = arith.select %212, %206, %182 : vector<8x32xi1>, vector<8x32xf32>
    %c0_100 = arith.constant 0 : index
    %c0_101 = arith.constant 0 : index
    %214 = vector.load %arg16[%c0_100, %c0_101] : memref<8x32xf32, #tpu.memory_space<vmem>>, vector<8x32xf32>
    %215 = vector.shape_cast %210 : vector<8x1xi1> to vector<8x1xi1>
    %216 = vector.broadcast %215 : vector<8x1xi1> to vector<8x32xi1>
    %217 = arith.select %216, %204, %214 : vector<8x32xi1>, vector<8x32xf32>
    %c0_102 = arith.constant 0 : index
    %c0_103 = arith.constant 0 : index
    %218 = vector.load %arg15[%c0_102, %c0_103] : memref<8x32xf32, #tpu.memory_space<vmem>>, vector<8x32xf32>
    tpu.vector_store %arg15[%c0_102, %c0_103], %213 {strides = array<i32>} : memref<8x32xf32, #tpu.memory_space<vmem>>, vector<8x32xf32>,
    %c0_104 = arith.constant 0 : index
    %c0_105 = arith.constant 0 : index
    %219 = vector.load %arg16[%c0_104, %c0_105] : memref<8x32xf32, #tpu.memory_space<vmem>>, vector<8x32xf32>
    tpu.vector_store %arg16[%c0_104, %c0_105], %217 {strides = array<i32>} : memref<8x32xf32, #tpu.memory_space<vmem>>, vector<8x32xf32>,
    %cst_106 = arith.constant 0.000000e+00 : f32
    %220 = vector.shape_cast %210 : vector<8x1xi1> to vector<8x1xi1>
    %221 = vector.broadcast %220 : vector<8x1xi1> to vector<8x32xi1>
    %222 = vector.broadcast %cst_106 : f32 to vector<8x32xf32>
    %223 = arith.select %221, %213, %222 : vector<8x32xi1>, vector<8x32xf32>
    %224 = vector.extract_strided_slice %223 {offsets = [0, 0], sizes = [4, 32], strides = [1, 1]} : vector<8x32xf32> to vector<4x32xf32>
    %c12_107 = arith.constant 12 : index
    %c0_108 = arith.constant 0 : index
    %225 = vector.load %arg17[%c12_107, %c0_108] : memref<32x32xf32, #tpu.memory_space<vmem>>, vector<4x32xf32>
    tpu.vector_store %arg17[%c12_107, %c0_108], %224 {strides = array<i32>} : memref<32x32xf32, #tpu.memory_space<vmem>>, vector<4x32xf32>,
    %226 = vector.extract_strided_slice %223 {offsets = [4, 0], sizes = [4, 32], strides = [1, 1]} : vector<8x32xf32> to vector<4x32xf32>
    %c16_109 = arith.constant 16 : index
    %c0_110 = arith.constant 0 : index
    %227 = vector.load %arg18[%c16_109, %c0_110] : memref<32x32xf32, #tpu.memory_space<vmem>>, vector<4x32xf32>
    tpu.vector_store %arg18[%c16_109, %c0_110], %226 {strides = array<i32>} : memref<32x32xf32, #tpu.memory_space<vmem>>, vector<4x32xf32>,
    %c16_111 = arith.constant 16 : index
    %c0_112 = arith.constant 0 : index
    %228 = vector.load %arg19[%c16_111, %c0_112] : memref<32x128xf32, #tpu.memory_space<vmem>>, vector<4x128xf32>
    %c12_113 = arith.constant 12 : index
    %c0_114 = arith.constant 0 : index
    %229 = vector.load %arg20[%c12_113, %c0_114] : memref<32x128xf32, #tpu.memory_space<vmem>>, vector<4x128xf32>
    %230 = tpu.concatenate %228, %229 in 0 : vector<4x128xf32>, vector<4x128xf32> -> vector<8x128xf32>
    %c0_115 = arith.constant 0 : index
    %c0_116 = arith.constant 0 : index
    %231 = vector.load %arg15[%c0_115, %c0_116] : memref<8x32xf32, #tpu.memory_space<vmem>>, vector<8x32xf32>
    %cst_117 = arith.constant 0.000000e+00 : f32
    %232 = vector.broadcast %cst_117 : f32 to vector<8x32xf32>
    %233 = arith.select %10, %231, %232 : vector<8x32xi1>, vector<8x32xf32>
    %cst_118 = arith.constant 0.000000e+00 : f32
    %234 = vector.broadcast %cst_118 : f32 to vector<8x32xf32>
    %235 = arith.select %10, %234, %231 : vector<8x32xi1>, vector<8x32xf32>
    %236 = tpu.concatenate %233, %235 in 1 : vector<8x32xf32>, vector<8x32xf32> -> vector<8x64xf32>
    %cst_119 = arith.constant dense<0.000000e+00> : vector<8x128xf32>
    %237 = tpu.matmul %236, %27, %cst_119 {dimension_numbers = #tpu.dot_dimension_numbers<[1], [0], [0], [1], [0, 0, 1, 1], [], []>} : vector<8x64xf32>, vector<64x128xf32>, vector<8x128xf32> -> vector<8x128xf32>
    %238 = arith.addf %230, %237 : vector<8x128xf32>
    %239 = math.tanh %238 : vector<8x128xf32>
    %240 = arith.negf %238 : vector<8x128xf32>
    %241 = math.exp %240 : vector<8x128xf32>
    %cst_120 = arith.constant 1.000000e+00 : f32
    %242 = vector.broadcast %cst_120 : f32 to vector<8x128xf32>
    %243 = arith.addf %242, %241 : vector<8x128xf32>
    %244 = arith.divf %242, %243 : vector<8x128xf32>
    %245 = arith.select %7, %239, %244 : vector<8x128xi1>, vector<8x128xf32>
    %246 = vector.extract_strided_slice %245 {offsets = [0, 0], sizes = [8, 32], strides = [1, 1]} : vector<8x128xf32> to vector<8x32xf32>
    %247 = vector.extract_strided_slice %245 {offsets = [0, 32], sizes = [8, 32], strides = [1, 1]} : vector<8x128xf32> to vector<8x32xf32>
    %248 = vector.extract_strided_slice %245 {offsets = [0, 64], sizes = [8, 32], strides = [1, 1]} : vector<8x128xf32> to vector<8x32xf32>
    %249 = vector.extract_strided_slice %245 {offsets = [0, 96], sizes = [8, 32], strides = [1, 1]} : vector<8x128xf32> to vector<8x32xf32>
    %c0_121 = arith.constant 0 : index
    %c0_122 = arith.constant 0 : index
    %250 = vector.load %arg16[%c0_121, %c0_122] : memref<8x32xf32, #tpu.memory_space<vmem>>, vector<8x32xf32>
    %251 = arith.mulf %247, %250 : vector<8x32xf32>
    %252 = arith.mulf %246, %248 : vector<8x32xf32>
    %253 = arith.addf %251, %252 : vector<8x32xf32>
    %254 = math.tanh %253 : vector<8x32xf32>
    %255 = arith.mulf %249, %254 : vector<8x32xf32>
    %c4_i32_123 = arith.constant 4 : i32
    %c3_i32_124 = arith.constant 3 : i32
    %256 = vector.broadcast %c4_i32_123 : i32 to vector<8x1xi32>
    %257 = vector.broadcast %c3_i32_124 : i32 to vector<8x1xi32>
    %258 = arith.select %13, %256, %257 : vector<8x1xi1>, vector<8x1xi32>
    %259 = arith.cmpi sgt, %1, %258 : vector<8x1xi32>
    %260 = vector.shape_cast %259 : vector<8x1xi1> to vector<8x1xi1>
    %261 = vector.broadcast %260 : vector<8x1xi1> to vector<8x32xi1>
    %262 = arith.select %261, %255, %231 : vector<8x32xi1>, vector<8x32xf32>
    %c0_125 = arith.constant 0 : index
    %c0_126 = arith.constant 0 : index
    %263 = vector.load %arg16[%c0_125, %c0_126] : memref<8x32xf32, #tpu.memory_space<vmem>>, vector<8x32xf32>
    %264 = vector.shape_cast %259 : vector<8x1xi1> to vector<8x1xi1>
    %265 = vector.broadcast %264 : vector<8x1xi1> to vector<8x32xi1>
    %266 = arith.select %265, %253, %263 : vector<8x32xi1>, vector<8x32xf32>
    %c0_127 = arith.constant 0 : index
    %c0_128 = arith.constant 0 : index
    %267 = vector.load %arg15[%c0_127, %c0_128] : memref<8x32xf32, #tpu.memory_space<vmem>>, vector<8x32xf32>
    tpu.vector_store %arg15[%c0_127, %c0_128], %262 {strides = array<i32>} : memref<8x32xf32, #tpu.memory_space<vmem>>, vector<8x32xf32>,
    %c0_129 = arith.constant 0 : index
    %c0_130 = arith.constant 0 : index
    %268 = vector.load %arg16[%c0_129, %c0_130] : memref<8x32xf32, #tpu.memory_space<vmem>>, vector<8x32xf32>
    tpu.vector_store %arg16[%c0_129, %c0_130], %266 {strides = array<i32>} : memref<8x32xf32, #tpu.memory_space<vmem>>, vector<8x32xf32>,
    %cst_131 = arith.constant 0.000000e+00 : f32
    %269 = vector.shape_cast %259 : vector<8x1xi1> to vector<8x1xi1>
    %270 = vector.broadcast %269 : vector<8x1xi1> to vector<8x32xi1>
    %271 = vector.broadcast %cst_131 : f32 to vector<8x32xf32>
    %272 = arith.select %270, %262, %271 : vector<8x32xi1>, vector<8x32xf32>
    %273 = vector.extract_strided_slice %272 {offsets = [0, 0], sizes = [4, 32], strides = [1, 1]} : vector<8x32xf32> to vector<4x32xf32>
    %c16_132 = arith.constant 16 : index
    %c0_133 = arith.constant 0 : index
    %274 = vector.load %arg17[%c16_132, %c0_133] : memref<32x32xf32, #tpu.memory_space<vmem>>, vector<4x32xf32>
    tpu.vector_store %arg17[%c16_132, %c0_133], %273 {strides = array<i32>} : memref<32x32xf32, #tpu.memory_space<vmem>>, vector<4x32xf32>,
    %275 = vector.extract_strided_slice %272 {offsets = [4, 0], sizes = [4, 32], strides = [1, 1]} : vector<8x32xf32> to vector<4x32xf32>
    %c12_134 = arith.constant 12 : index
    %c0_135 = arith.constant 0 : index
    %276 = vector.load %arg18[%c12_134, %c0_135] : memref<32x32xf32, #tpu.memory_space<vmem>>, vector<4x32xf32>
    tpu.vector_store %arg18[%c12_134, %c0_135], %275 {strides = array<i32>} : memref<32x32xf32, #tpu.memory_space<vmem>>, vector<4x32xf32>,
    %c20_136 = arith.constant 20 : index
    %c0_137 = arith.constant 0 : index
    %277 = vector.load %arg19[%c20_136, %c0_137] : memref<32x128xf32, #tpu.memory_space<vmem>>, vector<4x128xf32>
    %c8_138 = arith.constant 8 : index
    %c0_139 = arith.constant 0 : index
    %278 = vector.load %arg20[%c8_138, %c0_139] : memref<32x128xf32, #tpu.memory_space<vmem>>, vector<4x128xf32>
    %279 = tpu.concatenate %277, %278 in 0 : vector<4x128xf32>, vector<4x128xf32> -> vector<8x128xf32>
    %c0_140 = arith.constant 0 : index
    %c0_141 = arith.constant 0 : index
    %280 = vector.load %arg15[%c0_140, %c0_141] : memref<8x32xf32, #tpu.memory_space<vmem>>, vector<8x32xf32>
    %cst_142 = arith.constant 0.000000e+00 : f32
    %281 = vector.broadcast %cst_142 : f32 to vector<8x32xf32>
    %282 = arith.select %10, %280, %281 : vector<8x32xi1>, vector<8x32xf32>
    %cst_143 = arith.constant 0.000000e+00 : f32
    %283 = vector.broadcast %cst_143 : f32 to vector<8x32xf32>
    %284 = arith.select %10, %283, %280 : vector<8x32xi1>, vector<8x32xf32>
    %285 = tpu.concatenate %282, %284 in 1 : vector<8x32xf32>, vector<8x32xf32> -> vector<8x64xf32>
    %cst_144 = arith.constant dense<0.000000e+00> : vector<8x128xf32>
    %286 = tpu.matmul %285, %27, %cst_144 {dimension_numbers = #tpu.dot_dimension_numbers<[1], [0], [0], [1], [0, 0, 1, 1], [], []>} : vector<8x64xf32>, vector<64x128xf32>, vector<8x128xf32> -> vector<8x128xf32>
    %287 = arith.addf %279, %286 : vector<8x128xf32>
    %288 = math.tanh %287 : vector<8x128xf32>
    %289 = arith.negf %287 : vector<8x128xf32>
    %290 = math.exp %289 : vector<8x128xf32>
    %cst_145 = arith.constant 1.000000e+00 : f32
    %291 = vector.broadcast %cst_145 : f32 to vector<8x128xf32>
    %292 = arith.addf %291, %290 : vector<8x128xf32>
    %293 = arith.divf %291, %292 : vector<8x128xf32>
    %294 = arith.select %7, %288, %293 : vector<8x128xi1>, vector<8x128xf32>
    %295 = vector.extract_strided_slice %294 {offsets = [0, 0], sizes = [8, 32], strides = [1, 1]} : vector<8x128xf32> to vector<8x32xf32>
    %296 = vector.extract_strided_slice %294 {offsets = [0, 32], sizes = [8, 32], strides = [1, 1]} : vector<8x128xf32> to vector<8x32xf32>
    %297 = vector.extract_strided_slice %294 {offsets = [0, 64], sizes = [8, 32], strides = [1, 1]} : vector<8x128xf32> to vector<8x32xf32>
    %298 = vector.extract_strided_slice %294 {offsets = [0, 96], sizes = [8, 32], strides = [1, 1]} : vector<8x128xf32> to vector<8x32xf32>
    %c0_146 = arith.constant 0 : index
    %c0_147 = arith.constant 0 : index
    %299 = vector.load %arg16[%c0_146, %c0_147] : memref<8x32xf32, #tpu.memory_space<vmem>>, vector<8x32xf32>
    %300 = arith.mulf %296, %299 : vector<8x32xf32>
    %301 = arith.mulf %295, %297 : vector<8x32xf32>
    %302 = arith.addf %300, %301 : vector<8x32xf32>
    %303 = math.tanh %302 : vector<8x32xf32>
    %304 = arith.mulf %298, %303 : vector<8x32xf32>
    %c5_i32_148 = arith.constant 5 : i32
    %c2_i32_149 = arith.constant 2 : i32
    %305 = vector.broadcast %c5_i32_148 : i32 to vector<8x1xi32>
    %306 = vector.broadcast %c2_i32_149 : i32 to vector<8x1xi32>
    %307 = arith.select %13, %305, %306 : vector<8x1xi1>, vector<8x1xi32>
    %308 = arith.cmpi sgt, %1, %307 : vector<8x1xi32>
    %309 = vector.shape_cast %308 : vector<8x1xi1> to vector<8x1xi1>
    %310 = vector.broadcast %309 : vector<8x1xi1> to vector<8x32xi1>
    %311 = arith.select %310, %304, %280 : vector<8x32xi1>, vector<8x32xf32>
    %c0_150 = arith.constant 0 : index
    %c0_151 = arith.constant 0 : index
    %312 = vector.load %arg16[%c0_150, %c0_151] : memref<8x32xf32, #tpu.memory_space<vmem>>, vector<8x32xf32>
    %313 = vector.shape_cast %308 : vector<8x1xi1> to vector<8x1xi1>
    %314 = vector.broadcast %313 : vector<8x1xi1> to vector<8x32xi1>
    %315 = arith.select %314, %302, %312 : vector<8x32xi1>, vector<8x32xf32>
    %c0_152 = arith.constant 0 : index
    %c0_153 = arith.constant 0 : index
    %316 = vector.load %arg15[%c0_152, %c0_153] : memref<8x32xf32, #tpu.memory_space<vmem>>, vector<8x32xf32>
    tpu.vector_store %arg15[%c0_152, %c0_153], %311 {strides = array<i32>} : memref<8x32xf32, #tpu.memory_space<vmem>>, vector<8x32xf32>,
    %c0_154 = arith.constant 0 : index
    %c0_155 = arith.constant 0 : index
    %317 = vector.load %arg16[%c0_154, %c0_155] : memref<8x32xf32, #tpu.memory_space<vmem>>, vector<8x32xf32>
    tpu.vector_store %arg16[%c0_154, %c0_155], %315 {strides = array<i32>} : memref<8x32xf32, #tpu.memory_space<vmem>>, vector<8x32xf32>,
    %cst_156 = arith.constant 0.000000e+00 : f32
    %318 = vector.shape_cast %308 : vector<8x1xi1> to vector<8x1xi1>
    %319 = vector.broadcast %318 : vector<8x1xi1> to vector<8x32xi1>
    %320 = vector.broadcast %cst_156 : f32 to vector<8x32xf32>
    %321 = arith.select %319, %311, %320 : vector<8x32xi1>, vector<8x32xf32>
    %322 = vector.extract_strided_slice %321 {offsets = [0, 0], sizes = [4, 32], strides = [1, 1]} : vector<8x32xf32> to vector<4x32xf32>
    %c20_157 = arith.constant 20 : index
    %c0_158 = arith.constant 0 : index
    %323 = vector.load %arg17[%c20_157, %c0_158] : memref<32x32xf32, #tpu.memory_space<vmem>>, vector<4x32xf32>
    tpu.vector_store %arg17[%c20_157, %c0_158], %322 {strides = array<i32>} : memref<32x32xf32, #tpu.memory_space<vmem>>, vector<4x32xf32>,
    %324 = vector.extract_strided_slice %321 {offsets = [4, 0], sizes = [4, 32], strides = [1, 1]} : vector<8x32xf32> to vector<4x32xf32>
    %c8_159 = arith.constant 8 : index
    %c0_160 = arith.constant 0 : index
    %325 = vector.load %arg18[%c8_159, %c0_160] : memref<32x32xf32, #tpu.memory_space<vmem>>, vector<4x32xf32>
    tpu.vector_store %arg18[%c8_159, %c0_160], %324 {strides = array<i32>} : memref<32x32xf32, #tpu.memory_space<vmem>>, vector<4x32xf32>,
    %c24_161 = arith.constant 24 : index
    %c0_162 = arith.constant 0 : index
    %326 = vector.load %arg19[%c24_161, %c0_162] : memref<32x128xf32, #tpu.memory_space<vmem>>, vector<4x128xf32>
    %c4_163 = arith.constant 4 : index
    %c0_164 = arith.constant 0 : index
    %327 = vector.load %arg20[%c4_163, %c0_164] : memref<32x128xf32, #tpu.memory_space<vmem>>, vector<4x128xf32>
    %328 = tpu.concatenate %326, %327 in 0 : vector<4x128xf32>, vector<4x128xf32> -> vector<8x128xf32>
    %c0_165 = arith.constant 0 : index
    %c0_166 = arith.constant 0 : index
    %329 = vector.load %arg15[%c0_165, %c0_166] : memref<8x32xf32, #tpu.memory_space<vmem>>, vector<8x32xf32>
    %cst_167 = arith.constant 0.000000e+00 : f32
    %330 = vector.broadcast %cst_167 : f32 to vector<8x32xf32>
    %331 = arith.select %10, %329, %330 : vector<8x32xi1>, vector<8x32xf32>
    %cst_168 = arith.constant 0.000000e+00 : f32
    %332 = vector.broadcast %cst_168 : f32 to vector<8x32xf32>
    %333 = arith.select %10, %332, %329 : vector<8x32xi1>, vector<8x32xf32>
    %334 = tpu.concatenate %331, %333 in 1 : vector<8x32xf32>, vector<8x32xf32> -> vector<8x64xf32>
    %cst_169 = arith.constant dense<0.000000e+00> : vector<8x128xf32>
    %335 = tpu.matmul %334, %27, %cst_169 {dimension_numbers = #tpu.dot_dimension_numbers<[1], [0], [0], [1], [0, 0, 1, 1], [], []>} : vector<8x64xf32>, vector<64x128xf32>, vector<8x128xf32> -> vector<8x128xf32>
    %336 = arith.addf %328, %335 : vector<8x128xf32>
    %337 = math.tanh %336 : vector<8x128xf32>
    %338 = arith.negf %336 : vector<8x128xf32>
    %339 = math.exp %338 : vector<8x128xf32>
    %cst_170 = arith.constant 1.000000e+00 : f32
    %340 = vector.broadcast %cst_170 : f32 to vector<8x128xf32>
    %341 = arith.addf %340, %339 : vector<8x128xf32>
    %342 = arith.divf %340, %341 : vector<8x128xf32>
    %343 = arith.select %7, %337, %342 : vector<8x128xi1>, vector<8x128xf32>
    %344 = vector.extract_strided_slice %343 {offsets = [0, 0], sizes = [8, 32], strides = [1, 1]} : vector<8x128xf32> to vector<8x32xf32>
    %345 = vector.extract_strided_slice %343 {offsets = [0, 32], sizes = [8, 32], strides = [1, 1]} : vector<8x128xf32> to vector<8x32xf32>
    %346 = vector.extract_strided_slice %343 {offsets = [0, 64], sizes = [8, 32], strides = [1, 1]} : vector<8x128xf32> to vector<8x32xf32>
    %347 = vector.extract_strided_slice %343 {offsets = [0, 96], sizes = [8, 32], strides = [1, 1]} : vector<8x128xf32> to vector<8x32xf32>
    %c0_171 = arith.constant 0 : index
    %c0_172 = arith.constant 0 : index
    %348 = vector.load %arg16[%c0_171, %c0_172] : memref<8x32xf32, #tpu.memory_space<vmem>>, vector<8x32xf32>
    %349 = arith.mulf %345, %348 : vector<8x32xf32>
    %350 = arith.mulf %344, %346 : vector<8x32xf32>
    %351 = arith.addf %349, %350 : vector<8x32xf32>
    %352 = math.tanh %351 : vector<8x32xf32>
    %353 = arith.mulf %347, %352 : vector<8x32xf32>
    %c6_i32_173 = arith.constant 6 : i32
    %c1_i32_174 = arith.constant 1 : i32
    %354 = vector.broadcast %c6_i32_173 : i32 to vector<8x1xi32>
    %355 = vector.broadcast %c1_i32_174 : i32 to vector<8x1xi32>
    %356 = arith.select %13, %354, %355 : vector<8x1xi1>, vector<8x1xi32>
    %357 = arith.cmpi sgt, %1, %356 : vector<8x1xi32>
    %358 = vector.shape_cast %357 : vector<8x1xi1> to vector<8x1xi1>
    %359 = vector.broadcast %358 : vector<8x1xi1> to vector<8x32xi1>
    %360 = arith.select %359, %353, %329 : vector<8x32xi1>, vector<8x32xf32>
    %c0_175 = arith.constant 0 : index
    %c0_176 = arith.constant 0 : index
    %361 = vector.load %arg16[%c0_175, %c0_176] : memref<8x32xf32, #tpu.memory_space<vmem>>, vector<8x32xf32>
    %362 = vector.shape_cast %357 : vector<8x1xi1> to vector<8x1xi1>
    %363 = vector.broadcast %362 : vector<8x1xi1> to vector<8x32xi1>
    %364 = arith.select %363, %351, %361 : vector<8x32xi1>, vector<8x32xf32>
    %c0_177 = arith.constant 0 : index
    %c0_178 = arith.constant 0 : index
    %365 = vector.load %arg15[%c0_177, %c0_178] : memref<8x32xf32, #tpu.memory_space<vmem>>, vector<8x32xf32>
    tpu.vector_store %arg15[%c0_177, %c0_178], %360 {strides = array<i32>} : memref<8x32xf32, #tpu.memory_space<vmem>>, vector<8x32xf32>,
    %c0_179 = arith.constant 0 : index
    %c0_180 = arith.constant 0 : index
    %366 = vector.load %arg16[%c0_179, %c0_180] : memref<8x32xf32, #tpu.memory_space<vmem>>, vector<8x32xf32>
    tpu.vector_store %arg16[%c0_179, %c0_180], %364 {strides = array<i32>} : memref<8x32xf32, #tpu.memory_space<vmem>>, vector<8x32xf32>,
    %cst_181 = arith.constant 0.000000e+00 : f32
    %367 = vector.shape_cast %357 : vector<8x1xi1> to vector<8x1xi1>
    %368 = vector.broadcast %367 : vector<8x1xi1> to vector<8x32xi1>
    %369 = vector.broadcast %cst_181 : f32 to vector<8x32xf32>
    %370 = arith.select %368, %360, %369 : vector<8x32xi1>, vector<8x32xf32>
    %371 = vector.extract_strided_slice %370 {offsets = [0, 0], sizes = [4, 32], strides = [1, 1]} : vector<8x32xf32> to vector<4x32xf32>
    %c24_182 = arith.constant 24 : index
    %c0_183 = arith.constant 0 : index
    %372 = vector.load %arg17[%c24_182, %c0_183] : memref<32x32xf32, #tpu.memory_space<vmem>>, vector<4x32xf32>
    tpu.vector_store %arg17[%c24_182, %c0_183], %371 {strides = array<i32>} : memref<32x32xf32, #tpu.memory_space<vmem>>, vector<4x32xf32>,
    %373 = vector.extract_strided_slice %370 {offsets = [4, 0], sizes = [4, 32], strides = [1, 1]} : vector<8x32xf32> to vector<4x32xf32>
    %c4_184 = arith.constant 4 : index
    %c0_185 = arith.constant 0 : index
    %374 = vector.load %arg18[%c4_184, %c0_185] : memref<32x32xf32, #tpu.memory_space<vmem>>, vector<4x32xf32>
    tpu.vector_store %arg18[%c4_184, %c0_185], %373 {strides = array<i32>} : memref<32x32xf32, #tpu.memory_space<vmem>>, vector<4x32xf32>,
    %c28_186 = arith.constant 28 : index
    %c0_187 = arith.constant 0 : index
    %375 = vector.load %arg19[%c28_186, %c0_187] : memref<32x128xf32, #tpu.memory_space<vmem>>, vector<4x128xf32>
    %c0_188 = arith.constant 0 : index
    %c0_189 = arith.constant 0 : index
    %376 = vector.load %arg20[%c0_188, %c0_189] : memref<32x128xf32, #tpu.memory_space<vmem>>, vector<4x128xf32>
    %377 = tpu.concatenate %375, %376 in 0 : vector<4x128xf32>, vector<4x128xf32> -> vector<8x128xf32>
    %c0_190 = arith.constant 0 : index
    %c0_191 = arith.constant 0 : index
    %378 = vector.load %arg15[%c0_190, %c0_191] : memref<8x32xf32, #tpu.memory_space<vmem>>, vector<8x32xf32>
    %cst_192 = arith.constant 0.000000e+00 : f32
    %379 = vector.broadcast %cst_192 : f32 to vector<8x32xf32>
    %380 = arith.select %10, %378, %379 : vector<8x32xi1>, vector<8x32xf32>
    %cst_193 = arith.constant 0.000000e+00 : f32
    %381 = vector.broadcast %cst_193 : f32 to vector<8x32xf32>
    %382 = arith.select %10, %381, %378 : vector<8x32xi1>, vector<8x32xf32>
    %383 = tpu.concatenate %380, %382 in 1 : vector<8x32xf32>, vector<8x32xf32> -> vector<8x64xf32>
    %cst_194 = arith.constant dense<0.000000e+00> : vector<8x128xf32>
    %384 = tpu.matmul %383, %27, %cst_194 {dimension_numbers = #tpu.dot_dimension_numbers<[1], [0], [0], [1], [0, 0, 1, 1], [], []>} : vector<8x64xf32>, vector<64x128xf32>, vector<8x128xf32> -> vector<8x128xf32>
    %385 = arith.addf %377, %384 : vector<8x128xf32>
    %386 = math.tanh %385 : vector<8x128xf32>
    %387 = arith.negf %385 : vector<8x128xf32>
    %388 = math.exp %387 : vector<8x128xf32>
    %cst_195 = arith.constant 1.000000e+00 : f32
    %389 = vector.broadcast %cst_195 : f32 to vector<8x128xf32>
    %390 = arith.addf %389, %388 : vector<8x128xf32>
    %391 = arith.divf %389, %390 : vector<8x128xf32>
    %392 = arith.select %7, %386, %391 : vector<8x128xi1>, vector<8x128xf32>
    %393 = vector.extract_strided_slice %392 {offsets = [0, 0], sizes = [8, 32], strides = [1, 1]} : vector<8x128xf32> to vector<8x32xf32>
    %394 = vector.extract_strided_slice %392 {offsets = [0, 32], sizes = [8, 32], strides = [1, 1]} : vector<8x128xf32> to vector<8x32xf32>
    %395 = vector.extract_strided_slice %392 {offsets = [0, 64], sizes = [8, 32], strides = [1, 1]} : vector<8x128xf32> to vector<8x32xf32>
    %396 = vector.extract_strided_slice %392 {offsets = [0, 96], sizes = [8, 32], strides = [1, 1]} : vector<8x128xf32> to vector<8x32xf32>
    %c0_196 = arith.constant 0 : index
    %c0_197 = arith.constant 0 : index
    %397 = vector.load %arg16[%c0_196, %c0_197] : memref<8x32xf32, #tpu.memory_space<vmem>>, vector<8x32xf32>
    %398 = arith.mulf %394, %397 : vector<8x32xf32>
    %399 = arith.mulf %393, %395 : vector<8x32xf32>
    %400 = arith.addf %398, %399 : vector<8x32xf32>
    %401 = math.tanh %400 : vector<8x32xf32>
    %402 = arith.mulf %396, %401 : vector<8x32xf32>
    %c7_i32_198 = arith.constant 7 : i32
    %c0_i32_199 = arith.constant 0 : i32
    %403 = vector.broadcast %c7_i32_198 : i32 to vector<8x1xi32>
    %404 = vector.broadcast %c0_i32_199 : i32 to vector<8x1xi32>
    %405 = arith.select %13, %403, %404 : vector<8x1xi1>, vector<8x1xi32>
    %406 = arith.cmpi sgt, %1, %405 : vector<8x1xi32>
    %407 = vector.shape_cast %406 : vector<8x1xi1> to vector<8x1xi1>
    %408 = vector.broadcast %407 : vector<8x1xi1> to vector<8x32xi1>
    %409 = arith.select %408, %402, %378 : vector<8x32xi1>, vector<8x32xf32>
    %c0_200 = arith.constant 0 : index
    %c0_201 = arith.constant 0 : index
    %410 = vector.load %arg16[%c0_200, %c0_201] : memref<8x32xf32, #tpu.memory_space<vmem>>, vector<8x32xf32>
    %411 = vector.shape_cast %406 : vector<8x1xi1> to vector<8x1xi1>
    %412 = vector.broadcast %411 : vector<8x1xi1> to vector<8x32xi1>
    %413 = arith.select %412, %400, %410 : vector<8x32xi1>, vector<8x32xf32>
    %c0_202 = arith.constant 0 : index
    %c0_203 = arith.constant 0 : index
    %414 = vector.load %arg15[%c0_202, %c0_203] : memref<8x32xf32, #tpu.memory_space<vmem>>, vector<8x32xf32>
    tpu.vector_store %arg15[%c0_202, %c0_203], %409 {strides = array<i32>} : memref<8x32xf32, #tpu.memory_space<vmem>>, vector<8x32xf32>,
    %c0_204 = arith.constant 0 : index
    %c0_205 = arith.constant 0 : index
    %415 = vector.load %arg16[%c0_204, %c0_205] : memref<8x32xf32, #tpu.memory_space<vmem>>, vector<8x32xf32>
    tpu.vector_store %arg16[%c0_204, %c0_205], %413 {strides = array<i32>} : memref<8x32xf32, #tpu.memory_space<vmem>>, vector<8x32xf32>,
    %cst_206 = arith.constant 0.000000e+00 : f32
    %416 = vector.shape_cast %406 : vector<8x1xi1> to vector<8x1xi1>
    %417 = vector.broadcast %416 : vector<8x1xi1> to vector<8x32xi1>
    %418 = vector.broadcast %cst_206 : f32 to vector<8x32xf32>
    %419 = arith.select %417, %409, %418 : vector<8x32xi1>, vector<8x32xf32>
    %420 = vector.extract_strided_slice %419 {offsets = [0, 0], sizes = [4, 32], strides = [1, 1]} : vector<8x32xf32> to vector<4x32xf32>
    %c28_207 = arith.constant 28 : index
    %c0_208 = arith.constant 0 : index
    %421 = vector.load %arg17[%c28_207, %c0_208] : memref<32x32xf32, #tpu.memory_space<vmem>>, vector<4x32xf32>
    tpu.vector_store %arg17[%c28_207, %c0_208], %420 {strides = array<i32>} : memref<32x32xf32, #tpu.memory_space<vmem>>, vector<4x32xf32>,
    %422 = vector.extract_strided_slice %419 {offsets = [4, 0], sizes = [4, 32], strides = [1, 1]} : vector<8x32xf32> to vector<4x32xf32>
    %c0_209 = arith.constant 0 : index
    %c0_210 = arith.constant 0 : index
    %423 = vector.load %arg18[%c0_209, %c0_210] : memref<32x32xf32, #tpu.memory_space<vmem>>, vector<4x32xf32>
    tpu.vector_store %arg18[%c0_209, %c0_210], %422 {strides = array<i32>} : memref<32x32xf32, #tpu.memory_space<vmem>>, vector<4x32xf32>,
    %c0_211 = arith.constant 0 : index
    %c0_212 = arith.constant 0 : index
    %424 = vector.load %arg17[%c0_211, %c0_212] : memref<32x32xf32, #tpu.memory_space<vmem>>, vector<32x32xf32>
    %c0_213 = arith.constant 0 : index
    %c0_214 = arith.constant 0 : index
    %425 = vector.load %arg18[%c0_213, %c0_214] : memref<32x32xf32, #tpu.memory_space<vmem>>, vector<32x32xf32>
    %426 = tpu.concatenate %424, %425 in 1 : vector<32x32xf32>, vector<32x32xf32> -> vector<32x64xf32>
    %c0_215 = arith.constant 0 : index
    %c0_216 = arith.constant 0 : index
    %427 = vector.load %arg7[%c0_215, %c0_216] : memref<64x128xf32, #tpu.memory_space<vmem>>, vector<64x128xf32>
    %cst_217 = arith.constant dense<0.000000e+00> : vector<32x128xf32>
    %428 = tpu.matmul %426, %427, %cst_217 {dimension_numbers = #tpu.dot_dimension_numbers<[1], [0], [0], [1], [0, 0, 1, 1], [], []>} : vector<32x64xf32>, vector<64x128xf32>, vector<32x128xf32> -> vector<32x128xf32>
    %c0_218 = arith.constant 0 : index
    %c0_219 = arith.constant 0 : index
    %429 = vector.load %arg9[%c0_218, %c0_219] : memref<1x128xf32, #tpu.memory_space<vmem>>, vector<1x128xf32>
    %430 = vector.broadcast %429 : vector<1x128xf32> to vector<32x128xf32>
    %431 = arith.addf %428, %430 : vector<32x128xf32>
    %c0_220 = arith.constant 0 : index
    %c0_221 = arith.constant 0 : index
    %432 = vector.load %arg19[%c0_220, %c0_221] : memref<32x128xf32, #tpu.memory_space<vmem>>, vector<32x128xf32>
    tpu.vector_store %arg19[%c0_220, %c0_221], %431 {strides = array<i32>} : memref<32x128xf32, #tpu.memory_space<vmem>>, vector<32x128xf32>,
    %c0_222 = arith.constant 0 : index
    %c0_223 = arith.constant 0 : index
    %433 = vector.load %arg8[%c0_222, %c0_223] : memref<64x128xf32, #tpu.memory_space<vmem>>, vector<64x128xf32>
    %cst_224 = arith.constant dense<0.000000e+00> : vector<32x128xf32>
    %434 = tpu.matmul %426, %433, %cst_224 {dimension_numbers = #tpu.dot_dimension_numbers<[1], [0], [0], [1], [0, 0, 1, 1], [], []>} : vector<32x64xf32>, vector<64x128xf32>, vector<32x128xf32> -> vector<32x128xf32>
    %c0_225 = arith.constant 0 : index
    %c0_226 = arith.constant 0 : index
    %435 = vector.load %arg10[%c0_225, %c0_226] : memref<1x128xf32, #tpu.memory_space<vmem>>, vector<1x128xf32>
    %436 = vector.broadcast %435 : vector<1x128xf32> to vector<32x128xf32>
    %437 = arith.addf %434, %436 : vector<32x128xf32>
    %c0_227 = arith.constant 0 : index
    %c0_228 = arith.constant 0 : index
    %438 = vector.load %arg20[%c0_227, %c0_228] : memref<32x128xf32, #tpu.memory_space<vmem>>, vector<32x128xf32>
    tpu.vector_store %arg20[%c0_227, %c0_228], %437 {strides = array<i32>} : memref<32x128xf32, #tpu.memory_space<vmem>>, vector<32x128xf32>,
    %c0_229 = arith.constant 0 : index
    %c0_230 = arith.constant 0 : index
    %439 = vector.load %arg11[%c0_229, %c0_230] : memref<64x128xf32, #tpu.memory_space<vmem>>, vector<64x128xf32>
    %cst_231 = arith.constant 0.000000e+00 : f32
    %440 = vector.broadcast %cst_231 : f32 to vector<8x32xf32>
    %c0_232 = arith.constant 0 : index
    %c0_233 = arith.constant 0 : index
    %441 = vector.load %arg15[%c0_232, %c0_233] : memref<8x32xf32, #tpu.memory_space<vmem>>, vector<8x32xf32>
    tpu.vector_store %arg15[%c0_232, %c0_233], %440 {strides = array<i32>} : memref<8x32xf32, #tpu.memory_space<vmem>>, vector<8x32xf32>,
    %cst_234 = arith.constant 0.000000e+00 : f32
    %442 = vector.broadcast %cst_234 : f32 to vector<8x32xf32>
    %c0_235 = arith.constant 0 : index
    %c0_236 = arith.constant 0 : index
    %443 = vector.load %arg16[%c0_235, %c0_236] : memref<8x32xf32, #tpu.memory_space<vmem>>, vector<8x32xf32>
    tpu.vector_store %arg16[%c0_235, %c0_236], %442 {strides = array<i32>} : memref<8x32xf32, #tpu.memory_space<vmem>>, vector<8x32xf32>,
    %c0_237 = arith.constant 0 : index
    %c0_238 = arith.constant 0 : index
    %444 = vector.load %arg19[%c0_237, %c0_238] : memref<32x128xf32, #tpu.memory_space<vmem>>, vector<4x128xf32>
    %c28_239 = arith.constant 28 : index
    %c0_240 = arith.constant 0 : index
    %445 = vector.load %arg20[%c28_239, %c0_240] : memref<32x128xf32, #tpu.memory_space<vmem>>, vector<4x128xf32>
    %446 = tpu.concatenate %444, %445 in 0 : vector<4x128xf32>, vector<4x128xf32> -> vector<8x128xf32>
    %c0_241 = arith.constant 0 : index
    %c0_242 = arith.constant 0 : index
    %447 = vector.load %arg15[%c0_241, %c0_242] : memref<8x32xf32, #tpu.memory_space<vmem>>, vector<8x32xf32>
    %cst_243 = arith.constant 0.000000e+00 : f32
    %448 = vector.broadcast %cst_243 : f32 to vector<8x32xf32>
    %449 = arith.select %10, %447, %448 : vector<8x32xi1>, vector<8x32xf32>
    %cst_244 = arith.constant 0.000000e+00 : f32
    %450 = vector.broadcast %cst_244 : f32 to vector<8x32xf32>
    %451 = arith.select %10, %450, %447 : vector<8x32xi1>, vector<8x32xf32>
    %452 = tpu.concatenate %449, %451 in 1 : vector<8x32xf32>, vector<8x32xf32> -> vector<8x64xf32>
    %cst_245 = arith.constant dense<0.000000e+00> : vector<8x128xf32>
    %453 = tpu.matmul %452, %439, %cst_245 {dimension_numbers = #tpu.dot_dimension_numbers<[1], [0], [0], [1], [0, 0, 1, 1], [], []>} : vector<8x64xf32>, vector<64x128xf32>, vector<8x128xf32> -> vector<8x128xf32>
    %454 = arith.addf %446, %453 : vector<8x128xf32>
    %455 = math.tanh %454 : vector<8x128xf32>
    %456 = arith.negf %454 : vector<8x128xf32>
    %457 = math.exp %456 : vector<8x128xf32>
    %cst_246 = arith.constant 1.000000e+00 : f32
    %458 = vector.broadcast %cst_246 : f32 to vector<8x128xf32>
    %459 = arith.addf %458, %457 : vector<8x128xf32>
    %460 = arith.divf %458, %459 : vector<8x128xf32>
    %461 = arith.select %7, %455, %460 : vector<8x128xi1>, vector<8x128xf32>
    %462 = vector.extract_strided_slice %461 {offsets = [0, 0], sizes = [8, 32], strides = [1, 1]} : vector<8x128xf32> to vector<8x32xf32>
    %463 = vector.extract_strided_slice %461 {offsets = [0, 32], sizes = [8, 32], strides = [1, 1]} : vector<8x128xf32> to vector<8x32xf32>
    %464 = vector.extract_strided_slice %461 {offsets = [0, 64], sizes = [8, 32], strides = [1, 1]} : vector<8x128xf32> to vector<8x32xf32>
    %465 = vector.extract_strided_slice %461 {offsets = [0, 96], sizes = [8, 32], strides = [1, 1]} : vector<8x128xf32> to vector<8x32xf32>
    %c0_247 = arith.constant 0 : index
    %c0_248 = arith.constant 0 : index
    %466 = vector.load %arg16[%c0_247, %c0_248] : memref<8x32xf32, #tpu.memory_space<vmem>>, vector<8x32xf32>
    %467 = arith.mulf %463, %466 : vector<8x32xf32>
    %468 = arith.mulf %462, %464 : vector<8x32xf32>
    %469 = arith.addf %467, %468 : vector<8x32xf32>
    %470 = math.tanh %469 : vector<8x32xf32>
    %471 = arith.mulf %465, %470 : vector<8x32xf32>
    %c0_i32_249 = arith.constant 0 : i32
    %c7_i32_250 = arith.constant 7 : i32
    %472 = vector.broadcast %c0_i32_249 : i32 to vector<8x1xi32>
    %473 = vector.broadcast %c7_i32_250 : i32 to vector<8x1xi32>
    %474 = arith.select %13, %472, %473 : vector<8x1xi1>, vector<8x1xi32>
    %475 = arith.cmpi sgt, %1, %474 : vector<8x1xi32>
    %476 = vector.shape_cast %475 : vector<8x1xi1> to vector<8x1xi1>
    %477 = vector.broadcast %476 : vector<8x1xi1> to vector<8x32xi1>
    %478 = arith.select %477, %471, %447 : vector<8x32xi1>, vector<8x32xf32>
    %c0_251 = arith.constant 0 : index
    %c0_252 = arith.constant 0 : index
    %479 = vector.load %arg16[%c0_251, %c0_252] : memref<8x32xf32, #tpu.memory_space<vmem>>, vector<8x32xf32>
    %480 = vector.shape_cast %475 : vector<8x1xi1> to vector<8x1xi1>
    %481 = vector.broadcast %480 : vector<8x1xi1> to vector<8x32xi1>
    %482 = arith.select %481, %469, %479 : vector<8x32xi1>, vector<8x32xf32>
    %c0_253 = arith.constant 0 : index
    %c0_254 = arith.constant 0 : index
    %483 = vector.load %arg15[%c0_253, %c0_254] : memref<8x32xf32, #tpu.memory_space<vmem>>, vector<8x32xf32>
    tpu.vector_store %arg15[%c0_253, %c0_254], %478 {strides = array<i32>} : memref<8x32xf32, #tpu.memory_space<vmem>>, vector<8x32xf32>,
    %c0_255 = arith.constant 0 : index
    %c0_256 = arith.constant 0 : index
    %484 = vector.load %arg16[%c0_255, %c0_256] : memref<8x32xf32, #tpu.memory_space<vmem>>, vector<8x32xf32>
    tpu.vector_store %arg16[%c0_255, %c0_256], %482 {strides = array<i32>} : memref<8x32xf32, #tpu.memory_space<vmem>>, vector<8x32xf32>,
    %c4_257 = arith.constant 4 : index
    %c0_258 = arith.constant 0 : index
    %485 = vector.load %arg19[%c4_257, %c0_258] : memref<32x128xf32, #tpu.memory_space<vmem>>, vector<4x128xf32>
    %c24_259 = arith.constant 24 : index
    %c0_260 = arith.constant 0 : index
    %486 = vector.load %arg20[%c24_259, %c0_260] : memref<32x128xf32, #tpu.memory_space<vmem>>, vector<4x128xf32>
    %487 = tpu.concatenate %485, %486 in 0 : vector<4x128xf32>, vector<4x128xf32> -> vector<8x128xf32>
    %c0_261 = arith.constant 0 : index
    %c0_262 = arith.constant 0 : index
    %488 = vector.load %arg15[%c0_261, %c0_262] : memref<8x32xf32, #tpu.memory_space<vmem>>, vector<8x32xf32>
    %cst_263 = arith.constant 0.000000e+00 : f32
    %489 = vector.broadcast %cst_263 : f32 to vector<8x32xf32>
    %490 = arith.select %10, %488, %489 : vector<8x32xi1>, vector<8x32xf32>
    %cst_264 = arith.constant 0.000000e+00 : f32
    %491 = vector.broadcast %cst_264 : f32 to vector<8x32xf32>
    %492 = arith.select %10, %491, %488 : vector<8x32xi1>, vector<8x32xf32>
    %493 = tpu.concatenate %490, %492 in 1 : vector<8x32xf32>, vector<8x32xf32> -> vector<8x64xf32>
    %cst_265 = arith.constant dense<0.000000e+00> : vector<8x128xf32>
    %494 = tpu.matmul %493, %439, %cst_265 {dimension_numbers = #tpu.dot_dimension_numbers<[1], [0], [0], [1], [0, 0, 1, 1], [], []>} : vector<8x64xf32>, vector<64x128xf32>, vector<8x128xf32> -> vector<8x128xf32>
    %495 = arith.addf %487, %494 : vector<8x128xf32>
    %496 = math.tanh %495 : vector<8x128xf32>
    %497 = arith.negf %495 : vector<8x128xf32>
    %498 = math.exp %497 : vector<8x128xf32>
    %cst_266 = arith.constant 1.000000e+00 : f32
    %499 = vector.broadcast %cst_266 : f32 to vector<8x128xf32>
    %500 = arith.addf %499, %498 : vector<8x128xf32>
    %501 = arith.divf %499, %500 : vector<8x128xf32>
    %502 = arith.select %7, %496, %501 : vector<8x128xi1>, vector<8x128xf32>
    %503 = vector.extract_strided_slice %502 {offsets = [0, 0], sizes = [8, 32], strides = [1, 1]} : vector<8x128xf32> to vector<8x32xf32>
    %504 = vector.extract_strided_slice %502 {offsets = [0, 32], sizes = [8, 32], strides = [1, 1]} : vector<8x128xf32> to vector<8x32xf32>
    %505 = vector.extract_strided_slice %502 {offsets = [0, 64], sizes = [8, 32], strides = [1, 1]} : vector<8x128xf32> to vector<8x32xf32>
    %506 = vector.extract_strided_slice %502 {offsets = [0, 96], sizes = [8, 32], strides = [1, 1]} : vector<8x128xf32> to vector<8x32xf32>
    %c0_267 = arith.constant 0 : index
    %c0_268 = arith.constant 0 : index
    %507 = vector.load %arg16[%c0_267, %c0_268] : memref<8x32xf32, #tpu.memory_space<vmem>>, vector<8x32xf32>
    %508 = arith.mulf %504, %507 : vector<8x32xf32>
    %509 = arith.mulf %503, %505 : vector<8x32xf32>
    %510 = arith.addf %508, %509 : vector<8x32xf32>
    %511 = math.tanh %510 : vector<8x32xf32>
    %512 = arith.mulf %506, %511 : vector<8x32xf32>
    %c1_i32_269 = arith.constant 1 : i32
    %c6_i32_270 = arith.constant 6 : i32
    %513 = vector.broadcast %c1_i32_269 : i32 to vector<8x1xi32>
    %514 = vector.broadcast %c6_i32_270 : i32 to vector<8x1xi32>
    %515 = arith.select %13, %513, %514 : vector<8x1xi1>, vector<8x1xi32>
    %516 = arith.cmpi sgt, %1, %515 : vector<8x1xi32>
    %517 = vector.shape_cast %516 : vector<8x1xi1> to vector<8x1xi1>
    %518 = vector.broadcast %517 : vector<8x1xi1> to vector<8x32xi1>
    %519 = arith.select %518, %512, %488 : vector<8x32xi1>, vector<8x32xf32>
    %c0_271 = arith.constant 0 : index
    %c0_272 = arith.constant 0 : index
    %520 = vector.load %arg16[%c0_271, %c0_272] : memref<8x32xf32, #tpu.memory_space<vmem>>, vector<8x32xf32>
    %521 = vector.shape_cast %516 : vector<8x1xi1> to vector<8x1xi1>
    %522 = vector.broadcast %521 : vector<8x1xi1> to vector<8x32xi1>
    %523 = arith.select %522, %510, %520 : vector<8x32xi1>, vector<8x32xf32>
    %c0_273 = arith.constant 0 : index
    %c0_274 = arith.constant 0 : index
    %524 = vector.load %arg15[%c0_273, %c0_274] : memref<8x32xf32, #tpu.memory_space<vmem>>, vector<8x32xf32>
    tpu.vector_store %arg15[%c0_273, %c0_274], %519 {strides = array<i32>} : memref<8x32xf32, #tpu.memory_space<vmem>>, vector<8x32xf32>,
    %c0_275 = arith.constant 0 : index
    %c0_276 = arith.constant 0 : index
    %525 = vector.load %arg16[%c0_275, %c0_276] : memref<8x32xf32, #tpu.memory_space<vmem>>, vector<8x32xf32>
    tpu.vector_store %arg16[%c0_275, %c0_276], %523 {strides = array<i32>} : memref<8x32xf32, #tpu.memory_space<vmem>>, vector<8x32xf32>,
    %c8_277 = arith.constant 8 : index
    %c0_278 = arith.constant 0 : index
    %526 = vector.load %arg19[%c8_277, %c0_278] : memref<32x128xf32, #tpu.memory_space<vmem>>, vector<4x128xf32>
    %c20_279 = arith.constant 20 : index
    %c0_280 = arith.constant 0 : index
    %527 = vector.load %arg20[%c20_279, %c0_280] : memref<32x128xf32, #tpu.memory_space<vmem>>, vector<4x128xf32>
    %528 = tpu.concatenate %526, %527 in 0 : vector<4x128xf32>, vector<4x128xf32> -> vector<8x128xf32>
    %c0_281 = arith.constant 0 : index
    %c0_282 = arith.constant 0 : index
    %529 = vector.load %arg15[%c0_281, %c0_282] : memref<8x32xf32, #tpu.memory_space<vmem>>, vector<8x32xf32>
    %cst_283 = arith.constant 0.000000e+00 : f32
    %530 = vector.broadcast %cst_283 : f32 to vector<8x32xf32>
    %531 = arith.select %10, %529, %530 : vector<8x32xi1>, vector<8x32xf32>
    %cst_284 = arith.constant 0.000000e+00 : f32
    %532 = vector.broadcast %cst_284 : f32 to vector<8x32xf32>
    %533 = arith.select %10, %532, %529 : vector<8x32xi1>, vector<8x32xf32>
    %534 = tpu.concatenate %531, %533 in 1 : vector<8x32xf32>, vector<8x32xf32> -> vector<8x64xf32>
    %cst_285 = arith.constant dense<0.000000e+00> : vector<8x128xf32>
    %535 = tpu.matmul %534, %439, %cst_285 {dimension_numbers = #tpu.dot_dimension_numbers<[1], [0], [0], [1], [0, 0, 1, 1], [], []>} : vector<8x64xf32>, vector<64x128xf32>, vector<8x128xf32> -> vector<8x128xf32>
    %536 = arith.addf %528, %535 : vector<8x128xf32>
    %537 = math.tanh %536 : vector<8x128xf32>
    %538 = arith.negf %536 : vector<8x128xf32>
    %539 = math.exp %538 : vector<8x128xf32>
    %cst_286 = arith.constant 1.000000e+00 : f32
    %540 = vector.broadcast %cst_286 : f32 to vector<8x128xf32>
    %541 = arith.addf %540, %539 : vector<8x128xf32>
    %542 = arith.divf %540, %541 : vector<8x128xf32>
    %543 = arith.select %7, %537, %542 : vector<8x128xi1>, vector<8x128xf32>
    %544 = vector.extract_strided_slice %543 {offsets = [0, 0], sizes = [8, 32], strides = [1, 1]} : vector<8x128xf32> to vector<8x32xf32>
    %545 = vector.extract_strided_slice %543 {offsets = [0, 32], sizes = [8, 32], strides = [1, 1]} : vector<8x128xf32> to vector<8x32xf32>
    %546 = vector.extract_strided_slice %543 {offsets = [0, 64], sizes = [8, 32], strides = [1, 1]} : vector<8x128xf32> to vector<8x32xf32>
    %547 = vector.extract_strided_slice %543 {offsets = [0, 96], sizes = [8, 32], strides = [1, 1]} : vector<8x128xf32> to vector<8x32xf32>
    %c0_287 = arith.constant 0 : index
    %c0_288 = arith.constant 0 : index
    %548 = vector.load %arg16[%c0_287, %c0_288] : memref<8x32xf32, #tpu.memory_space<vmem>>, vector<8x32xf32>
    %549 = arith.mulf %545, %548 : vector<8x32xf32>
    %550 = arith.mulf %544, %546 : vector<8x32xf32>
    %551 = arith.addf %549, %550 : vector<8x32xf32>
    %552 = math.tanh %551 : vector<8x32xf32>
    %553 = arith.mulf %547, %552 : vector<8x32xf32>
    %c2_i32_289 = arith.constant 2 : i32
    %c5_i32_290 = arith.constant 5 : i32
    %554 = vector.broadcast %c2_i32_289 : i32 to vector<8x1xi32>
    %555 = vector.broadcast %c5_i32_290 : i32 to vector<8x1xi32>
    %556 = arith.select %13, %554, %555 : vector<8x1xi1>, vector<8x1xi32>
    %557 = arith.cmpi sgt, %1, %556 : vector<8x1xi32>
    %558 = vector.shape_cast %557 : vector<8x1xi1> to vector<8x1xi1>
    %559 = vector.broadcast %558 : vector<8x1xi1> to vector<8x32xi1>
    %560 = arith.select %559, %553, %529 : vector<8x32xi1>, vector<8x32xf32>
    %c0_291 = arith.constant 0 : index
    %c0_292 = arith.constant 0 : index
    %561 = vector.load %arg16[%c0_291, %c0_292] : memref<8x32xf32, #tpu.memory_space<vmem>>, vector<8x32xf32>
    %562 = vector.shape_cast %557 : vector<8x1xi1> to vector<8x1xi1>
    %563 = vector.broadcast %562 : vector<8x1xi1> to vector<8x32xi1>
    %564 = arith.select %563, %551, %561 : vector<8x32xi1>, vector<8x32xf32>
    %c0_293 = arith.constant 0 : index
    %c0_294 = arith.constant 0 : index
    %565 = vector.load %arg15[%c0_293, %c0_294] : memref<8x32xf32, #tpu.memory_space<vmem>>, vector<8x32xf32>
    tpu.vector_store %arg15[%c0_293, %c0_294], %560 {strides = array<i32>} : memref<8x32xf32, #tpu.memory_space<vmem>>, vector<8x32xf32>,
    %c0_295 = arith.constant 0 : index
    %c0_296 = arith.constant 0 : index
    %566 = vector.load %arg16[%c0_295, %c0_296] : memref<8x32xf32, #tpu.memory_space<vmem>>, vector<8x32xf32>
    tpu.vector_store %arg16[%c0_295, %c0_296], %564 {strides = array<i32>} : memref<8x32xf32, #tpu.memory_space<vmem>>, vector<8x32xf32>,
    %c12_297 = arith.constant 12 : index
    %c0_298 = arith.constant 0 : index
    %567 = vector.load %arg19[%c12_297, %c0_298] : memref<32x128xf32, #tpu.memory_space<vmem>>, vector<4x128xf32>
    %c16_299 = arith.constant 16 : index
    %c0_300 = arith.constant 0 : index
    %568 = vector.load %arg20[%c16_299, %c0_300] : memref<32x128xf32, #tpu.memory_space<vmem>>, vector<4x128xf32>
    %569 = tpu.concatenate %567, %568 in 0 : vector<4x128xf32>, vector<4x128xf32> -> vector<8x128xf32>
    %c0_301 = arith.constant 0 : index
    %c0_302 = arith.constant 0 : index
    %570 = vector.load %arg15[%c0_301, %c0_302] : memref<8x32xf32, #tpu.memory_space<vmem>>, vector<8x32xf32>
    %cst_303 = arith.constant 0.000000e+00 : f32
    %571 = vector.broadcast %cst_303 : f32 to vector<8x32xf32>
    %572 = arith.select %10, %570, %571 : vector<8x32xi1>, vector<8x32xf32>
    %cst_304 = arith.constant 0.000000e+00 : f32
    %573 = vector.broadcast %cst_304 : f32 to vector<8x32xf32>
    %574 = arith.select %10, %573, %570 : vector<8x32xi1>, vector<8x32xf32>
    %575 = tpu.concatenate %572, %574 in 1 : vector<8x32xf32>, vector<8x32xf32> -> vector<8x64xf32>
    %cst_305 = arith.constant dense<0.000000e+00> : vector<8x128xf32>
    %576 = tpu.matmul %575, %439, %cst_305 {dimension_numbers = #tpu.dot_dimension_numbers<[1], [0], [0], [1], [0, 0, 1, 1], [], []>} : vector<8x64xf32>, vector<64x128xf32>, vector<8x128xf32> -> vector<8x128xf32>
    %577 = arith.addf %569, %576 : vector<8x128xf32>
    %578 = math.tanh %577 : vector<8x128xf32>
    %579 = arith.negf %577 : vector<8x128xf32>
    %580 = math.exp %579 : vector<8x128xf32>
    %cst_306 = arith.constant 1.000000e+00 : f32
    %581 = vector.broadcast %cst_306 : f32 to vector<8x128xf32>
    %582 = arith.addf %581, %580 : vector<8x128xf32>
    %583 = arith.divf %581, %582 : vector<8x128xf32>
    %584 = arith.select %7, %578, %583 : vector<8x128xi1>, vector<8x128xf32>
    %585 = vector.extract_strided_slice %584 {offsets = [0, 0], sizes = [8, 32], strides = [1, 1]} : vector<8x128xf32> to vector<8x32xf32>
    %586 = vector.extract_strided_slice %584 {offsets = [0, 32], sizes = [8, 32], strides = [1, 1]} : vector<8x128xf32> to vector<8x32xf32>
    %587 = vector.extract_strided_slice %584 {offsets = [0, 64], sizes = [8, 32], strides = [1, 1]} : vector<8x128xf32> to vector<8x32xf32>
    %588 = vector.extract_strided_slice %584 {offsets = [0, 96], sizes = [8, 32], strides = [1, 1]} : vector<8x128xf32> to vector<8x32xf32>
    %c0_307 = arith.constant 0 : index
    %c0_308 = arith.constant 0 : index
    %589 = vector.load %arg16[%c0_307, %c0_308] : memref<8x32xf32, #tpu.memory_space<vmem>>, vector<8x32xf32>
    %590 = arith.mulf %586, %589 : vector<8x32xf32>
    %591 = arith.mulf %585, %587 : vector<8x32xf32>
    %592 = arith.addf %590, %591 : vector<8x32xf32>
    %593 = math.tanh %592 : vector<8x32xf32>
    %594 = arith.mulf %588, %593 : vector<8x32xf32>
    %c3_i32_309 = arith.constant 3 : i32
    %c4_i32_310 = arith.constant 4 : i32
    %595 = vector.broadcast %c3_i32_309 : i32 to vector<8x1xi32>
    %596 = vector.broadcast %c4_i32_310 : i32 to vector<8x1xi32>
    %597 = arith.select %13, %595, %596 : vector<8x1xi1>, vector<8x1xi32>
    %598 = arith.cmpi sgt, %1, %597 : vector<8x1xi32>
    %599 = vector.shape_cast %598 : vector<8x1xi1> to vector<8x1xi1>
    %600 = vector.broadcast %599 : vector<8x1xi1> to vector<8x32xi1>
    %601 = arith.select %600, %594, %570 : vector<8x32xi1>, vector<8x32xf32>
    %c0_311 = arith.constant 0 : index
    %c0_312 = arith.constant 0 : index
    %602 = vector.load %arg16[%c0_311, %c0_312] : memref<8x32xf32, #tpu.memory_space<vmem>>, vector<8x32xf32>
    %603 = vector.shape_cast %598 : vector<8x1xi1> to vector<8x1xi1>
    %604 = vector.broadcast %603 : vector<8x1xi1> to vector<8x32xi1>
    %605 = arith.select %604, %592, %602 : vector<8x32xi1>, vector<8x32xf32>
    %c0_313 = arith.constant 0 : index
    %c0_314 = arith.constant 0 : index
    %606 = vector.load %arg15[%c0_313, %c0_314] : memref<8x32xf32, #tpu.memory_space<vmem>>, vector<8x32xf32>
    tpu.vector_store %arg15[%c0_313, %c0_314], %601 {strides = array<i32>} : memref<8x32xf32, #tpu.memory_space<vmem>>, vector<8x32xf32>,
    %c0_315 = arith.constant 0 : index
    %c0_316 = arith.constant 0 : index
    %607 = vector.load %arg16[%c0_315, %c0_316] : memref<8x32xf32, #tpu.memory_space<vmem>>, vector<8x32xf32>
    tpu.vector_store %arg16[%c0_315, %c0_316], %605 {strides = array<i32>} : memref<8x32xf32, #tpu.memory_space<vmem>>, vector<8x32xf32>,
    %c16_317 = arith.constant 16 : index
    %c0_318 = arith.constant 0 : index
    %608 = vector.load %arg19[%c16_317, %c0_318] : memref<32x128xf32, #tpu.memory_space<vmem>>, vector<4x128xf32>
    %c12_319 = arith.constant 12 : index
    %c0_320 = arith.constant 0 : index
    %609 = vector.load %arg20[%c12_319, %c0_320] : memref<32x128xf32, #tpu.memory_space<vmem>>, vector<4x128xf32>
    %610 = tpu.concatenate %608, %609 in 0 : vector<4x128xf32>, vector<4x128xf32> -> vector<8x128xf32>
    %c0_321 = arith.constant 0 : index
    %c0_322 = arith.constant 0 : index
    %611 = vector.load %arg15[%c0_321, %c0_322] : memref<8x32xf32, #tpu.memory_space<vmem>>, vector<8x32xf32>
    %cst_323 = arith.constant 0.000000e+00 : f32
    %612 = vector.broadcast %cst_323 : f32 to vector<8x32xf32>
    %613 = arith.select %10, %611, %612 : vector<8x32xi1>, vector<8x32xf32>
    %cst_324 = arith.constant 0.000000e+00 : f32
    %614 = vector.broadcast %cst_324 : f32 to vector<8x32xf32>
    %615 = arith.select %10, %614, %611 : vector<8x32xi1>, vector<8x32xf32>
    %616 = tpu.concatenate %613, %615 in 1 : vector<8x32xf32>, vector<8x32xf32> -> vector<8x64xf32>
    %cst_325 = arith.constant dense<0.000000e+00> : vector<8x128xf32>
    %617 = tpu.matmul %616, %439, %cst_325 {dimension_numbers = #tpu.dot_dimension_numbers<[1], [0], [0], [1], [0, 0, 1, 1], [], []>} : vector<8x64xf32>, vector<64x128xf32>, vector<8x128xf32> -> vector<8x128xf32>
    %618 = arith.addf %610, %617 : vector<8x128xf32>
    %619 = math.tanh %618 : vector<8x128xf32>
    %620 = arith.negf %618 : vector<8x128xf32>
    %621 = math.exp %620 : vector<8x128xf32>
    %cst_326 = arith.constant 1.000000e+00 : f32
    %622 = vector.broadcast %cst_326 : f32 to vector<8x128xf32>
    %623 = arith.addf %622, %621 : vector<8x128xf32>
    %624 = arith.divf %622, %623 : vector<8x128xf32>
    %625 = arith.select %7, %619, %624 : vector<8x128xi1>, vector<8x128xf32>
    %626 = vector.extract_strided_slice %625 {offsets = [0, 0], sizes = [8, 32], strides = [1, 1]} : vector<8x128xf32> to vector<8x32xf32>
    %627 = vector.extract_strided_slice %625 {offsets = [0, 32], sizes = [8, 32], strides = [1, 1]} : vector<8x128xf32> to vector<8x32xf32>
    %628 = vector.extract_strided_slice %625 {offsets = [0, 64], sizes = [8, 32], strides = [1, 1]} : vector<8x128xf32> to vector<8x32xf32>
    %629 = vector.extract_strided_slice %625 {offsets = [0, 96], sizes = [8, 32], strides = [1, 1]} : vector<8x128xf32> to vector<8x32xf32>
    %c0_327 = arith.constant 0 : index
    %c0_328 = arith.constant 0 : index
    %630 = vector.load %arg16[%c0_327, %c0_328] : memref<8x32xf32, #tpu.memory_space<vmem>>, vector<8x32xf32>
    %631 = arith.mulf %627, %630 : vector<8x32xf32>
    %632 = arith.mulf %626, %628 : vector<8x32xf32>
    %633 = arith.addf %631, %632 : vector<8x32xf32>
    %634 = math.tanh %633 : vector<8x32xf32>
    %635 = arith.mulf %629, %634 : vector<8x32xf32>
    %c4_i32_329 = arith.constant 4 : i32
    %c3_i32_330 = arith.constant 3 : i32
    %636 = vector.broadcast %c4_i32_329 : i32 to vector<8x1xi32>
    %637 = vector.broadcast %c3_i32_330 : i32 to vector<8x1xi32>
    %638 = arith.select %13, %636, %637 : vector<8x1xi1>, vector<8x1xi32>
    %639 = arith.cmpi sgt, %1, %638 : vector<8x1xi32>
    %640 = vector.shape_cast %639 : vector<8x1xi1> to vector<8x1xi1>
    %641 = vector.broadcast %640 : vector<8x1xi1> to vector<8x32xi1>
    %642 = arith.select %641, %635, %611 : vector<8x32xi1>, vector<8x32xf32>
    %c0_331 = arith.constant 0 : index
    %c0_332 = arith.constant 0 : index
    %643 = vector.load %arg16[%c0_331, %c0_332] : memref<8x32xf32, #tpu.memory_space<vmem>>, vector<8x32xf32>
    %644 = vector.shape_cast %639 : vector<8x1xi1> to vector<8x1xi1>
    %645 = vector.broadcast %644 : vector<8x1xi1> to vector<8x32xi1>
    %646 = arith.select %645, %633, %643 : vector<8x32xi1>, vector<8x32xf32>
    %c0_333 = arith.constant 0 : index
    %c0_334 = arith.constant 0 : index
    %647 = vector.load %arg15[%c0_333, %c0_334] : memref<8x32xf32, #tpu.memory_space<vmem>>, vector<8x32xf32>
    tpu.vector_store %arg15[%c0_333, %c0_334], %642 {strides = array<i32>} : memref<8x32xf32, #tpu.memory_space<vmem>>, vector<8x32xf32>,
    %c0_335 = arith.constant 0 : index
    %c0_336 = arith.constant 0 : index
    %648 = vector.load %arg16[%c0_335, %c0_336] : memref<8x32xf32, #tpu.memory_space<vmem>>, vector<8x32xf32>
    tpu.vector_store %arg16[%c0_335, %c0_336], %646 {strides = array<i32>} : memref<8x32xf32, #tpu.memory_space<vmem>>, vector<8x32xf32>,
    %c20_337 = arith.constant 20 : index
    %c0_338 = arith.constant 0 : index
    %649 = vector.load %arg19[%c20_337, %c0_338] : memref<32x128xf32, #tpu.memory_space<vmem>>, vector<4x128xf32>
    %c8_339 = arith.constant 8 : index
    %c0_340 = arith.constant 0 : index
    %650 = vector.load %arg20[%c8_339, %c0_340] : memref<32x128xf32, #tpu.memory_space<vmem>>, vector<4x128xf32>
    %651 = tpu.concatenate %649, %650 in 0 : vector<4x128xf32>, vector<4x128xf32> -> vector<8x128xf32>
    %c0_341 = arith.constant 0 : index
    %c0_342 = arith.constant 0 : index
    %652 = vector.load %arg15[%c0_341, %c0_342] : memref<8x32xf32, #tpu.memory_space<vmem>>, vector<8x32xf32>
    %cst_343 = arith.constant 0.000000e+00 : f32
    %653 = vector.broadcast %cst_343 : f32 to vector<8x32xf32>
    %654 = arith.select %10, %652, %653 : vector<8x32xi1>, vector<8x32xf32>
    %cst_344 = arith.constant 0.000000e+00 : f32
    %655 = vector.broadcast %cst_344 : f32 to vector<8x32xf32>
    %656 = arith.select %10, %655, %652 : vector<8x32xi1>, vector<8x32xf32>
    %657 = tpu.concatenate %654, %656 in 1 : vector<8x32xf32>, vector<8x32xf32> -> vector<8x64xf32>
    %cst_345 = arith.constant dense<0.000000e+00> : vector<8x128xf32>
    %658 = tpu.matmul %657, %439, %cst_345 {dimension_numbers = #tpu.dot_dimension_numbers<[1], [0], [0], [1], [0, 0, 1, 1], [], []>} : vector<8x64xf32>, vector<64x128xf32>, vector<8x128xf32> -> vector<8x128xf32>
    %659 = arith.addf %651, %658 : vector<8x128xf32>
    %660 = math.tanh %659 : vector<8x128xf32>
    %661 = arith.negf %659 : vector<8x128xf32>
    %662 = math.exp %661 : vector<8x128xf32>
    %cst_346 = arith.constant 1.000000e+00 : f32
    %663 = vector.broadcast %cst_346 : f32 to vector<8x128xf32>
    %664 = arith.addf %663, %662 : vector<8x128xf32>
    %665 = arith.divf %663, %664 : vector<8x128xf32>
    %666 = arith.select %7, %660, %665 : vector<8x128xi1>, vector<8x128xf32>
    %667 = vector.extract_strided_slice %666 {offsets = [0, 0], sizes = [8, 32], strides = [1, 1]} : vector<8x128xf32> to vector<8x32xf32>
    %668 = vector.extract_strided_slice %666 {offsets = [0, 32], sizes = [8, 32], strides = [1, 1]} : vector<8x128xf32> to vector<8x32xf32>
    %669 = vector.extract_strided_slice %666 {offsets = [0, 64], sizes = [8, 32], strides = [1, 1]} : vector<8x128xf32> to vector<8x32xf32>
    %670 = vector.extract_strided_slice %666 {offsets = [0, 96], sizes = [8, 32], strides = [1, 1]} : vector<8x128xf32> to vector<8x32xf32>
    %c0_347 = arith.constant 0 : index
    %c0_348 = arith.constant 0 : index
    %671 = vector.load %arg16[%c0_347, %c0_348] : memref<8x32xf32, #tpu.memory_space<vmem>>, vector<8x32xf32>
    %672 = arith.mulf %668, %671 : vector<8x32xf32>
    %673 = arith.mulf %667, %669 : vector<8x32xf32>
    %674 = arith.addf %672, %673 : vector<8x32xf32>
    %675 = math.tanh %674 : vector<8x32xf32>
    %676 = arith.mulf %670, %675 : vector<8x32xf32>
    %c5_i32_349 = arith.constant 5 : i32
    %c2_i32_350 = arith.constant 2 : i32
    %677 = vector.broadcast %c5_i32_349 : i32 to vector<8x1xi32>
    %678 = vector.broadcast %c2_i32_350 : i32 to vector<8x1xi32>
    %679 = arith.select %13, %677, %678 : vector<8x1xi1>, vector<8x1xi32>
    %680 = arith.cmpi sgt, %1, %679 : vector<8x1xi32>
    %681 = vector.shape_cast %680 : vector<8x1xi1> to vector<8x1xi1>
    %682 = vector.broadcast %681 : vector<8x1xi1> to vector<8x32xi1>
    %683 = arith.select %682, %676, %652 : vector<8x32xi1>, vector<8x32xf32>
    %c0_351 = arith.constant 0 : index
    %c0_352 = arith.constant 0 : index
    %684 = vector.load %arg16[%c0_351, %c0_352] : memref<8x32xf32, #tpu.memory_space<vmem>>, vector<8x32xf32>
    %685 = vector.shape_cast %680 : vector<8x1xi1> to vector<8x1xi1>
    %686 = vector.broadcast %685 : vector<8x1xi1> to vector<8x32xi1>
    %687 = arith.select %686, %674, %684 : vector<8x32xi1>, vector<8x32xf32>
    %c0_353 = arith.constant 0 : index
    %c0_354 = arith.constant 0 : index
    %688 = vector.load %arg15[%c0_353, %c0_354] : memref<8x32xf32, #tpu.memory_space<vmem>>, vector<8x32xf32>
    tpu.vector_store %arg15[%c0_353, %c0_354], %683 {strides = array<i32>} : memref<8x32xf32, #tpu.memory_space<vmem>>, vector<8x32xf32>,
    %c0_355 = arith.constant 0 : index
    %c0_356 = arith.constant 0 : index
    %689 = vector.load %arg16[%c0_355, %c0_356] : memref<8x32xf32, #tpu.memory_space<vmem>>, vector<8x32xf32>
    tpu.vector_store %arg16[%c0_355, %c0_356], %687 {strides = array<i32>} : memref<8x32xf32, #tpu.memory_space<vmem>>, vector<8x32xf32>,
    %c24_357 = arith.constant 24 : index
    %c0_358 = arith.constant 0 : index
    %690 = vector.load %arg19[%c24_357, %c0_358] : memref<32x128xf32, #tpu.memory_space<vmem>>, vector<4x128xf32>
    %c4_359 = arith.constant 4 : index
    %c0_360 = arith.constant 0 : index
    %691 = vector.load %arg20[%c4_359, %c0_360] : memref<32x128xf32, #tpu.memory_space<vmem>>, vector<4x128xf32>
    %692 = tpu.concatenate %690, %691 in 0 : vector<4x128xf32>, vector<4x128xf32> -> vector<8x128xf32>
    %c0_361 = arith.constant 0 : index
    %c0_362 = arith.constant 0 : index
    %693 = vector.load %arg15[%c0_361, %c0_362] : memref<8x32xf32, #tpu.memory_space<vmem>>, vector<8x32xf32>
    %cst_363 = arith.constant 0.000000e+00 : f32
    %694 = vector.broadcast %cst_363 : f32 to vector<8x32xf32>
    %695 = arith.select %10, %693, %694 : vector<8x32xi1>, vector<8x32xf32>
    %cst_364 = arith.constant 0.000000e+00 : f32
    %696 = vector.broadcast %cst_364 : f32 to vector<8x32xf32>
    %697 = arith.select %10, %696, %693 : vector<8x32xi1>, vector<8x32xf32>
    %698 = tpu.concatenate %695, %697 in 1 : vector<8x32xf32>, vector<8x32xf32> -> vector<8x64xf32>
    %cst_365 = arith.constant dense<0.000000e+00> : vector<8x128xf32>
    %699 = tpu.matmul %698, %439, %cst_365 {dimension_numbers = #tpu.dot_dimension_numbers<[1], [0], [0], [1], [0, 0, 1, 1], [], []>} : vector<8x64xf32>, vector<64x128xf32>, vector<8x128xf32> -> vector<8x128xf32>
    %700 = arith.addf %692, %699 : vector<8x128xf32>
    %701 = math.tanh %700 : vector<8x128xf32>
    %702 = arith.negf %700 : vector<8x128xf32>
    %703 = math.exp %702 : vector<8x128xf32>
    %cst_366 = arith.constant 1.000000e+00 : f32
    %704 = vector.broadcast %cst_366 : f32 to vector<8x128xf32>
    %705 = arith.addf %704, %703 : vector<8x128xf32>
    %706 = arith.divf %704, %705 : vector<8x128xf32>
    %707 = arith.select %7, %701, %706 : vector<8x128xi1>, vector<8x128xf32>
    %708 = vector.extract_strided_slice %707 {offsets = [0, 0], sizes = [8, 32], strides = [1, 1]} : vector<8x128xf32> to vector<8x32xf32>
    %709 = vector.extract_strided_slice %707 {offsets = [0, 32], sizes = [8, 32], strides = [1, 1]} : vector<8x128xf32> to vector<8x32xf32>
    %710 = vector.extract_strided_slice %707 {offsets = [0, 64], sizes = [8, 32], strides = [1, 1]} : vector<8x128xf32> to vector<8x32xf32>
    %711 = vector.extract_strided_slice %707 {offsets = [0, 96], sizes = [8, 32], strides = [1, 1]} : vector<8x128xf32> to vector<8x32xf32>
    %c0_367 = arith.constant 0 : index
    %c0_368 = arith.constant 0 : index
    %712 = vector.load %arg16[%c0_367, %c0_368] : memref<8x32xf32, #tpu.memory_space<vmem>>, vector<8x32xf32>
    %713 = arith.mulf %709, %712 : vector<8x32xf32>
    %714 = arith.mulf %708, %710 : vector<8x32xf32>
    %715 = arith.addf %713, %714 : vector<8x32xf32>
    %716 = math.tanh %715 : vector<8x32xf32>
    %717 = arith.mulf %711, %716 : vector<8x32xf32>
    %c6_i32_369 = arith.constant 6 : i32
    %c1_i32_370 = arith.constant 1 : i32
    %718 = vector.broadcast %c6_i32_369 : i32 to vector<8x1xi32>
    %719 = vector.broadcast %c1_i32_370 : i32 to vector<8x1xi32>
    %720 = arith.select %13, %718, %719 : vector<8x1xi1>, vector<8x1xi32>
    %721 = arith.cmpi sgt, %1, %720 : vector<8x1xi32>
    %722 = vector.shape_cast %721 : vector<8x1xi1> to vector<8x1xi1>
    %723 = vector.broadcast %722 : vector<8x1xi1> to vector<8x32xi1>
    %724 = arith.select %723, %717, %693 : vector<8x32xi1>, vector<8x32xf32>
    %c0_371 = arith.constant 0 : index
    %c0_372 = arith.constant 0 : index
    %725 = vector.load %arg16[%c0_371, %c0_372] : memref<8x32xf32, #tpu.memory_space<vmem>>, vector<8x32xf32>
    %726 = vector.shape_cast %721 : vector<8x1xi1> to vector<8x1xi1>
    %727 = vector.broadcast %726 : vector<8x1xi1> to vector<8x32xi1>
    %728 = arith.select %727, %715, %725 : vector<8x32xi1>, vector<8x32xf32>
    %c0_373 = arith.constant 0 : index
    %c0_374 = arith.constant 0 : index
    %729 = vector.load %arg15[%c0_373, %c0_374] : memref<8x32xf32, #tpu.memory_space<vmem>>, vector<8x32xf32>
    tpu.vector_store %arg15[%c0_373, %c0_374], %724 {strides = array<i32>} : memref<8x32xf32, #tpu.memory_space<vmem>>, vector<8x32xf32>,
    %c0_375 = arith.constant 0 : index
    %c0_376 = arith.constant 0 : index
    %730 = vector.load %arg16[%c0_375, %c0_376] : memref<8x32xf32, #tpu.memory_space<vmem>>, vector<8x32xf32>
    tpu.vector_store %arg16[%c0_375, %c0_376], %728 {strides = array<i32>} : memref<8x32xf32, #tpu.memory_space<vmem>>, vector<8x32xf32>,
    %c28_377 = arith.constant 28 : index
    %c0_378 = arith.constant 0 : index
    %731 = vector.load %arg19[%c28_377, %c0_378] : memref<32x128xf32, #tpu.memory_space<vmem>>, vector<4x128xf32>
    %c0_379 = arith.constant 0 : index
    %c0_380 = arith.constant 0 : index
    %732 = vector.load %arg20[%c0_379, %c0_380] : memref<32x128xf32, #tpu.memory_space<vmem>>, vector<4x128xf32>
    %733 = tpu.concatenate %731, %732 in 0 : vector<4x128xf32>, vector<4x128xf32> -> vector<8x128xf32>
    %c0_381 = arith.constant 0 : index
    %c0_382 = arith.constant 0 : index
    %734 = vector.load %arg15[%c0_381, %c0_382] : memref<8x32xf32, #tpu.memory_space<vmem>>, vector<8x32xf32>
    %cst_383 = arith.constant 0.000000e+00 : f32
    %735 = vector.broadcast %cst_383 : f32 to vector<8x32xf32>
    %736 = arith.select %10, %734, %735 : vector<8x32xi1>, vector<8x32xf32>
    %cst_384 = arith.constant 0.000000e+00 : f32
    %737 = vector.broadcast %cst_384 : f32 to vector<8x32xf32>
    %738 = arith.select %10, %737, %734 : vector<8x32xi1>, vector<8x32xf32>
    %739 = tpu.concatenate %736, %738 in 1 : vector<8x32xf32>, vector<8x32xf32> -> vector<8x64xf32>
    %cst_385 = arith.constant dense<0.000000e+00> : vector<8x128xf32>
    %740 = tpu.matmul %739, %439, %cst_385 {dimension_numbers = #tpu.dot_dimension_numbers<[1], [0], [0], [1], [0, 0, 1, 1], [], []>} : vector<8x64xf32>, vector<64x128xf32>, vector<8x128xf32> -> vector<8x128xf32>
    %741 = arith.addf %733, %740 : vector<8x128xf32>
    %742 = math.tanh %741 : vector<8x128xf32>
    %743 = arith.negf %741 : vector<8x128xf32>
    %744 = math.exp %743 : vector<8x128xf32>
    %cst_386 = arith.constant 1.000000e+00 : f32
    %745 = vector.broadcast %cst_386 : f32 to vector<8x128xf32>
    %746 = arith.addf %745, %744 : vector<8x128xf32>
    %747 = arith.divf %745, %746 : vector<8x128xf32>
    %748 = arith.select %7, %742, %747 : vector<8x128xi1>, vector<8x128xf32>
    %749 = vector.extract_strided_slice %748 {offsets = [0, 0], sizes = [8, 32], strides = [1, 1]} : vector<8x128xf32> to vector<8x32xf32>
    %750 = vector.extract_strided_slice %748 {offsets = [0, 32], sizes = [8, 32], strides = [1, 1]} : vector<8x128xf32> to vector<8x32xf32>
    %751 = vector.extract_strided_slice %748 {offsets = [0, 64], sizes = [8, 32], strides = [1, 1]} : vector<8x128xf32> to vector<8x32xf32>
    %752 = vector.extract_strided_slice %748 {offsets = [0, 96], sizes = [8, 32], strides = [1, 1]} : vector<8x128xf32> to vector<8x32xf32>
    %c0_387 = arith.constant 0 : index
    %c0_388 = arith.constant 0 : index
    %753 = vector.load %arg16[%c0_387, %c0_388] : memref<8x32xf32, #tpu.memory_space<vmem>>, vector<8x32xf32>
    %754 = arith.mulf %750, %753 : vector<8x32xf32>
    %755 = arith.mulf %749, %751 : vector<8x32xf32>
    %756 = arith.addf %754, %755 : vector<8x32xf32>
    %757 = math.tanh %756 : vector<8x32xf32>
    %758 = arith.mulf %752, %757 : vector<8x32xf32>
    %c7_i32_389 = arith.constant 7 : i32
    %c0_i32_390 = arith.constant 0 : i32
    %759 = vector.broadcast %c7_i32_389 : i32 to vector<8x1xi32>
    %760 = vector.broadcast %c0_i32_390 : i32 to vector<8x1xi32>
    %761 = arith.select %13, %759, %760 : vector<8x1xi1>, vector<8x1xi32>
    %762 = arith.cmpi sgt, %1, %761 : vector<8x1xi32>
    %763 = vector.shape_cast %762 : vector<8x1xi1> to vector<8x1xi1>
    %764 = vector.broadcast %763 : vector<8x1xi1> to vector<8x32xi1>
    %765 = arith.select %764, %758, %734 : vector<8x32xi1>, vector<8x32xf32>
    %c0_391 = arith.constant 0 : index
    %c0_392 = arith.constant 0 : index
    %766 = vector.load %arg16[%c0_391, %c0_392] : memref<8x32xf32, #tpu.memory_space<vmem>>, vector<8x32xf32>
    %767 = vector.shape_cast %762 : vector<8x1xi1> to vector<8x1xi1>
    %768 = vector.broadcast %767 : vector<8x1xi1> to vector<8x32xi1>
    %769 = arith.select %768, %756, %766 : vector<8x32xi1>, vector<8x32xf32>
    %c0_393 = arith.constant 0 : index
    %c0_394 = arith.constant 0 : index
    %770 = vector.load %arg15[%c0_393, %c0_394] : memref<8x32xf32, #tpu.memory_space<vmem>>, vector<8x32xf32>
    tpu.vector_store %arg15[%c0_393, %c0_394], %765 {strides = array<i32>} : memref<8x32xf32, #tpu.memory_space<vmem>>, vector<8x32xf32>,
    %c0_395 = arith.constant 0 : index
    %c0_396 = arith.constant 0 : index
    %771 = vector.load %arg16[%c0_395, %c0_396] : memref<8x32xf32, #tpu.memory_space<vmem>>, vector<8x32xf32>
    tpu.vector_store %arg16[%c0_395, %c0_396], %769 {strides = array<i32>} : memref<8x32xf32, #tpu.memory_space<vmem>>, vector<8x32xf32>,
    %c0_397 = arith.constant 0 : index
    %c0_398 = arith.constant 0 : index
    %772 = vector.load %arg15[%c0_397, %c0_398] : memref<8x32xf32, #tpu.memory_space<vmem>>, vector<8x32xf32>
    %773 = vector.extract_strided_slice %772 {offsets = [0, 0], sizes = [4, 32], strides = [1, 1]} : vector<8x32xf32> to vector<4x32xf32>
    %774 = vector.extract_strided_slice %772 {offsets = [4, 0], sizes = [4, 32], strides = [1, 1]} : vector<8x32xf32> to vector<4x32xf32>
    %775 = tpu.concatenate %773, %774 in 1 : vector<4x32xf32>, vector<4x32xf32> -> vector<4x64xf32>
    %c0_399 = arith.constant 0 : index
    %c0_400 = arith.constant 0 : index
    %776 = vector.load %arg12[%c0_399, %c0_400] : memref<64x2xf32, #tpu.memory_space<vmem>>, vector<64x2xf32>
    %cst_401 = arith.constant dense<0.000000e+00> : vector<4x2xf32>
    %777 = tpu.matmul %775, %776, %cst_401 {dimension_numbers = #tpu.dot_dimension_numbers<[1], [0], [0], [1], [0, 0, 1, 1], [], []>} : vector<4x64xf32>, vector<64x2xf32>, vector<4x2xf32> -> vector<4x2xf32>
    %c0_402 = arith.constant 0 : index
    %c0_403 = arith.constant 0 : index
    %778 = vector.load %arg13[%c0_402, %c0_403] : memref<1x2xf32, #tpu.memory_space<vmem>>, vector<1x2xf32>
    %779 = vector.broadcast %778 : vector<1x2xf32> to vector<4x2xf32>
    %780 = arith.addf %777, %779 : vector<4x2xf32>
    %c0_404 = arith.constant 0 : index
    %c0_405 = arith.constant 0 : index
    %781 = vector.load %arg14[%c0_404, %c0_405] : memref<4x2xf32, #tpu.memory_space<vmem>>, vector<4x2xf32>
    tpu.vector_store %arg14[%c0_404, %c0_405], %780 {strides = array<i32>} : memref<4x2xf32, #tpu.memory_space<vmem>>, vector<4x2xf32>,
    return
  }
}

</mosaic_0001>

<llo_original>
// kernel: tpu_custom_call.1
$region0: #{tpu_custom_call.1}
  #allocation0 [shape = 'u32[]', space=smem, size = 0x4, offset = 0x4, fixed_abs, tag = 'smem constant byte address 0x4 - core index']
  #allocation1 [shape = 'u32[144,128]{1,0:T(1,128)}', space=vmem, size = 0x12000, scoped, tag = 'internal scratch']
  #allocation2 [shape = 'f32[8,32]{1,0:T(8,128)}', space=vmem, size = 0x1000, scoped, tag = 'scratch operand']
  #allocation3 [shape = 'f32[8,32]{1,0:T(8,128)}', space=vmem, size = 0x1000, scoped, tag = 'scratch operand']
  #allocation4 [shape = 'f32[32,32]{1,0:T(8,128)}', space=vmem, size = 0x4000, scoped, tag = 'scratch operand']
  #allocation5 [shape = 'f32[32,32]{1,0:T(8,128)}', space=vmem, size = 0x4000, scoped, tag = 'scratch operand']
  #allocation6 [shape = 'f32[32,128]{1,0:T(8,128)}', space=vmem, size = 0x4000, scoped, tag = 'scratch operand']
  #allocation7 [shape = 'f32[32,128]{1,0:T(8,128)}', space=vmem, size = 0x4000, scoped, tag = 'scratch operand']
  %s0 = inlined_call_operand.vmem [shape: s32[4,1], index: 0, kind: input, shape index: {}]
  %s1 = inlined_call_operand.vmem [shape: f32[32,16], index: 1, kind: input, shape index: {}]
  %s2 = inlined_call_operand.hbm [shape: f32[16,128], index: 2, kind: input, shape index: {}]
  %s3 = inlined_call_operand.hbm [shape: f32[16,128], index: 3, kind: input, shape index: {}]
  %s4 = inlined_call_operand.vmem [shape: f32[1,128], index: 4, kind: input, shape index: {}]
  %s5 = inlined_call_operand.vmem [shape: f32[1,128], index: 5, kind: input, shape index: {}]
  %s6 = inlined_call_operand.vmem [shape: f32[64,128], index: 6, kind: input, shape index: {}]
  %s7 = inlined_call_operand.vmem [shape: f32[64,128], index: 7, kind: input, shape index: {}]
  %s8 = inlined_call_operand.hbm [shape: f32[64,128], index: 8, kind: input, shape index: {}]
  %s9 = inlined_call_operand.vmem [shape: f32[1,128], index: 9, kind: input, shape index: {}]
  %s10 = inlined_call_operand.vmem [shape: f32[1,128], index: 10, kind: input, shape index: {}]
  %s11 = inlined_call_operand.hbm [shape: f32[64,128], index: 11, kind: input, shape index: {}]
  %s12 = inlined_call_operand.vmem [shape: f32[64,2], index: 12, kind: input, shape index: {}]
  %s13 = inlined_call_operand.vmem [shape: f32[1,2], index: 13, kind: input, shape index: {}]
  %s14 = inlined_call_operand.vmem [shape: f32[4,2], index: 14, kind: output, shape index: {}]
  %s15 = sld [smem:[#allocation0]]
  $region82: #{tpu_custom_call.1} parent=0
    _
  %s17 = ssub.s32 1, %s15
  %s18 = scalar_select 0, %s17, %s15
  $region1: #{tpu_custom_call.1} parent=0
    #allocation8 [shape = 'u8[8192]{0}', space=vmem, size = 0x2000, scoped, tag = 'input window, operand 2, single buffered']
    #allocation9 [shape = 's32[1]{0}', space=sflag, size = 0x4, scoped, tag = 'scoped memory for tpu_custom_call.1']
    #allocation10 [shape = 'u8[8192]{0}', space=vmem, size = 0x2000, scoped, tag = 'input window, operand 3, single buffered']
    #allocation11 [shape = 's32[1]{0}', space=sflag, size = 0x4, scoped, tag = 'scoped memory for tpu_custom_call.1']
    #allocation12 [shape = 'u8[32768]{0}', space=vmem, size = 0x8000, scoped, tag = 'input window, operand 8, single buffered']
    #allocation13 [shape = 'u8[32768]{0}', space=vmem, size = 0x8000, scoped, tag = 'input window, operand 11, single buffered']
    #allocation14 [shape = 's32[1]{0}', space=sflag, size = 0x4, scoped, tag = 'scoped memory for tpu_custom_call.1']
    %19 = vsyncpa [#allocation9], 0
    %20 = vsyncpa [#allocation11], 0
    %21 = vsyncpa [#allocation14], 0
    // Predicated region
    $region2: #{tpu_custom_call.1} parent=1 // pred_check
      _
    $region3: #{tpu_custom_call.1} parent=1 // pred_check_branch
      %23 = sbr.rel (0) target = $region5
    $region4: #{tpu_custom_call.1} parent=1 // pred_region
      _
    $region5: #{tpu_custom_call.1} parent=1 // pred_fallthru
      _
    // Predicated region
    $region6: #{tpu_custom_call.1} parent=1 // pred_check
      _
    $region7: #{tpu_custom_call.1} parent=1 // pred_check_branch
      %25 = sbr.rel (0) target = $region9
    $region8: #{tpu_custom_call.1} parent=1 // pred_region
      _
    $region9: #{tpu_custom_call.1} parent=1 // pred_fallthru
      _
    // Predicated region
    $region10: #{tpu_custom_call.1} parent=1 // pred_check
      _
    $region11: #{tpu_custom_call.1} parent=1 // pred_check_branch
      %27 = sbr.rel (0) target = $region13
    $region12: #{tpu_custom_call.1} parent=1 // pred_region
      %s29 = ssub.s32 256, 256
      %30 = vsyncadd [#allocation9], %s29
      %s31 = sshll.u32 [#allocation8], 4
      %s32 = int_to_ptr.vmem [resolvable:$true] %s31
      %37 = dma.hbm_to_vmem [thread:$0]  %s2, 256, %s32, [#allocation9], 128, 128, 8
    $region13: #{tpu_custom_call.1} parent=1 // pred_fallthru
      _
    // Predicated region
    $region14: #{tpu_custom_call.1} parent=1 // pred_check
      _
    $region15: #{tpu_custom_call.1} parent=1 // pred_check_branch
      %39 = sbr.rel (0) target = $region17
    $region16: #{tpu_custom_call.1} parent=1 // pred_region
      %s41 = ssub.s32 256, 256
      %42 = vsyncadd [#allocation11], %s41
      %s43 = sshll.u32 [#allocation10], 4
      %s44 = int_to_ptr.vmem [resolvable:$true] %s43
      %49 = dma.hbm_to_vmem [thread:$0]  %s3, 256, %s44, [#allocation11], 128, 128, 8
    $region17: #{tpu_custom_call.1} parent=1 // pred_fallthru
      _
    // Predicated region
    $region18: #{tpu_custom_call.1} parent=1 // pred_check
      _
    $region19: #{tpu_custom_call.1} parent=1 // pred_check_branch
      %51 = sbr.rel (0) target = $region21
    $region20: #{tpu_custom_call.1} parent=1 // pred_region
      _
    $region21: #{tpu_custom_call.1} parent=1 // pred_fallthru
      _
    // Predicated region
    $region22: #{tpu_custom_call.1} parent=1 // pred_check
      _
    $region23: #{tpu_custom_call.1} parent=1 // pred_check_branch
      %53 = sbr.rel (0) target = $region25
    $region24: #{tpu_custom_call.1} parent=1 // pred_region
      _
    $region25: #{tpu_custom_call.1} parent=1 // pred_fallthru
      _
    // Predicated region
    $region26: #{tpu_custom_call.1} parent=1 // pred_check
      _
    $region27: #{tpu_custom_call.1} parent=1 // pred_check_branch
      %55 = sbr.rel (0) target = $region29
    $region28: #{tpu_custom_call.1} parent=1 // pred_region
      _
    $region29: #{tpu_custom_call.1} parent=1 // pred_fallthru
      _
    // Predicated region
    $region30: #{tpu_custom_call.1} parent=1 // pred_check
      _
    $region31: #{tpu_custom_call.1} parent=1 // pred_check_branch
      %57 = sbr.rel (0) target = $region33
    $region32: #{tpu_custom_call.1} parent=1 // pred_region
      _
    $region33: #{tpu_custom_call.1} parent=1 // pred_fallthru
      _
    // Predicated region
    $region34: #{tpu_custom_call.1} parent=1 // pred_check
      _
    $region35: #{tpu_custom_call.1} parent=1 // pred_check_branch
      %59 = sbr.rel (0) target = $region37
    $region36: #{tpu_custom_call.1} parent=1 // pred_region
      %s61 = ssub.s32 1024, 1024
      %62 = vsyncadd [#allocation11], %s61
      %s63 = sshll.u32 [#allocation12], 4
      %s64 = int_to_ptr.vmem [resolvable:$true] %s63
      %69 = dma.hbm_to_vmem [thread:$0]  %s8, 1024, %s64, [#allocation11], 128, 128, 8
    $region37: #{tpu_custom_call.1} parent=1 // pred_fallthru
      _
    // Predicated region
    $region38: #{tpu_custom_call.1} parent=1 // pred_check
      _
    $region39: #{tpu_custom_call.1} parent=1 // pred_check_branch
      %71 = sbr.rel (0) target = $region41
    $region40: #{tpu_custom_call.1} parent=1 // pred_region
      _
    $region41: #{tpu_custom_call.1} parent=1 // pred_fallthru
      _
    // Predicated region
    $region42: #{tpu_custom_call.1} parent=1 // pred_check
      _
    $region43: #{tpu_custom_call.1} parent=1 // pred_check_branch
      %73 = sbr.rel (0) target = $region45
    $region44: #{tpu_custom_call.1} parent=1 // pred_region
      _
    $region45: #{tpu_custom_call.1} parent=1 // pred_fallthru
      _
    // Predicated region
    $region46: #{tpu_custom_call.1} parent=1 // pred_check
      _
    $region47: #{tpu_custom_call.1} parent=1 // pred_check_branch
      %75 = sbr.rel (0) target = $region49
    $region48: #{tpu_custom_call.1} parent=1 // pred_region
      %s77 = ssub.s32 1024, 1024
      %78 = vsyncadd [#allocation14], %s77
      %s79 = sshll.u32 [#allocation13], 4
      %s80 = int_to_ptr.vmem [resolvable:$true] %s79
      %85 = dma.hbm_to_vmem [thread:$0]  %s11, 1024, %s80, [#allocation14], 128, 128, 8
    $region49: #{tpu_custom_call.1} parent=1 // pred_fallthru
      _
    // Predicated region
    $region50: #{tpu_custom_call.1} parent=1 // pred_check
      _
    $region51: #{tpu_custom_call.1} parent=1 // pred_check_branch
      %87 = sbr.rel (0) target = $region53
    $region52: #{tpu_custom_call.1} parent=1 // pred_region
      _
    $region53: #{tpu_custom_call.1} parent=1 // pred_fallthru
      _
    // Predicated region
    $region54: #{tpu_custom_call.1} parent=1 // pred_check
      _
    $region55: #{tpu_custom_call.1} parent=1 // pred_check_branch
      %89 = sbr.rel (0) target = $region57
    $region56: #{tpu_custom_call.1} parent=1 // pred_region
      _
    $region57: #{tpu_custom_call.1} parent=1 // pred_fallthru
      _
    // Predicated region
    $region58: #{tpu_custom_call.1} parent=1 // pred_check
      _
    $region59: #{tpu_custom_call.1} parent=1 // pred_check_branch
      %91 = sbr.rel (0) target = $region61
    $region60: #{tpu_custom_call.1} parent=1 // pred_region
      %92 = dma.done [#allocation9], 256
    $region61: #{tpu_custom_call.1} parent=1 // pred_fallthru
      _
    // Predicated region
    $region62: #{tpu_custom_call.1} parent=1 // pred_check
      _
    $region63: #{tpu_custom_call.1} parent=1 // pred_check_branch
      %94 = sbr.rel (0) target = $region65
    $region64: #{tpu_custom_call.1} parent=1 // pred_region
      %95 = dma.done [#allocation11], 256
    $region65: #{tpu_custom_call.1} parent=1 // pred_fallthru
      _
    // Predicated region
    $region66: #{tpu_custom_call.1} parent=1 // pred_check
      _
    $region67: #{tpu_custom_call.1} parent=1 // pred_check_branch
      %97 = sbr.rel (0) target = $region69
    $region68: #{tpu_custom_call.1} parent=1 // pred_region
      %98 = dma.done [#allocation11], 1024
    $region69: #{tpu_custom_call.1} parent=1 // pred_fallthru
      _
    // Predicated region
    $region70: #{tpu_custom_call.1} parent=1 // pred_check
      _
    $region71: #{tpu_custom_call.1} parent=1 // pred_check_branch
      %100 = sbr.rel (0) target = $region73
    $region72: #{tpu_custom_call.1} parent=1 // pred_region
      %101 = dma.done [#allocation14], 1024
    $region73: #{tpu_custom_call.1} parent=1 // pred_fallthru
      _
    %v102 = vld [vmem:[%s0] sm:$0xf]
    %v103 = vrot.slane %v102, 4
    %vm104 = vcmask 1043456
    %v105 = vsel %vm104, %v102, %v103
    %v106 = vlaneseq
    %v107 = vand.u32 %v106, 127
    %vm108 = vcmp.ge.s32.totalorder %v107, 64
    %vm109 = vcmp.lt.s32.totalorder %v107, 96
    %vm110 = vmand %vm108, %vm109
    %v111 = vlaneseq
    %v112 = vshrl.u32 %v111, 7
    %vm113 = vcmp.lt.s32.totalorder %v112, 4
    %v114 = vld [vmem:[%s1] sm:$0xff]
    %v115 = vld [vmem:[%s1 + $0x8] sm:$0xff]
    %v116 = vld [vmem:[%s1 + $0x10] sm:$0xff]
    %v117 = vld [vmem:[%s1 + $0x18] sm:$0xff]
    %v118 = vld [vmem:[#allocation8] sm:$0xff]
    %v119 = vld [vmem:[#allocation8 + $0x8] sm:$0xff]
    %v120 = vld [vmem:[%s4] sm:$0x1]
    %v122 = vlaneseq
    %v123 = vshrl.u32 %v122, 7
    %v124 = vsub.s32 0, %v123
    %v125 = vrot.slane %v120, %v124
    %vm127 = vcmask 130048
    %v129 = vsel %vm127, %v114, 0
    %v132 = vsel %vm127, %v115, 0
    %v135 = vsel %vm127, %v116, 0
    %v138 = vsel %vm127, %v117, 0
    %140 = vmatprep.subr.mxu0 0.0
    %141 = vmatpush1.msra.mxu0 %v118
    %142 = vmatprep.subr.mxu0 0.0
    %143 = vmatpush1.msra.mxu0 %v119
    %144 = vmatprep.subr.mxu0 0.0
    %145 = vmatpush1.msra.mxu0 0.0
    %146 = vmatprep.subr.mxu0 0.0
    %147 = vmatpush1.msra.mxu0 0.0
    %148 = vmatprep.subr.mxu0 0.0
    %149 = vmatpush1.msra.mxu0 0.0
    %150 = vmatprep.subr.mxu0 0.0
    %151 = vmatpush1.msra.mxu0 0.0
    %152 = vmatprep.subr.mxu0 0.0
    %153 = vmatpush1.msra.mxu0 0.0
    %154 = vmatprep.subr.mxu0 0.0
    %155 = vmatpush1.msra.mxu0 0.0
    %156 = vmatprep.subr.mxu0 0.0
    %157 = vmatpush1.msra.mxu0 0.0
    %158 = vmatprep.subr.mxu0 0.0
    %159 = vmatpush1.msra.mxu0 0.0
    %160 = vmatprep.subr.mxu0 0.0
    %161 = vmatpush1.msra.mxu0 0.0
    %162 = vmatprep.subr.mxu0 0.0
    %163 = vmatpush1.msra.mxu0 0.0
    %164 = vmatprep.subr.mxu0 0.0
    %165 = vmatpush1.msra.mxu0 0.0
    %166 = vmatprep.subr.mxu0 0.0
    %167 = vmatpush1.msra.mxu0 0.0
    %168 = vmatprep.subr.mxu0 0.0
    %169 = vmatpush1.msra.mxu0 0.0
    %170 = vmatprep.subr.mxu0 0.0
    %171 = vmatpush1.msra.mxu0 0.0
    %172 = vmatprep.subr.mxu0 0.0
    %173 = vmatpush1.msra.mxu0 0.0
    %174 = vmatprep.subr.mxu0 0.0
    %175 = vmatpush1.msra.mxu0 0.0
    %176 = vmatprep.subr.mxu0 0.0
    %177 = vmatpush1.msra.mxu0 0.0
    %178 = vmatprep.subr.mxu0 0.0
    %179 = vmatpush1.msra.mxu0 0.0
    %180 = vmatprep.subr.mxu0 0.0
    %181 = vmatpush1.msra.mxu0 0.0
    %182 = vmatprep.subr.mxu0 0.0
    %183 = vmatpush1.msra.mxu0 0.0
    %184 = vmatprep.subr.mxu0 0.0
    %185 = vmatpush1.msra.mxu0 0.0
    %186 = vmatprep.subr.mxu0 0.0
    %187 = vmatpush1.msra.mxu0 0.0
    %188 = vmatprep.subr.mxu0 0.0
    %189 = vmatpush1.msra.mxu0 0.0
    %190 = vmatprep.subr.mxu0 0.0
    %191 = vmatpush1.msra.mxu0 0.0
    %192 = vmatprep.subr.mxu0 0.0
    %193 = vmatpush1.msra.mxu0 0.0
    %194 = vmatprep.subr.mxu0 0.0
    %195 = vmatpush1.msra.mxu0 0.0
    %196 = vmatprep.subr.mxu0 0.0
    %197 = vmatpush1.msra.mxu0 0.0
    %198 = vmatprep.subr.mxu0 0.0
    %199 = vmatpush1.msra.mxu0 0.0
    %200 = vmatprep.subr.mxu0 0.0
    %201 = vmatpush1.msra.mxu0 0.0
    %202 = vmatprep.subr.mxu0 0.0
    %203 = vmatpush1.msra.mxu0 0.0
    %204 = vmatprep.mubr.f32.mxu0 0.0
    %205 = vmatmul.mubr.f32.gmra.mrb[0].mxu0 %v129
    %v206 = vpop.f32.mrb[0].mxu0
    %v207 = vadd.f32 %v125, %v206
    %v208 = vpop.f32.mrb[0].mxu0
    %209 = vmatprep.mubr.f32.mxu0 0.0
    %210 = vmatmul.mubr.f32.gmra.mrb[0].mxu0 %v132
    %v211 = vpop.f32.mrb[0].mxu0
    %v212 = vadd.f32 %v125, %v211
    %v213 = vpop.f32.mrb[0].mxu0
    %214 = vmatprep.mubr.f32.mxu0 0.0
    %215 = vmatmul.mubr.f32.gmra.mrb[0].mxu0 %v135
    %v216 = vpop.f32.mrb[0].mxu0
    %v217 = vadd.f32 %v125, %v216
    %v218 = vpop.f32.mrb[0].mxu0
    %219 = vmatprep.mubr.f32.mxu0 0.0
    %220 = vmatmul.mubr.f32.gmra.mrb[0].mxu0 %v138
    %v221 = vpop.f32.mrb[0].mxu0
    %v222 = vadd.f32 %v125, %v221
    %v223 = vpop.f32.mrb[0].mxu0
    %224 = vdwg.mxu0
    %225 = vst [vmem:[#allocation6] sm:$0xff] %v207
    %226 = vst [vmem:[#allocation6 + $0x8] sm:$0xff] %v212
    %227 = vst [vmem:[#allocation6 + $0x10] sm:$0xff] %v217
    %228 = vst [vmem:[#allocation6 + $0x18] sm:$0xff] %v222
    %v229 = vld [vmem:[#allocation10] sm:$0xff]
    %v230 = vld [vmem:[#allocation10 + $0x8] sm:$0xff]
    %v231 = vld [vmem:[%s5] sm:$0x1]
    %v233 = vlaneseq
    %v234 = vshrl.u32 %v233, 7
    %v235 = vsub.s32 0, %v234
    %v236 = vrot.slane %v231, %v235
    %238 = vmatprep.subr.mxu0 0.0
    %239 = vmatpush1.msra.mxu0 %v229
    %240 = vmatprep.subr.mxu0 0.0
    %241 = vmatpush1.msra.mxu0 %v230
    %242 = vmatprep.subr.mxu0 0.0
    %243 = vmatpush1.msra.mxu0 0.0
    %244 = vmatprep.subr.mxu0 0.0
    %245 = vmatpush1.msra.mxu0 0.0
    %246 = vmatprep.subr.mxu0 0.0
    %247 = vmatpush1.msra.mxu0 0.0
    %248 = vmatprep.subr.mxu0 0.0
    %249 = vmatpush1.msra.mxu0 0.0
    %250 = vmatprep.subr.mxu0 0.0
    %251 = vmatpush1.msra.mxu0 0.0
    %252 = vmatprep.subr.mxu0 0.0
    %253 = vmatpush1.msra.mxu0 0.0
    %254 = vmatprep.subr.mxu0 0.0
    %255 = vmatpush1.msra.mxu0 0.0
    %256 = vmatprep.subr.mxu0 0.0
    %257 = vmatpush1.msra.mxu0 0.0
    %258 = vmatprep.subr.mxu0 0.0
    %259 = vmatpush1.msra.mxu0 0.0
    %260 = vmatprep.subr.mxu0 0.0
    %261 = vmatpush1.msra.mxu0 0.0
    %262 = vmatprep.subr.mxu0 0.0
    %263 = vmatpush1.msra.mxu0 0.0
    %264 = vmatprep.subr.mxu0 0.0
    %265 = vmatpush1.msra.mxu0 0.0
    %266 = vmatprep.subr.mxu0 0.0
    %267 = vmatpush1.msra.mxu0 0.0
    %268 = vmatprep.subr.mxu0 0.0
    %269 = vmatpush1.msra.mxu0 0.0
    %270 = vmatprep.subr.mxu0 0.0
    %271 = vmatpush1.msra.mxu0 0.0
    %272 = vmatprep.subr.mxu0 0.0
    %273 = vmatpush1.msra.mxu0 0.0
    %274 = vmatprep.subr.mxu0 0.0
    %275 = vmatpush1.msra.mxu0 0.0
    %276 = vmatprep.subr.mxu0 0.0
    %277 = vmatpush1.msra.mxu0 0.0
    %278 = vmatprep.subr.mxu0 0.0
    %279 = vmatpush1.msra.mxu0 0.0
    %280 = vmatprep.subr.mxu0 0.0
    %281 = vmatpush1.msra.mxu0 0.0
    %282 = vmatprep.subr.mxu0 0.0
    %283 = vmatpush1.msra.mxu0 0.0
    %284 = vmatprep.subr.mxu0 0.0
    %285 = vmatpush1.msra.mxu0 0.0
    %286 = vmatprep.subr.mxu0 0.0
    %287 = vmatpush1.msra.mxu0 0.0
    %288 = vmatprep.subr.mxu0 0.0
    %289 = vmatpush1.msra.mxu0 0.0
    %290 = vmatprep.subr.mxu0 0.0
    %291 = vmatpush1.msra.mxu0 0.0
    %292 = vmatprep.subr.mxu0 0.0
    %293 = vmatpush1.msra.mxu0 0.0
    %294 = vmatprep.subr.mxu0 0.0
    %295 = vmatpush1.msra.mxu0 0.0
    %296 = vmatprep.subr.mxu0 0.0
    %297 = vmatpush1.msra.mxu0 0.0
    %298 = vmatprep.subr.mxu0 0.0
    %299 = vmatpush1.msra.mxu0 0.0
    %300 = vmatprep.subr.mxu0 0.0
    %301 = vmatpush1.msra.mxu0 0.0
    %302 = vmatprep.mubr.f32.mxu0 0.0
    %303 = vmatmul.mubr.f32.gmra.mrb[0].mxu0 %v129
    %v304 = vpop.f32.mrb[0].mxu0
    %v305 = vadd.f32 %v236, %v304
    %v306 = vpop.f32.mrb[0].mxu0
    %307 = vmatprep.mubr.f32.mxu0 0.0
    %308 = vmatmul.mubr.f32.gmra.mrb[0].mxu0 %v132
    %v309 = vpop.f32.mrb[0].mxu0
    %v310 = vadd.f32 %v236, %v309
    %v311 = vpop.f32.mrb[0].mxu0
    %312 = vmatprep.mubr.f32.mxu0 0.0
    %313 = vmatmul.mubr.f32.gmra.mrb[0].mxu0 %v135
    %v314 = vpop.f32.mrb[0].mxu0
    %v315 = vadd.f32 %v236, %v314
    %v316 = vpop.f32.mrb[0].mxu0
    %317 = vmatprep.mubr.f32.mxu0 0.0
    %318 = vmatmul.mubr.f32.gmra.mrb[0].mxu0 %v138
    %v319 = vpop.f32.mrb[0].mxu0
    %v320 = vadd.f32 %v236, %v319
    %v321 = vpop.f32.mrb[0].mxu0
    %322 = vdwg.mxu0
    %323 = vst [vmem:[#allocation7] sm:$0xff] %v305
    %324 = vst [vmem:[#allocation7 + $0x8] sm:$0xff] %v310
    %325 = vst [vmem:[#allocation7 + $0x10] sm:$0xff] %v315
    %326 = vst [vmem:[#allocation7 + $0x18] sm:$0xff] %v320
    %v327 = vld [vmem:[%s6] sm:$0xff]
    %v328 = vld [vmem:[%s6 + $0x8] sm:$0xff]
    %v329 = vld [vmem:[%s6 + $0x10] sm:$0xff]
    %v330 = vld [vmem:[%s6 + $0x18] sm:$0xff]
    %v331 = vld [vmem:[%s6 + $0x20] sm:$0xff]
    %v332 = vld [vmem:[%s6 + $0x28] sm:$0xff]
    %v333 = vld [vmem:[%s6 + $0x30] sm:$0xff]
    %v334 = vld [vmem:[%s6 + $0x38] sm:$0xff]
    %vm335 = vcmask 261120
    %336 = vst.msk [vmem:[#allocation2] sm:$0xff] %vm335, 0.0
    %337 = vst.msk [vmem:[#allocation3] sm:$0xff] %vm335, 0.0
    %v338 = vld [vmem:[#allocation6] sm:$0xf]
    %v339 = vld [vmem:[#allocation7 + $0x1c] sm:$0xf]
    %v341 = vrot.slane %v339, 4
    %v343 = vsel %vm104, %v338, %v341
    %v344 = vld [vmem:[#allocation2] sm:$0xff]
    %v345 = vsel %vm113, %v344, 0.0
    %v346 = vsel %vm113, 0.0, %v344
    %348 = vrot.lane.b32.xlu0 %v346, 32
    %v349 = vpop.permute.xlu0 %348
    %v351 = vsel %vm335, %v345, %v349
    %vm352 = vcmask 523264
    %v354 = vsel %vm352, %v351, 0
    %356 = vmatprep.subr.mxu0 0.0
    %357 = vmatpush1.msra.mxu0 %v327
    %358 = vmatprep.subr.mxu0 0.0
    %359 = vmatpush1.msra.mxu0 %v328
    %360 = vmatprep.subr.mxu0 0.0
    %361 = vmatpush1.msra.mxu0 %v329
    %362 = vmatprep.subr.mxu0 0.0
    %363 = vmatpush1.msra.mxu0 %v330
    %364 = vmatprep.subr.mxu0 0.0
    %365 = vmatpush1.msra.mxu0 %v331
    %366 = vmatprep.subr.mxu0 0.0
    %367 = vmatpush1.msra.mxu0 %v332
    %368 = vmatprep.subr.mxu0 0.0
    %369 = vmatpush1.msra.mxu0 %v333
    %370 = vmatprep.subr.mxu0 0.0
    %371 = vmatpush1.msra.mxu0 %v334
    %372 = vmatprep.subr.mxu0 0.0
    %373 = vmatpush1.msra.mxu0 0.0
    %374 = vmatprep.subr.mxu0 0.0
    %375 = vmatpush1.msra.mxu0 0.0
    %376 = vmatprep.subr.mxu0 0.0
    %377 = vmatpush1.msra.mxu0 0.0
    %378 = vmatprep.subr.mxu0 0.0
    %379 = vmatpush1.msra.mxu0 0.0
    %380 = vmatprep.subr.mxu0 0.0
    %381 = vmatpush1.msra.mxu0 0.0
    %382 = vmatprep.subr.mxu0 0.0
    %383 = vmatpush1.msra.mxu0 0.0
    %384 = vmatprep.subr.mxu0 0.0
    %385 = vmatpush1.msra.mxu0 0.0
    %386 = vmatprep.subr.mxu0 0.0
    %387 = vmatpush1.msra.mxu0 0.0
    %388 = vmatprep.subr.mxu0 0.0
    %389 = vmatpush1.msra.mxu0 0.0
    %390 = vmatprep.subr.mxu0 0.0
    %391 = vmatpush1.msra.mxu0 0.0
    %392 = vmatprep.subr.mxu0 0.0
    %393 = vmatpush1.msra.mxu0 0.0
    %394 = vmatprep.subr.mxu0 0.0
    %395 = vmatpush1.msra.mxu0 0.0
    %396 = vmatprep.subr.mxu0 0.0
    %397 = vmatpush1.msra.mxu0 0.0
    %398 = vmatprep.subr.mxu0 0.0
    %399 = vmatpush1.msra.mxu0 0.0
    %400 = vmatprep.subr.mxu0 0.0
    %401 = vmatpush1.msra.mxu0 0.0
    %402 = vmatprep.subr.mxu0 0.0
    %403 = vmatpush1.msra.mxu0 0.0
    %404 = vmatprep.subr.mxu0 0.0
    %405 = vmatpush1.msra.mxu0 0.0
    %406 = vmatprep.subr.mxu0 0.0
    %407 = vmatpush1.msra.mxu0 0.0
    %408 = vmatprep.subr.mxu0 0.0
    %409 = vmatpush1.msra.mxu0 0.0
    %410 = vmatprep.subr.mxu0 0.0
    %411 = vmatpush1.msra.mxu0 0.0
    %412 = vmatprep.subr.mxu0 0.0
    %413 = vmatpush1.msra.mxu0 0.0
    %414 = vmatprep.subr.mxu0 0.0
    %415 = vmatpush1.msra.mxu0 0.0
    %416 = vmatprep.subr.mxu0 0.0
    %417 = vmatpush1.msra.mxu0 0.0
    %418 = vmatprep.subr.mxu0 0.0
    %419 = vmatpush1.msra.mxu0 0.0
    %420 = vmatprep.mubr.f32.mxu0 0.0
    %421 = vmatmul.mubr.f32.gmra.mrb[0].mxu0 %v354
    %v422 = vpop.f32.mrb[0].mxu0
    %v423 = vadd.f32 0.0, %v422
    %v424 = vpop.f32.mrb[0].mxu0
    %425 = vdwg.mxu0
    %v426 = vadd.f32 %v343, %v423
    %v427 = vtanh.pop %v426
    %v428 = vxor.u32 %v426, 2147483648
    %v429 = vmul.f32 %v428, 1.442695
    %v430 = vpow.pop %v429
    %v431 = vadd.f32 %v430, 1.0
    %v432 = vrcp.pop %v431
    %v433 = vmul.f32 1.0, %v432
    %v434 = vsel %vm110, %v427, %v433
    %v435 = vld [vmem:[#allocation3] sm:$0xff]
    %437 = vrot.lane.b32.xlu0 %v435, 32
    %v438 = vpop.permute.xlu0 %437
    %v440 = vmul.f32 %v434, %v438
    %442 = vrot.lane.b32.xlu0 %v434, 64
    %v443 = vpop.permute.xlu0 %442
    %v445 = vmul.f32 %v434, %v443
    %447 = vrot.lane.b32.xlu0 %v445, 32
    %v448 = vpop.permute.xlu0 %447
    %v450 = vadd.f32 %v440, %v448
    %v451 = vtanh.pop %v450
    %453 = vrot.lane.b32.xlu0 %v451, 64
    %v454 = vpop.permute.xlu0 %453
    %v456 = vmul.f32 %v434, %v454
    %v457 = vsel %vm113, 0, 7
    %vm458 = vcmp.gt.s32.totalorder %v105, %v457
    %v459 = vsel %vm458, 1, 0
    %460 = vset.pattern.permute.xlu0 0
    %461 = vperm.xlu0 %460, %v459
    %v462 = vpop.permute.xlu0 %461
    %vm463 = vcmp.eq.s32.totalorder %v462, 1
    %465 = vrot.lane.b32.xlu0 %v344, 96
    %v466 = vpop.permute.xlu0 %465
    %v468 = vsel %vm463, %v456, %v466
    %v469 = vsel %vm463, %v450, %v438
    %471 = vrot.lane.b32.xlu0 %v468, 32
    %v472 = vpop.permute.xlu0 %471
    %474 = vst.msk [vmem:[#allocation2] sm:$0xff] %vm335, %v472
    %476 = vrot.lane.b32.xlu0 %v469, 96
    %v477 = vpop.permute.xlu0 %476
    %479 = vst.msk [vmem:[#allocation3] sm:$0xff] %vm335, %v477
    %v480 = vsel %vm463, %v456, 0.0
    %482 = vrot.lane.b32.xlu0 %v480, 32
    %v483 = vpop.permute.xlu0 %482
    %vm485 = vcmask 257024
    %486 = vst.msk [vmem:[#allocation4] sm:$0xf] %vm485, %v483
    %vm487 = vcmask 261124
    %488 = vst.msk [vmem:[#allocation5 + $0x18] sm:$0xf0] %vm487, %v483
    %v489 = vld [vmem:[#allocation6 + $0x4] sm:$0xf]
    %v490 = vld [vmem:[#allocation7 + $0x18] sm:$0xf]
    %v492 = vrot.slane %v490, 4
    %v494 = vsel %vm104, %v489, %v492
    %v495 = vld [vmem:[#allocation2] sm:$0xff]
    %v496 = vsel %vm113, %v495, 0.0
    %v497 = vsel %vm113, 0.0, %v495
    %499 = vrot.lane.b32.xlu0 %v497, 32
    %v500 = vpop.permute.xlu0 %499
    %v502 = vsel %vm335, %v496, %v500
    %v504 = vsel %vm352, %v502, 0
    %506 = vmatprep.subr.mxu0 0.0
    %507 = vmatpush1.msra.mxu0 %v327
    %508 = vmatprep.subr.mxu0 0.0
    %509 = vmatpush1.msra.mxu0 %v328
    %510 = vmatprep.subr.mxu0 0.0
    %511 = vmatpush1.msra.mxu0 %v329
    %512 = vmatprep.subr.mxu0 0.0
    %513 = vmatpush1.msra.mxu0 %v330
    %514 = vmatprep.subr.mxu0 0.0
    %515 = vmatpush1.msra.mxu0 %v331
    %516 = vmatprep.subr.mxu0 0.0
    %517 = vmatpush1.msra.mxu0 %v332
    %518 = vmatprep.subr.mxu0 0.0
    %519 = vmatpush1.msra.mxu0 %v333
    %520 = vmatprep.subr.mxu0 0.0
    %521 = vmatpush1.msra.mxu0 %v334
    %522 = vmatprep.subr.mxu0 0.0
    %523 = vmatpush1.msra.mxu0 0.0
    %524 = vmatprep.subr.mxu0 0.0
    %525 = vmatpush1.msra.mxu0 0.0
    %526 = vmatprep.subr.mxu0 0.0
    %527 = vmatpush1.msra.mxu0 0.0
    %528 = vmatprep.subr.mxu0 0.0
    %529 = vmatpush1.msra.mxu0 0.0
    %530 = vmatprep.subr.mxu0 0.0
    %531 = vmatpush1.msra.mxu0 0.0
    %532 = vmatprep.subr.mxu0 0.0
    %533 = vmatpush1.msra.mxu0 0.0
    %534 = vmatprep.subr.mxu0 0.0
    %535 = vmatpush1.msra.mxu0 0.0
    %536 = vmatprep.subr.mxu0 0.0
    %537 = vmatpush1.msra.mxu0 0.0
    %538 = vmatprep.subr.mxu0 0.0
    %539 = vmatpush1.msra.mxu0 0.0
    %540 = vmatprep.subr.mxu0 0.0
    %541 = vmatpush1.msra.mxu0 0.0
    %542 = vmatprep.subr.mxu0 0.0
    %543 = vmatpush1.msra.mxu0 0.0
    %544 = vmatprep.subr.mxu0 0.0
    %545 = vmatpush1.msra.mxu0 0.0
    %546 = vmatprep.subr.mxu0 0.0
    %547 = vmatpush1.msra.mxu0 0.0
    %548 = vmatprep.subr.mxu0 0.0
    %549 = vmatpush1.msra.mxu0 0.0
    %550 = vmatprep.subr.mxu0 0.0
    %551 = vmatpush1.msra.mxu0 0.0
    %552 = vmatprep.subr.mxu0 0.0
    %553 = vmatpush1.msra.mxu0 0.0
    %554 = vmatprep.subr.mxu0 0.0
    %555 = vmatpush1.msra.mxu0 0.0
    %556 = vmatprep.subr.mxu0 0.0
    %557 = vmatpush1.msra.mxu0 0.0
    %558 = vmatprep.subr.mxu0 0.0
    %559 = vmatpush1.msra.mxu0 0.0
    %560 = vmatprep.subr.mxu0 0.0
    %561 = vmatpush1.msra.mxu0 0.0
    %562 = vmatprep.subr.mxu0 0.0
    %563 = vmatpush1.msra.mxu0 0.0
    %564 = vmatprep.subr.mxu0 0.0
    %565 = vmatpush1.msra.mxu0 0.0
    %566 = vmatprep.subr.mxu0 0.0
    %567 = vmatpush1.msra.mxu0 0.0
    %568 = vmatprep.subr.mxu0 0.0
    %569 = vmatpush1.msra.mxu0 0.0
    %570 = vmatprep.mubr.f32.mxu0 0.0
    %571 = vmatmul.mubr.f32.gmra.mrb[0].mxu0 %v504
    %v572 = vpop.f32.mrb[0].mxu0
    %v573 = vadd.f32 0.0, %v572
    %v574 = vpop.f32.mrb[0].mxu0
    %575 = vdwg.mxu0
    %v576 = vadd.f32 %v494, %v573
    %v577 = vtanh.pop %v576
    %v578 = vxor.u32 %v576, 2147483648
    %v579 = vmul.f32 %v578, 1.442695
    %v580 = vpow.pop %v579
    %v581 = vadd.f32 %v580, 1.0
    %v582 = vrcp.pop %v581
    %v583 = vmul.f32 1.0, %v582
    %v584 = vsel %vm110, %v577, %v583
    %v585 = vld [vmem:[#allocation3] sm:$0xff]
    %587 = vrot.lane.b32.xlu0 %v585, 32
    %v588 = vpop.permute.xlu0 %587
    %v590 = vmul.f32 %v584, %v588
    %592 = vrot.lane.b32.xlu0 %v584, 64
    %v593 = vpop.permute.xlu0 %592
    %v595 = vmul.f32 %v584, %v593
    %597 = vrot.lane.b32.xlu0 %v595, 32
    %v598 = vpop.permute.xlu0 %597
    %v600 = vadd.f32 %v590, %v598
    %v601 = vtanh.pop %v600
    %603 = vrot.lane.b32.xlu0 %v601, 64
    %v604 = vpop.permute.xlu0 %603
    %v606 = vmul.f32 %v584, %v604
    %v607 = vsel %vm113, 1, 6
    %vm608 = vcmp.gt.s32.totalorder %v105, %v607
    %v609 = vsel %vm608, 1, 0
    %610 = vset.pattern.permute.xlu0 0
    %611 = vperm.xlu0 %610, %v609
    %v612 = vpop.permute.xlu0 %611
    %vm613 = vcmp.eq.s32.totalorder %v612, 1
    %615 = vrot.lane.b32.xlu0 %v495, 96
    %v616 = vpop.permute.xlu0 %615
    %v618 = vsel %vm613, %v606, %v616
    %v619 = vsel %vm613, %v600, %v588
    %621 = vrot.lane.b32.xlu0 %v618, 32
    %v622 = vpop.permute.xlu0 %621
    %624 = vst.msk [vmem:[#allocation2] sm:$0xff] %vm335, %v622
    %626 = vrot.lane.b32.xlu0 %v619, 96
    %v627 = vpop.permute.xlu0 %626
    %629 = vst.msk [vmem:[#allocation3] sm:$0xff] %vm335, %v627
    %v630 = vsel %vm613, %v606, 0.0
    %632 = vrot.lane.b32.xlu0 %v630, 32
    %v633 = vpop.permute.xlu0 %632
    %635 = vst.msk [vmem:[#allocation4 + $0x4] sm:$0xf] %vm485, %v633
    %636 = vst.msk [vmem:[#allocation5 + $0x14] sm:$0xf0] %vm487, %v633
    %v637 = vld [vmem:[#allocation6 + $0x8] sm:$0xf]
    %v638 = vld [vmem:[#allocation7 + $0x14] sm:$0xf]
    %v640 = vrot.slane %v638, 4
    %v642 = vsel %vm104, %v637, %v640
    %v643 = vld [vmem:[#allocation2] sm:$0xff]
    %v644 = vsel %vm113, %v643, 0.0
    %v645 = vsel %vm113, 0.0, %v643
    %647 = vrot.lane.b32.xlu0 %v645, 32
    %v648 = vpop.permute.xlu0 %647
    %v650 = vsel %vm335, %v644, %v648
    %v652 = vsel %vm352, %v650, 0
    %654 = vmatprep.subr.mxu0 0.0
    %655 = vmatpush1.msra.mxu0 %v327
    %656 = vmatprep.subr.mxu0 0.0
    %657 = vmatpush1.msra.mxu0 %v328
    %658 = vmatprep.subr.mxu0 0.0
    %659 = vmatpush1.msra.mxu0 %v329
    %660 = vmatprep.subr.mxu0 0.0
    %661 = vmatpush1.msra.mxu0 %v330
    %662 = vmatprep.subr.mxu0 0.0
    %663 = vmatpush1.msra.mxu0 %v331
    %664 = vmatprep.subr.mxu0 0.0
    %665 = vmatpush1.msra.mxu0 %v332
    %666 = vmatprep.subr.mxu0 0.0
    %667 = vmatpush1.msra.mxu0 %v333
    %668 = vmatprep.subr.mxu0 0.0
    %669 = vmatpush1.msra.mxu0 %v334
    %670 = vmatprep.subr.mxu0 0.0
    %671 = vmatpush1.msra.mxu0 0.0
    %672 = vmatprep.subr.mxu0 0.0
    %673 = vmatpush1.msra.mxu0 0.0
    %674 = vmatprep.subr.mxu0 0.0
    %675 = vmatpush1.msra.mxu0 0.0
    %676 = vmatprep.subr.mxu0 0.0
    %677 = vmatpush1.msra.mxu0 0.0
    %678 = vmatprep.subr.mxu0 0.0
    %679 = vmatpush1.msra.mxu0 0.0
    %680 = vmatprep.subr.mxu0 0.0
    %681 = vmatpush1.msra.mxu0 0.0
    %682 = vmatprep.subr.mxu0 0.0
    %683 = vmatpush1.msra.mxu0 0.0
    %684 = vmatprep.subr.mxu0 0.0
    %685 = vmatpush1.msra.mxu0 0.0
    %686 = vmatprep.subr.mxu0 0.0
    %687 = vmatpush1.msra.mxu0 0.0
    %688 = vmatprep.subr.mxu0 0.0
    %689 = vmatpush1.msra.mxu0 0.0
    %690 = vmatprep.subr.mxu0 0.0
    %691 = vmatpush1.msra.mxu0 0.0
    %692 = vmatprep.subr.mxu0 0.0
    %693 = vmatpush1.msra.mxu0 0.0
    %694 = vmatprep.subr.mxu0 0.0
    %695 = vmatpush1.msra.mxu0 0.0
    %696 = vmatprep.subr.mxu0 0.0
    %697 = vmatpush1.msra.mxu0 0.0
    %698 = vmatprep.subr.mxu0 0.0
    %699 = vmatpush1.msra.mxu0 0.0
    %700 = vmatprep.subr.mxu0 0.0
    %701 = vmatpush1.msra.mxu0 0.0
    %702 = vmatprep.subr.mxu0 0.0
    %703 = vmatpush1.msra.mxu0 0.0
    %704 = vmatprep.subr.mxu0 0.0
    %705 = vmatpush1.msra.mxu0 0.0
    %706 = vmatprep.subr.mxu0 0.0
    %707 = vmatpush1.msra.mxu0 0.0
    %708 = vmatprep.subr.mxu0 0.0
    %709 = vmatpush1.msra.mxu0 0.0
    %710 = vmatprep.subr.mxu0 0.0
    %711 = vmatpush1.msra.mxu0 0.0
    %712 = vmatprep.subr.mxu0 0.0
    %713 = vmatpush1.msra.mxu0 0.0
    %714 = vmatprep.subr.mxu0 0.0
    %715 = vmatpush1.msra.mxu0 0.0
    %716 = vmatprep.subr.mxu0 0.0
    %717 = vmatpush1.msra.mxu0 0.0
    %718 = vmatprep.mubr.f32.mxu0 0.0
    %719 = vmatmul.mubr.f32.gmra.mrb[0].mxu0 %v652
    %v720 = vpop.f32.mrb[0].mxu0
    %v721 = vadd.f32 0.0, %v720
    %v722 = vpop.f32.mrb[0].mxu0
    %723 = vdwg.mxu0
    %v724 = vadd.f32 %v642, %v721
    %v725 = vtanh.pop %v724
    %v726 = vxor.u32 %v724, 2147483648
    %v727 = vmul.f32 %v726, 1.442695
    %v728 = vpow.pop %v727
    %v729 = vadd.f32 %v728, 1.0
    %v730 = vrcp.pop %v729
    %v731 = vmul.f32 1.0, %v730
    %v732 = vsel %vm110, %v725, %v731
    %v733 = vld [vmem:[#allocation3] sm:$0xff]
    %735 = vrot.lane.b32.xlu0 %v733, 32
    %v736 = vpop.permute.xlu0 %735
    %v738 = vmul.f32 %v732, %v736
    %740 = vrot.lane.b32.xlu0 %v732, 64
    %v741 = vpop.permute.xlu0 %740
    %v743 = vmul.f32 %v732, %v741
    %745 = vrot.lane.b32.xlu0 %v743, 32
    %v746 = vpop.permute.xlu0 %745
    %v748 = vadd.f32 %v738, %v746
    %v749 = vtanh.pop %v748
    %751 = vrot.lane.b32.xlu0 %v749, 64
    %v752 = vpop.permute.xlu0 %751
    %v754 = vmul.f32 %v732, %v752
    %v755 = vsel %vm113, 2, 5
    %vm756 = vcmp.gt.s32.totalorder %v105, %v755
    %v757 = vsel %vm756, 1, 0
    %758 = vset.pattern.permute.xlu0 0
    %759 = vperm.xlu0 %758, %v757
    %v760 = vpop.permute.xlu0 %759
    %vm761 = vcmp.eq.s32.totalorder %v760, 1
    %763 = vrot.lane.b32.xlu0 %v643, 96
    %v764 = vpop.permute.xlu0 %763
    %v766 = vsel %vm761, %v754, %v764
    %v767 = vsel %vm761, %v748, %v736
    %769 = vrot.lane.b32.xlu0 %v766, 32
    %v770 = vpop.permute.xlu0 %769
    %772 = vst.msk [vmem:[#allocation2] sm:$0xff] %vm335, %v770
    %774 = vrot.lane.b32.xlu0 %v767, 96
    %v775 = vpop.permute.xlu0 %774
    %777 = vst.msk [vmem:[#allocation3] sm:$0xff] %vm335, %v775
    %v778 = vsel %vm761, %v754, 0.0
    %780 = vrot.lane.b32.xlu0 %v778, 32
    %v781 = vpop.permute.xlu0 %780
    %783 = vst.msk [vmem:[#allocation4 + $0x8] sm:$0xf] %vm485, %v781
    %784 = vst.msk [vmem:[#allocation5 + $0x10] sm:$0xf0] %vm487, %v781
    %v785 = vld [vmem:[#allocation6 + $0xc] sm:$0xf]
    %v786 = vld [vmem:[#allocation7 + $0x10] sm:$0xf]
    %v788 = vrot.slane %v786, 4
    %v790 = vsel %vm104, %v785, %v788
    %v791 = vld [vmem:[#allocation2] sm:$0xff]
    %v792 = vsel %vm113, %v791, 0.0
    %v793 = vsel %vm113, 0.0, %v791
    %795 = vrot.lane.b32.xlu0 %v793, 32
    %v796 = vpop.permute.xlu0 %795
    %v798 = vsel %vm335, %v792, %v796
    %v800 = vsel %vm352, %v798, 0
    %802 = vmatprep.subr.mxu0 0.0
    %803 = vmatpush1.msra.mxu0 %v327
    %804 = vmatprep.subr.mxu0 0.0
    %805 = vmatpush1.msra.mxu0 %v328
    %806 = vmatprep.subr.mxu0 0.0
    %807 = vmatpush1.msra.mxu0 %v329
    %808 = vmatprep.subr.mxu0 0.0
    %809 = vmatpush1.msra.mxu0 %v330
    %810 = vmatprep.subr.mxu0 0.0
    %811 = vmatpush1.msra.mxu0 %v331
    %812 = vmatprep.subr.mxu0 0.0
    %813 = vmatpush1.msra.mxu0 %v332
    %814 = vmatprep.subr.mxu0 0.0
    %815 = vmatpush1.msra.mxu0 %v333
    %816 = vmatprep.subr.mxu0 0.0
    %817 = vmatpush1.msra.mxu0 %v334
    %818 = vmatprep.subr.mxu0 0.0
    %819 = vmatpush1.msra.mxu0 0.0
    %820 = vmatprep.subr.mxu0 0.0
    %821 = vmatpush1.msra.mxu0 0.0
    %822 = vmatprep.subr.mxu0 0.0
    %823 = vmatpush1.msra.mxu0 0.0
    %824 = vmatprep.subr.mxu0 0.0
    %825 = vmatpush1.msra.mxu0 0.0
    %826 = vmatprep.subr.mxu0 0.0
    %827 = vmatpush1.msra.mxu0 0.0
    %828 = vmatprep.subr.mxu0 0.0
    %829 = vmatpush1.msra.mxu0 0.0
    %830 = vmatprep.subr.mxu0 0.0
    %831 = vmatpush1.msra.mxu0 0.0
    %832 = vmatprep.subr.mxu0 0.0
    %833 = vmatpush1.msra.mxu0 0.0
    %834 = vmatprep.subr.mxu0 0.0
    %835 = vmatpush1.msra.mxu0 0.0
    %836 = vmatprep.subr.mxu0 0.0
    %837 = vmatpush1.msra.mxu0 0.0
    %838 = vmatprep.subr.mxu0 0.0
    %839 = vmatpush1.msra.mxu0 0.0
    %840 = vmatprep.subr.mxu0 0.0
    %841 = vmatpush1.msra.mxu0 0.0
    %842 = vmatprep.subr.mxu0 0.0
    %843 = vmatpush1.msra.mxu0 0.0
    %844 = vmatprep.subr.mxu0 0.0
    %845 = vmatpush1.msra.mxu0 0.0
    %846 = vmatprep.subr.mxu0 0.0
    %847 = vmatpush1.msra.mxu0 0.0
    %848 = vmatprep.subr.mxu0 0.0
    %849 = vmatpush1.msra.mxu0 0.0
    %850 = vmatprep.subr.mxu0 0.0
    %851 = vmatpush1.msra.mxu0 0.0
    %852 = vmatprep.subr.mxu0 0.0
    %853 = vmatpush1.msra.mxu0 0.0
    %854 = vmatprep.subr.mxu0 0.0
    %855 = vmatpush1.msra.mxu0 0.0
    %856 = vmatprep.subr.mxu0 0.0
    %857 = vmatpush1.msra.mxu0 0.0
    %858 = vmatprep.subr.mxu0 0.0
    %859 = vmatpush1.msra.mxu0 0.0
    %860 = vmatprep.subr.mxu0 0.0
    %861 = vmatpush1.msra.mxu0 0.0
    %862 = vmatprep.subr.mxu0 0.0
    %863 = vmatpush1.msra.mxu0 0.0
    %864 = vmatprep.subr.mxu0 0.0
    %865 = vmatpush1.msra.mxu0 0.0
    %866 = vmatprep.mubr.f32.mxu0 0.0
    %867 = vmatmul.mubr.f32.gmra.mrb[0].mxu0 %v800
    %v868 = vpop.f32.mrb[0].mxu0
    %v869 = vadd.f32 0.0, %v868
    %v870 = vpop.f32.mrb[0].mxu0
    %871 = vdwg.mxu0
    %v872 = vadd.f32 %v790, %v869
    %v873 = vtanh.pop %v872
    %v874 = vxor.u32 %v872, 2147483648
    %v875 = vmul.f32 %v874, 1.442695
    %v876 = vpow.pop %v875
    %v877 = vadd.f32 %v876, 1.0
    %v878 = vrcp.pop %v877
    %v879 = vmul.f32 1.0, %v878
    %v880 = vsel %vm110, %v873, %v879
    %v881 = vld [vmem:[#allocation3] sm:$0xff]
    %883 = vrot.lane.b32.xlu0 %v881, 32
    %v884 = vpop.permute.xlu0 %883
    %v886 = vmul.f32 %v880, %v884
    %888 = vrot.lane.b32.xlu0 %v880, 64
    %v889 = vpop.permute.xlu0 %888
    %v891 = vmul.f32 %v880, %v889
    %893 = vrot.lane.b32.xlu0 %v891, 32
    %v894 = vpop.permute.xlu0 %893
    %v896 = vadd.f32 %v886, %v894
    %v897 = vtanh.pop %v896
    %899 = vrot.lane.b32.xlu0 %v897, 64
    %v900 = vpop.permute.xlu0 %899
    %v902 = vmul.f32 %v880, %v900
    %v903 = vsel %vm113, 3, 4
    %vm904 = vcmp.gt.s32.totalorder %v105, %v903
    %v905 = vsel %vm904, 1, 0
    %906 = vset.pattern.permute.xlu0 0
    %907 = vperm.xlu0 %906, %v905
    %v908 = vpop.permute.xlu0 %907
    %vm909 = vcmp.eq.s32.totalorder %v908, 1
    %911 = vrot.lane.b32.xlu0 %v791, 96
    %v912 = vpop.permute.xlu0 %911
    %v914 = vsel %vm909, %v902, %v912
    %v915 = vsel %vm909, %v896, %v884
    %917 = vrot.lane.b32.xlu0 %v914, 32
    %v918 = vpop.permute.xlu0 %917
    %920 = vst.msk [vmem:[#allocation2] sm:$0xff] %vm335, %v918
    %922 = vrot.lane.b32.xlu0 %v915, 96
    %v923 = vpop.permute.xlu0 %922
    %925 = vst.msk [vmem:[#allocation3] sm:$0xff] %vm335, %v923
    %v926 = vsel %vm909, %v902, 0.0
    %928 = vrot.lane.b32.xlu0 %v926, 32
    %v929 = vpop.permute.xlu0 %928
    %931 = vst.msk [vmem:[#allocation4 + $0xc] sm:$0xf] %vm485, %v929
    %932 = vst.msk [vmem:[#allocation5 + $0xc] sm:$0xf0] %vm487, %v929
    %v933 = vld [vmem:[#allocation6 + $0x10] sm:$0xf]
    %v934 = vld [vmem:[#allocation7 + $0xc] sm:$0xf]
    %v936 = vrot.slane %v934, 4
    %v938 = vsel %vm104, %v933, %v936
    %v939 = vld [vmem:[#allocation2] sm:$0xff]
    %v940 = vsel %vm113, %v939, 0.0
    %v941 = vsel %vm113, 0.0, %v939
    %943 = vrot.lane.b32.xlu0 %v941, 32
    %v944 = vpop.permute.xlu0 %943
    %v946 = vsel %vm335, %v940, %v944
    %v948 = vsel %vm352, %v946, 0
    %950 = vmatprep.subr.mxu0 0.0
    %951 = vmatpush1.msra.mxu0 %v327
    %952 = vmatprep.subr.mxu0 0.0
    %953 = vmatpush1.msra.mxu0 %v328
    %954 = vmatprep.subr.mxu0 0.0
    %955 = vmatpush1.msra.mxu0 %v329
    %956 = vmatprep.subr.mxu0 0.0
    %957 = vmatpush1.msra.mxu0 %v330
    %958 = vmatprep.subr.mxu0 0.0
    %959 = vmatpush1.msra.mxu0 %v331
    %960 = vmatprep.subr.mxu0 0.0
    %961 = vmatpush1.msra.mxu0 %v332
    %962 = vmatprep.subr.mxu0 0.0
    %963 = vmatpush1.msra.mxu0 %v333
    %964 = vmatprep.subr.mxu0 0.0
    %965 = vmatpush1.msra.mxu0 %v334
    %966 = vmatprep.subr.mxu0 0.0
    %967 = vmatpush1.msra.mxu0 0.0
    %968 = vmatprep.subr.mxu0 0.0
    %969 = vmatpush1.msra.mxu0 0.0
    %970 = vmatprep.subr.mxu0 0.0
    %971 = vmatpush1.msra.mxu0 0.0
    %972 = vmatprep.subr.mxu0 0.0
    %973 = vmatpush1.msra.mxu0 0.0
    %974 = vmatprep.subr.mxu0 0.0
    %975 = vmatpush1.msra.mxu0 0.0
    %976 = vmatprep.subr.mxu0 0.0
    %977 = vmatpush1.msra.mxu0 0.0
    %978 = vmatprep.subr.mxu0 0.0
    %979 = vmatpush1.msra.mxu0 0.0
    %980 = vmatprep.subr.mxu0 0.0
    %981 = vmatpush1.msra.mxu0 0.0
    %982 = vmatprep.subr.mxu0 0.0
    %983 = vmatpush1.msra.mxu0 0.0
    %984 = vmatprep.subr.mxu0 0.0
    %985 = vmatpush1.msra.mxu0 0.0
    %986 = vmatprep.subr.mxu0 0.0
    %987 = vmatpush1.msra.mxu0 0.0
    %988 = vmatprep.subr.mxu0 0.0
    %989 = vmatpush1.msra.mxu0 0.0
    %990 = vmatprep.subr.mxu0 0.0
    %991 = vmatpush1.msra.mxu0 0.0
    %992 = vmatprep.subr.mxu0 0.0
    %993 = vmatpush1.msra.mxu0 0.0
    %994 = vmatprep.subr.mxu0 0.0
    %995 = vmatpush1.msra.mxu0 0.0
    %996 = vmatprep.subr.mxu0 0.0
    %997 = vmatpush1.msra.mxu0 0.0
    %998 = vmatprep.subr.mxu0 0.0
    %999 = vmatpush1.msra.mxu0 0.0
    %1000 = vmatprep.subr.mxu0 0.0
    %1001 = vmatpush1.msra.mxu0 0.0
    %1002 = vmatprep.subr.mxu0 0.0
    %1003 = vmatpush1.msra.mxu0 0.0
    %1004 = vmatprep.subr.mxu0 0.0
    %1005 = vmatpush1.msra.mxu0 0.0
    %1006 = vmatprep.subr.mxu0 0.0
    %1007 = vmatpush1.msra.mxu0 0.0
    %1008 = vmatprep.subr.mxu0 0.0
    %1009 = vmatpush1.msra.mxu0 0.0
    %1010 = vmatprep.subr.mxu0 0.0
    %1011 = vmatpush1.msra.mxu0 0.0
    %1012 = vmatprep.subr.mxu0 0.0
    %1013 = vmatpush1.msra.mxu0 0.0
    %1014 = vmatprep.mubr.f32.mxu0 0.0
    %1015 = vmatmul.mubr.f32.gmra.mrb[0].mxu0 %v948
    %v1016 = vpop.f32.mrb[0].mxu0
    %v1017 = vadd.f32 0.0, %v1016
    %v1018 = vpop.f32.mrb[0].mxu0
    %1019 = vdwg.mxu0
    %v1020 = vadd.f32 %v938, %v1017
    %v1021 = vtanh.pop %v1020
    %v1022 = vxor.u32 %v1020, 2147483648
    %v1023 = vmul.f32 %v1022, 1.442695
    %v1024 = vpow.pop %v1023
    %v1025 = vadd.f32 %v1024, 1.0
    %v1026 = vrcp.pop %v1025
    %v1027 = vmul.f32 1.0, %v1026
    %v1028 = vsel %vm110, %v1021, %v1027
    %v1029 = vld [vmem:[#allocation3] sm:$0xff]
    %1031 = vrot.lane.b32.xlu0 %v1029, 32
    %v1032 = vpop.permute.xlu0 %1031
    %v1034 = vmul.f32 %v1028, %v1032
    %1036 = vrot.lane.b32.xlu0 %v1028, 64
    %v1037 = vpop.permute.xlu0 %1036
    %v1039 = vmul.f32 %v1028, %v1037
    %1041 = vrot.lane.b32.xlu0 %v1039, 32
    %v1042 = vpop.permute.xlu0 %1041
    %v1044 = vadd.f32 %v1034, %v1042
    %v1045 = vtanh.pop %v1044
    %1047 = vrot.lane.b32.xlu0 %v1045, 64
    %v1048 = vpop.permute.xlu0 %1047
    %v1050 = vmul.f32 %v1028, %v1048
    %v1051 = vsel %vm113, 4, 3
    %vm1052 = vcmp.gt.s32.totalorder %v105, %v1051
    %v1053 = vsel %vm1052, 1, 0
    %1054 = vset.pattern.permute.xlu0 0
    %1055 = vperm.xlu0 %1054, %v1053
    %v1056 = vpop.permute.xlu0 %1055
    %vm1057 = vcmp.eq.s32.totalorder %v1056, 1
    %1059 = vrot.lane.b32.xlu0 %v939, 96
    %v1060 = vpop.permute.xlu0 %1059
    %v1062 = vsel %vm1057, %v1050, %v1060
    %v1063 = vsel %vm1057, %v1044, %v1032
    %1065 = vrot.lane.b32.xlu0 %v1062, 32
    %v1066 = vpop.permute.xlu0 %1065
    %1068 = vst.msk [vmem:[#allocation2] sm:$0xff] %vm335, %v1066
    %1070 = vrot.lane.b32.xlu0 %v1063, 96
    %v1071 = vpop.permute.xlu0 %1070
    %1073 = vst.msk [vmem:[#allocation3] sm:$0xff] %vm335, %v1071
    %v1074 = vsel %vm1057, %v1050, 0.0
    %1076 = vrot.lane.b32.xlu0 %v1074, 32
    %v1077 = vpop.permute.xlu0 %1076
    %1079 = vst.msk [vmem:[#allocation4 + $0x10] sm:$0xf] %vm485, %v1077
    %1080 = vst.msk [vmem:[#allocation5 + $0x8] sm:$0xf0] %vm487, %v1077
    %v1081 = vld [vmem:[#allocation6 + $0x14] sm:$0xf]
    %v1082 = vld [vmem:[#allocation7 + $0x8] sm:$0xf]
    %v1084 = vrot.slane %v1082, 4
    %v1086 = vsel %vm104, %v1081, %v1084
    %v1087 = vld [vmem:[#allocation2] sm:$0xff]
    %v1088 = vsel %vm113, %v1087, 0.0
    %v1089 = vsel %vm113, 0.0, %v1087
    %1091 = vrot.lane.b32.xlu0 %v1089, 32
    %v1092 = vpop.permute.xlu0 %1091
    %v1094 = vsel %vm335, %v1088, %v1092
    %v1096 = vsel %vm352, %v1094, 0
    %1098 = vmatprep.subr.mxu0 0.0
    %1099 = vmatpush1.msra.mxu0 %v327
    %1100 = vmatprep.subr.mxu0 0.0
    %1101 = vmatpush1.msra.mxu0 %v328
    %1102 = vmatprep.subr.mxu0 0.0
    %1103 = vmatpush1.msra.mxu0 %v329
    %1104 = vmatprep.subr.mxu0 0.0
    %1105 = vmatpush1.msra.mxu0 %v330
    %1106 = vmatprep.subr.mxu0 0.0
    %1107 = vmatpush1.msra.mxu0 %v331
    %1108 = vmatprep.subr.mxu0 0.0
    %1109 = vmatpush1.msra.mxu0 %v332
    %1110 = vmatprep.subr.mxu0 0.0
    %1111 = vmatpush1.msra.mxu0 %v333
    %1112 = vmatprep.subr.mxu0 0.0
    %1113 = vmatpush1.msra.mxu0 %v334
    %1114 = vmatprep.subr.mxu0 0.0
    %1115 = vmatpush1.msra.mxu0 0.0
    %1116 = vmatprep.subr.mxu0 0.0
    %1117 = vmatpush1.msra.mxu0 0.0
    %1118 = vmatprep.subr.mxu0 0.0
    %1119 = vmatpush1.msra.mxu0 0.0
    %1120 = vmatprep.subr.mxu0 0.0
    %1121 = vmatpush1.msra.mxu0 0.0
    %1122 = vmatprep.subr.mxu0 0.0
    %1123 = vmatpush1.msra.mxu0 0.0
    %1124 = vmatprep.subr.mxu0 0.0
    %1125 = vmatpush1.msra.mxu0 0.0
    %1126 = vmatprep.subr.mxu0 0.0
    %1127 = vmatpush1.msra.mxu0 0.0
    %1128 = vmatprep.subr.mxu0 0.0
    %1129 = vmatpush1.msra.mxu0 0.0
    %1130 = vmatprep.subr.mxu0 0.0
    %1131 = vmatpush1.msra.mxu0 0.0
    %1132 = vmatprep.subr.mxu0 0.0
    %1133 = vmatpush1.msra.mxu0 0.0
    %1134 = vmatprep.subr.mxu0 0.0
    %1135 = vmatpush1.msra.mxu0 0.0
    %1136 = vmatprep.subr.mxu0 0.0
    %1137 = vmatpush1.msra.mxu0 0.0
    %1138 = vmatprep.subr.mxu0 0.0
    %1139 = vmatpush1.msra.mxu0 0.0
    %1140 = vmatprep.subr.mxu0 0.0
    %1141 = vmatpush1.msra.mxu0 0.0
    %1142 = vmatprep.subr.mxu0 0.0
    %1143 = vmatpush1.msra.mxu0 0.0
    %1144 = vmatprep.subr.mxu0 0.0
    %1145 = vmatpush1.msra.mxu0 0.0
    %1146 = vmatprep.subr.mxu0 0.0
    %1147 = vmatpush1.msra.mxu0 0.0
    %1148 = vmatprep.subr.mxu0 0.0
    %1149 = vmatpush1.msra.mxu0 0.0
    %1150 = vmatprep.subr.mxu0 0.0
    %1151 = vmatpush1.msra.mxu0 0.0
    %1152 = vmatprep.subr.mxu0 0.0
    %1153 = vmatpush1.msra.mxu0 0.0
    %1154 = vmatprep.subr.mxu0 0.0
    %1155 = vmatpush1.msra.mxu0 0.0
    %1156 = vmatprep.subr.mxu0 0.0
    %1157 = vmatpush1.msra.mxu0 0.0
    %1158 = vmatprep.subr.mxu0 0.0
    %1159 = vmatpush1.msra.mxu0 0.0
    %1160 = vmatprep.subr.mxu0 0.0
    %1161 = vmatpush1.msra.mxu0 0.0
    %1162 = vmatprep.mubr.f32.mxu0 0.0
    %1163 = vmatmul.mubr.f32.gmra.mrb[0].mxu0 %v1096
    %v1164 = vpop.f32.mrb[0].mxu0
    %v1165 = vadd.f32 0.0, %v1164
    %v1166 = vpop.f32.mrb[0].mxu0
    %1167 = vdwg.mxu0
    %v1168 = vadd.f32 %v1086, %v1165
    %v1169 = vtanh.pop %v1168
    %v1170 = vxor.u32 %v1168, 2147483648
    %v1171 = vmul.f32 %v1170, 1.442695
    %v1172 = vpow.pop %v1171
    %v1173 = vadd.f32 %v1172, 1.0
    %v1174 = vrcp.pop %v1173
    %v1175 = vmul.f32 1.0, %v1174
    %v1176 = vsel %vm110, %v1169, %v1175
    %v1177 = vld [vmem:[#allocation3] sm:$0xff]
    %1179 = vrot.lane.b32.xlu0 %v1177, 32
    %v1180 = vpop.permute.xlu0 %1179
    %v1182 = vmul.f32 %v1176, %v1180
    %1184 = vrot.lane.b32.xlu0 %v1176, 64
    %v1185 = vpop.permute.xlu0 %1184
    %v1187 = vmul.f32 %v1176, %v1185
    %1189 = vrot.lane.b32.xlu0 %v1187, 32
    %v1190 = vpop.permute.xlu0 %1189
    %v1192 = vadd.f32 %v1182, %v1190
    %v1193 = vtanh.pop %v1192
    %1195 = vrot.lane.b32.xlu0 %v1193, 64
    %v1196 = vpop.permute.xlu0 %1195
    %v1198 = vmul.f32 %v1176, %v1196
    %v1199 = vsel %vm113, 5, 2
    %vm1200 = vcmp.gt.s32.totalorder %v105, %v1199
    %v1201 = vsel %vm1200, 1, 0
    %1202 = vset.pattern.permute.xlu0 0
    %1203 = vperm.xlu0 %1202, %v1201
    %v1204 = vpop.permute.xlu0 %1203
    %vm1205 = vcmp.eq.s32.totalorder %v1204, 1
    %1207 = vrot.lane.b32.xlu0 %v1087, 96
    %v1208 = vpop.permute.xlu0 %1207
    %v1210 = vsel %vm1205, %v1198, %v1208
    %v1211 = vsel %vm1205, %v1192, %v1180
    %1213 = vrot.lane.b32.xlu0 %v1210, 32
    %v1214 = vpop.permute.xlu0 %1213
    %1216 = vst.msk [vmem:[#allocation2] sm:$0xff] %vm335, %v1214
    %1218 = vrot.lane.b32.xlu0 %v1211, 96
    %v1219 = vpop.permute.xlu0 %1218
    %1221 = vst.msk [vmem:[#allocation3] sm:$0xff] %vm335, %v1219
    %v1222 = vsel %vm1205, %v1198, 0.0
    %1224 = vrot.lane.b32.xlu0 %v1222, 32
    %v1225 = vpop.permute.xlu0 %1224
    %1227 = vst.msk [vmem:[#allocation4 + $0x14] sm:$0xf] %vm485, %v1225
    %1228 = vst.msk [vmem:[#allocation5 + $0x4] sm:$0xf0] %vm487, %v1225
    %v1229 = vld [vmem:[#allocation6 + $0x18] sm:$0xf]
    %v1230 = vld [vmem:[#allocation7 + $0x4] sm:$0xf]
    %v1232 = vrot.slane %v1230, 4
    %v1234 = vsel %vm104, %v1229, %v1232
    %v1235 = vld [vmem:[#allocation2] sm:$0xff]
    %v1236 = vsel %vm113, %v1235, 0.0
    %v1237 = vsel %vm113, 0.0, %v1235
    %1239 = vrot.lane.b32.xlu0 %v1237, 32
    %v1240 = vpop.permute.xlu0 %1239
    %v1242 = vsel %vm335, %v1236, %v1240
    %v1244 = vsel %vm352, %v1242, 0
    %1246 = vmatprep.subr.mxu0 0.0
    %1247 = vmatpush1.msra.mxu0 %v327
    %1248 = vmatprep.subr.mxu0 0.0
    %1249 = vmatpush1.msra.mxu0 %v328
    %1250 = vmatprep.subr.mxu0 0.0
    %1251 = vmatpush1.msra.mxu0 %v329
    %1252 = vmatprep.subr.mxu0 0.0
    %1253 = vmatpush1.msra.mxu0 %v330
    %1254 = vmatprep.subr.mxu0 0.0
    %1255 = vmatpush1.msra.mxu0 %v331
    %1256 = vmatprep.subr.mxu0 0.0
    %1257 = vmatpush1.msra.mxu0 %v332
    %1258 = vmatprep.subr.mxu0 0.0
    %1259 = vmatpush1.msra.mxu0 %v333
    %1260 = vmatprep.subr.mxu0 0.0
    %1261 = vmatpush1.msra.mxu0 %v334
    %1262 = vmatprep.subr.mxu0 0.0
    %1263 = vmatpush1.msra.mxu0 0.0
    %1264 = vmatprep.subr.mxu0 0.0
    %1265 = vmatpush1.msra.mxu0 0.0
    %1266 = vmatprep.subr.mxu0 0.0
    %1267 = vmatpush1.msra.mxu0 0.0
    %1268 = vmatprep.subr.mxu0 0.0
    %1269 = vmatpush1.msra.mxu0 0.0
    %1270 = vmatprep.subr.mxu0 0.0
    %1271 = vmatpush1.msra.mxu0 0.0
    %1272 = vmatprep.subr.mxu0 0.0
    %1273 = vmatpush1.msra.mxu0 0.0
    %1274 = vmatprep.subr.mxu0 0.0
    %1275 = vmatpush1.msra.mxu0 0.0
    %1276 = vmatprep.subr.mxu0 0.0
    %1277 = vmatpush1.msra.mxu0 0.0
    %1278 = vmatprep.subr.mxu0 0.0
    %1279 = vmatpush1.msra.mxu0 0.0
    %1280 = vmatprep.subr.mxu0 0.0
    %1281 = vmatpush1.msra.mxu0 0.0
    %1282 = vmatprep.subr.mxu0 0.0
    %1283 = vmatpush1.msra.mxu0 0.0
    %1284 = vmatprep.subr.mxu0 0.0
    %1285 = vmatpush1.msra.mxu0 0.0
    %1286 = vmatprep.subr.mxu0 0.0
    %1287 = vmatpush1.msra.mxu0 0.0
    %1288 = vmatprep.subr.mxu0 0.0
    %1289 = vmatpush1.msra.mxu0 0.0
    %1290 = vmatprep.subr.mxu0 0.0
    %1291 = vmatpush1.msra.mxu0 0.0
    %1292 = vmatprep.subr.mxu0 0.0
    %1293 = vmatpush1.msra.mxu0 0.0
    %1294 = vmatprep.subr.mxu0 0.0
    %1295 = vmatpush1.msra.mxu0 0.0
    %1296 = vmatprep.subr.mxu0 0.0
    %1297 = vmatpush1.msra.mxu0 0.0
    %1298 = vmatprep.subr.mxu0 0.0
    %1299 = vmatpush1.msra.mxu0 0.0
    %1300 = vmatprep.subr.mxu0 0.0
    %1301 = vmatpush1.msra.mxu0 0.0
    %1302 = vmatprep.subr.mxu0 0.0
    %1303 = vmatpush1.msra.mxu0 0.0
    %1304 = vmatprep.subr.mxu0 0.0
    %1305 = vmatpush1.msra.mxu0 0.0
    %1306 = vmatprep.subr.mxu0 0.0
    %1307 = vmatpush1.msra.mxu0 0.0
    %1308 = vmatprep.subr.mxu0 0.0
    %1309 = vmatpush1.msra.mxu0 0.0
    %1310 = vmatprep.mubr.f32.mxu0 0.0
    %1311 = vmatmul.mubr.f32.gmra.mrb[0].mxu0 %v1244
    %v1312 = vpop.f32.mrb[0].mxu0
    %v1313 = vadd.f32 0.0, %v1312
    %v1314 = vpop.f32.mrb[0].mxu0
    %1315 = vdwg.mxu0
    %v1316 = vadd.f32 %v1234, %v1313
    %v1317 = vtanh.pop %v1316
    %v1318 = vxor.u32 %v1316, 2147483648
    %v1319 = vmul.f32 %v1318, 1.442695
    %v1320 = vpow.pop %v1319
    %v1321 = vadd.f32 %v1320, 1.0
    %v1322 = vrcp.pop %v1321
    %v1323 = vmul.f32 1.0, %v1322
    %v1324 = vsel %vm110, %v1317, %v1323
    %v1325 = vld [vmem:[#allocation3] sm:$0xff]
    %1327 = vrot.lane.b32.xlu0 %v1325, 32
    %v1328 = vpop.permute.xlu0 %1327
    %v1330 = vmul.f32 %v1324, %v1328
    %1332 = vrot.lane.b32.xlu0 %v1324, 64
    %v1333 = vpop.permute.xlu0 %1332
    %v1335 = vmul.f32 %v1324, %v1333
    %1337 = vrot.lane.b32.xlu0 %v1335, 32
    %v1338 = vpop.permute.xlu0 %1337
    %v1340 = vadd.f32 %v1330, %v1338
    %v1341 = vtanh.pop %v1340
    %1343 = vrot.lane.b32.xlu0 %v1341, 64
    %v1344 = vpop.permute.xlu0 %1343
    %v1346 = vmul.f32 %v1324, %v1344
    %v1347 = vsel %vm113, 6, 1
    %vm1348 = vcmp.gt.s32.totalorder %v105, %v1347
    %v1349 = vsel %vm1348, 1, 0
    %1350 = vset.pattern.permute.xlu0 0
    %1351 = vperm.xlu0 %1350, %v1349
    %v1352 = vpop.permute.xlu0 %1351
    %vm1353 = vcmp.eq.s32.totalorder %v1352, 1
    %1355 = vrot.lane.b32.xlu0 %v1235, 96
    %v1356 = vpop.permute.xlu0 %1355
    %v1358 = vsel %vm1353, %v1346, %v1356
    %v1359 = vsel %vm1353, %v1340, %v1328
    %1361 = vrot.lane.b32.xlu0 %v1358, 32
    %v1362 = vpop.permute.xlu0 %1361
    %1364 = vst.msk [vmem:[#allocation2] sm:$0xff] %vm335, %v1362
    %1366 = vrot.lane.b32.xlu0 %v1359, 96
    %v1367 = vpop.permute.xlu0 %1366
    %1369 = vst.msk [vmem:[#allocation3] sm:$0xff] %vm335, %v1367
    %v1370 = vsel %vm1353, %v1346, 0.0
    %1372 = vrot.lane.b32.xlu0 %v1370, 32
    %v1373 = vpop.permute.xlu0 %1372
    %1375 = vst.msk [vmem:[#allocation4 + $0x18] sm:$0xf] %vm485, %v1373
    %1376 = vst.msk [vmem:[#allocation5] sm:$0xf0] %vm487, %v1373
    %v1377 = vld [vmem:[#allocation6 + $0x1c] sm:$0xf]
    %v1378 = vld [vmem:[#allocation7] sm:$0xf]
    %v1380 = vrot.slane %v1378, 4
    %v1382 = vsel %vm104, %v1377, %v1380
    %v1383 = vld [vmem:[#allocation2] sm:$0xff]
    %v1384 = vsel %vm113, %v1383, 0.0
    %v1385 = vsel %vm113, 0.0, %v1383
    %1387 = vrot.lane.b32.xlu0 %v1385, 32
    %v1388 = vpop.permute.xlu0 %1387
    %v1390 = vsel %vm335, %v1384, %v1388
    %v1392 = vsel %vm352, %v1390, 0
    %1394 = vmatprep.subr.mxu0 0.0
    %1395 = vmatpush1.msra.mxu0 %v327
    %1396 = vmatprep.subr.mxu0 0.0
    %1397 = vmatpush1.msra.mxu0 %v328
    %1398 = vmatprep.subr.mxu0 0.0
    %1399 = vmatpush1.msra.mxu0 %v329
    %1400 = vmatprep.subr.mxu0 0.0
    %1401 = vmatpush1.msra.mxu0 %v330
    %1402 = vmatprep.subr.mxu0 0.0
    %1403 = vmatpush1.msra.mxu0 %v331
    %1404 = vmatprep.subr.mxu0 0.0
    %1405 = vmatpush1.msra.mxu0 %v332
    %1406 = vmatprep.subr.mxu0 0.0
    %1407 = vmatpush1.msra.mxu0 %v333
    %1408 = vmatprep.subr.mxu0 0.0
    %1409 = vmatpush1.msra.mxu0 %v334
    %1410 = vmatprep.subr.mxu0 0.0
    %1411 = vmatpush1.msra.mxu0 0.0
    %1412 = vmatprep.subr.mxu0 0.0
    %1413 = vmatpush1.msra.mxu0 0.0
    %1414 = vmatprep.subr.mxu0 0.0
    %1415 = vmatpush1.msra.mxu0 0.0
    %1416 = vmatprep.subr.mxu0 0.0
    %1417 = vmatpush1.msra.mxu0 0.0
    %1418 = vmatprep.subr.mxu0 0.0
    %1419 = vmatpush1.msra.mxu0 0.0
    %1420 = vmatprep.subr.mxu0 0.0
    %1421 = vmatpush1.msra.mxu0 0.0
    %1422 = vmatprep.subr.mxu0 0.0
    %1423 = vmatpush1.msra.mxu0 0.0
    %1424 = vmatprep.subr.mxu0 0.0
    %1425 = vmatpush1.msra.mxu0 0.0
    %1426 = vmatprep.subr.mxu0 0.0
    %1427 = vmatpush1.msra.mxu0 0.0
    %1428 = vmatprep.subr.mxu0 0.0
    %1429 = vmatpush1.msra.mxu0 0.0
    %1430 = vmatprep.subr.mxu0 0.0
    %1431 = vmatpush1.msra.mxu0 0.0
    %1432 = vmatprep.subr.mxu0 0.0
    %1433 = vmatpush1.msra.mxu0 0.0
    %1434 = vmatprep.subr.mxu0 0.0
    %1435 = vmatpush1.msra.mxu0 0.0
    %1436 = vmatprep.subr.mxu0 0.0
    %1437 = vmatpush1.msra.mxu0 0.0
    %1438 = vmatprep.subr.mxu0 0.0
    %1439 = vmatpush1.msra.mxu0 0.0
    %1440 = vmatprep.subr.mxu0 0.0
    %1441 = vmatpush1.msra.mxu0 0.0
    %1442 = vmatprep.subr.mxu0 0.0
    %1443 = vmatpush1.msra.mxu0 0.0
    %1444 = vmatprep.subr.mxu0 0.0
    %1445 = vmatpush1.msra.mxu0 0.0
    %1446 = vmatprep.subr.mxu0 0.0
    %1447 = vmatpush1.msra.mxu0 0.0
    %1448 = vmatprep.subr.mxu0 0.0
    %1449 = vmatpush1.msra.mxu0 0.0
    %1450 = vmatprep.subr.mxu0 0.0
    %1451 = vmatpush1.msra.mxu0 0.0
    %1452 = vmatprep.subr.mxu0 0.0
    %1453 = vmatpush1.msra.mxu0 0.0
    %1454 = vmatprep.subr.mxu0 0.0
    %1455 = vmatpush1.msra.mxu0 0.0
    %1456 = vmatprep.subr.mxu0 0.0
    %1457 = vmatpush1.msra.mxu0 0.0
    %1458 = vmatprep.mubr.f32.mxu0 0.0
    %1459 = vmatmul.mubr.f32.gmra.mrb[0].mxu0 %v1392
    %v1460 = vpop.f32.mrb[0].mxu0
    %v1461 = vadd.f32 0.0, %v1460
    %v1462 = vpop.f32.mrb[0].mxu0
    %1463 = vdwg.mxu0
    %v1464 = vadd.f32 %v1382, %v1461
    %v1465 = vtanh.pop %v1464
    %v1466 = vxor.u32 %v1464, 2147483648
    %v1467 = vmul.f32 %v1466, 1.442695
    %v1468 = vpow.pop %v1467
    %v1469 = vadd.f32 %v1468, 1.0
    %v1470 = vrcp.pop %v1469
    %v1471 = vmul.f32 1.0, %v1470
    %v1472 = vsel %vm110, %v1465, %v1471
    %v1473 = vld [vmem:[#allocation3] sm:$0xff]
    %1475 = vrot.lane.b32.xlu0 %v1473, 32
    %v1476 = vpop.permute.xlu0 %1475
    %v1478 = vmul.f32 %v1472, %v1476
    %1480 = vrot.lane.b32.xlu0 %v1472, 64
    %v1481 = vpop.permute.xlu0 %1480
    %v1483 = vmul.f32 %v1472, %v1481
    %1485 = vrot.lane.b32.xlu0 %v1483, 32
    %v1486 = vpop.permute.xlu0 %1485
    %v1488 = vadd.f32 %v1478, %v1486
    %v1489 = vtanh.pop %v1488
    %1491 = vrot.lane.b32.xlu0 %v1489, 64
    %v1492 = vpop.permute.xlu0 %1491
    %v1494 = vmul.f32 %v1472, %v1492
    %v1495 = vsel %vm113, 7, 0
    %vm1496 = vcmp.gt.s32.totalorder %v105, %v1495
    %v1497 = vsel %vm1496, 1, 0
    %1498 = vset.pattern.permute.xlu0 0
    %1499 = vperm.xlu0 %1498, %v1497
    %v1500 = vpop.permute.xlu0 %1499
    %vm1501 = vcmp.eq.s32.totalorder %v1500, 1
    %1503 = vrot.lane.b32.xlu0 %v1383, 96
    %v1504 = vpop.permute.xlu0 %1503
    %v1506 = vsel %vm1501, %v1494, %v1504
    %v1507 = vsel %vm1501, %v1488, %v1476
    %1509 = vrot.lane.b32.xlu0 %v1506, 32
    %v1510 = vpop.permute.xlu0 %1509
    %1512 = vst.msk [vmem:[#allocation2] sm:$0xff] %vm335, %v1510
    %1514 = vrot.lane.b32.xlu0 %v1507, 96
    %v1515 = vpop.permute.xlu0 %1514
    %1517 = vst.msk [vmem:[#allocation3] sm:$0xff] %vm335, %v1515
    %v1518 = vsel %vm1501, %v1494, 0.0
    %1520 = vrot.lane.b32.xlu0 %v1518, 32
    %v1521 = vpop.permute.xlu0 %1520
    %1523 = vst.msk [vmem:[#allocation4 + $0x1c] sm:$0xf] %vm485, %v1521
    %1524 = vst.msk [vmem:[#allocation5 - $0x4] sm:$0xf0] %vm487, %v1521
    %v1525 = vld [vmem:[#allocation4] sm:$0xff]
    %v1526 = vld [vmem:[#allocation4 + $0x8] sm:$0xff]
    %v1527 = vld [vmem:[#allocation4 + $0x10] sm:$0xff]
    %v1528 = vld [vmem:[#allocation4 + $0x18] sm:$0xff]
    %v1529 = vld [vmem:[#allocation5] sm:$0xff]
    %v1530 = vld [vmem:[#allocation5 + $0x8] sm:$0xff]
    %v1531 = vld [vmem:[#allocation5 + $0x10] sm:$0xff]
    %v1532 = vld [vmem:[#allocation5 + $0x18] sm:$0xff]
    %1537 = vrot.lane.b32.xlu0 %v1529, 32
    %v1538 = vpop.permute.xlu0 %1537
    %1539 = vrot.lane.b32.xlu0 %v1530, 32
    %v1540 = vpop.permute.xlu0 %1539
    %1541 = vrot.lane.b32.xlu0 %v1531, 32
    %v1542 = vpop.permute.xlu0 %1541
    %1543 = vrot.lane.b32.xlu0 %v1532, 32
    %v1544 = vpop.permute.xlu0 %1543
    %v1549 = vsel %vm335, %v1525, %v1538
    %v1550 = vsel %vm335, %v1526, %v1540
    %v1551 = vsel %vm335, %v1527, %v1542
    %v1552 = vsel %vm335, %v1528, %v1544
    %v1553 = vld [vmem:[%s7] sm:$0xff]
    %v1554 = vld [vmem:[%s7 + $0x8] sm:$0xff]
    %v1555 = vld [vmem:[%s7 + $0x10] sm:$0xff]
    %v1556 = vld [vmem:[%s7 + $0x18] sm:$0xff]
    %v1557 = vld [vmem:[%s7 + $0x20] sm:$0xff]
    %v1558 = vld [vmem:[%s7 + $0x28] sm:$0xff]
    %v1559 = vld [vmem:[%s7 + $0x30] sm:$0xff]
    %v1560 = vld [vmem:[%s7 + $0x38] sm:$0xff]
    %v1561 = vld [vmem:[%s9] sm:$0x1]
    %v1563 = vlaneseq
    %v1564 = vshrl.u32 %v1563, 7
    %v1565 = vsub.s32 0, %v1564
    %v1566 = vrot.slane %v1561, %v1565
    %v1569 = vsel %vm352, %v1549, 0
    %v1572 = vsel %vm352, %v1550, 0
    %v1575 = vsel %vm352, %v1551, 0
    %v1578 = vsel %vm352, %v1552, 0
    %1580 = vmatprep.subr.mxu0 0.0
    %1581 = vmatpush1.msra.mxu0 %v1553
    %1582 = vmatprep.subr.mxu0 0.0
    %1583 = vmatpush1.msra.mxu0 %v1554
    %1584 = vmatprep.subr.mxu0 0.0
    %1585 = vmatpush1.msra.mxu0 %v1555
    %1586 = vmatprep.subr.mxu0 0.0
    %1587 = vmatpush1.msra.mxu0 %v1556
    %1588 = vmatprep.subr.mxu0 0.0
    %1589 = vmatpush1.msra.mxu0 %v1557
    %1590 = vmatprep.subr.mxu0 0.0
    %1591 = vmatpush1.msra.mxu0 %v1558
    %1592 = vmatprep.subr.mxu0 0.0
    %1593 = vmatpush1.msra.mxu0 %v1559
    %1594 = vmatprep.subr.mxu0 0.0
    %1595 = vmatpush1.msra.mxu0 %v1560
    %1596 = vmatprep.subr.mxu0 0.0
    %1597 = vmatpush1.msra.mxu0 0.0
    %1598 = vmatprep.subr.mxu0 0.0
    %1599 = vmatpush1.msra.mxu0 0.0
    %1600 = vmatprep.subr.mxu0 0.0
    %1601 = vmatpush1.msra.mxu0 0.0
    %1602 = vmatprep.subr.mxu0 0.0
    %1603 = vmatpush1.msra.mxu0 0.0
    %1604 = vmatprep.subr.mxu0 0.0
    %1605 = vmatpush1.msra.mxu0 0.0
    %1606 = vmatprep.subr.mxu0 0.0
    %1607 = vmatpush1.msra.mxu0 0.0
    %1608 = vmatprep.subr.mxu0 0.0
    %1609 = vmatpush1.msra.mxu0 0.0
    %1610 = vmatprep.subr.mxu0 0.0
    %1611 = vmatpush1.msra.mxu0 0.0
    %1612 = vmatprep.subr.mxu0 0.0
    %1613 = vmatpush1.msra.mxu0 0.0
    %1614 = vmatprep.subr.mxu0 0.0
    %1615 = vmatpush1.msra.mxu0 0.0
    %1616 = vmatprep.subr.mxu0 0.0
    %1617 = vmatpush1.msra.mxu0 0.0
    %1618 = vmatprep.subr.mxu0 0.0
    %1619 = vmatpush1.msra.mxu0 0.0
    %1620 = vmatprep.subr.mxu0 0.0
    %1621 = vmatpush1.msra.mxu0 0.0
    %1622 = vmatprep.subr.mxu0 0.0
    %1623 = vmatpush1.msra.mxu0 0.0
    %1624 = vmatprep.subr.mxu0 0.0
    %1625 = vmatpush1.msra.mxu0 0.0
    %1626 = vmatprep.subr.mxu0 0.0
    %1627 = vmatpush1.msra.mxu0 0.0
    %1628 = vmatprep.subr.mxu0 0.0
    %1629 = vmatpush1.msra.mxu0 0.0
    %1630 = vmatprep.subr.mxu0 0.0
    %1631 = vmatpush1.msra.mxu0 0.0
    %1632 = vmatprep.subr.mxu0 0.0
    %1633 = vmatpush1.msra.mxu0 0.0
    %1634 = vmatprep.subr.mxu0 0.0
    %1635 = vmatpush1.msra.mxu0 0.0
    %1636 = vmatprep.subr.mxu0 0.0
    %1637 = vmatpush1.msra.mxu0 0.0
    %1638 = vmatprep.subr.mxu0 0.0
    %1639 = vmatpush1.msra.mxu0 0.0
    %1640 = vmatprep.subr.mxu0 0.0
    %1641 = vmatpush1.msra.mxu0 0.0
    %1642 = vmatprep.subr.mxu0 0.0
    %1643 = vmatpush1.msra.mxu0 0.0
    %1644 = vmatprep.mubr.f32.mxu0 0.0
    %1645 = vmatmul.mubr.f32.gmra.mrb[0].mxu0 %v1569
    %v1646 = vpop.f32.mrb[0].mxu0
    %v1647 = vadd.f32 %v1566, %v1646
    %v1648 = vpop.f32.mrb[0].mxu0
    %1649 = vmatprep.mubr.f32.mxu0 0.0
    %1650 = vmatmul.mubr.f32.gmra.mrb[0].mxu0 %v1572
    %v1651 = vpop.f32.mrb[0].mxu0
    %v1652 = vadd.f32 %v1566, %v1651
    %v1653 = vpop.f32.mrb[0].mxu0
    %1654 = vmatprep.mubr.f32.mxu0 0.0
    %1655 = vmatmul.mubr.f32.gmra.mrb[0].mxu0 %v1575
    %v1656 = vpop.f32.mrb[0].mxu0
    %v1657 = vadd.f32 %v1566, %v1656
    %v1658 = vpop.f32.mrb[0].mxu0
    %1659 = vmatprep.mubr.f32.mxu0 0.0
    %1660 = vmatmul.mubr.f32.gmra.mrb[0].mxu0 %v1578
    %v1661 = vpop.f32.mrb[0].mxu0
    %v1662 = vadd.f32 %v1566, %v1661
    %v1663 = vpop.f32.mrb[0].mxu0
    %1664 = vdwg.mxu0
    %1665 = vst [vmem:[#allocation6] sm:$0xff] %v1647
    %1666 = vst [vmem:[#allocation6 + $0x8] sm:$0xff] %v1652
    %1667 = vst [vmem:[#allocation6 + $0x10] sm:$0xff] %v1657
    %1668 = vst [vmem:[#allocation6 + $0x18] sm:$0xff] %v1662
    %v1669 = vld [vmem:[#allocation12] sm:$0xff]
    %v1670 = vld [vmem:[#allocation12 + $0x8] sm:$0xff]
    %v1671 = vld [vmem:[#allocation12 + $0x10] sm:$0xff]
    %v1672 = vld [vmem:[#allocation12 + $0x18] sm:$0xff]
    %v1673 = vld [vmem:[#allocation12 + $0x20] sm:$0xff]
    %v1674 = vld [vmem:[#allocation12 + $0x28] sm:$0xff]
    %v1675 = vld [vmem:[#allocation12 + $0x30] sm:$0xff]
    %v1676 = vld [vmem:[#allocation12 + $0x38] sm:$0xff]
    %v1677 = vld [vmem:[%s10] sm:$0x1]
    %v1679 = vlaneseq
    %v1680 = vshrl.u32 %v1679, 7
    %v1681 = vsub.s32 0, %v1680
    %v1682 = vrot.slane %v1677, %v1681
    %1684 = vmatprep.subr.mxu0 0.0
    %1685 = vmatpush1.msra.mxu0 %v1669
    %1686 = vmatprep.subr.mxu0 0.0
    %1687 = vmatpush1.msra.mxu0 %v1670
    %1688 = vmatprep.subr.mxu0 0.0
    %1689 = vmatpush1.msra.mxu0 %v1671
    %1690 = vmatprep.subr.mxu0 0.0
    %1691 = vmatpush1.msra.mxu0 %v1672
    %1692 = vmatprep.subr.mxu0 0.0
    %1693 = vmatpush1.msra.mxu0 %v1673
    %1694 = vmatprep.subr.mxu0 0.0
    %1695 = vmatpush1.msra.mxu0 %v1674
    %1696 = vmatprep.subr.mxu0 0.0
    %1697 = vmatpush1.msra.mxu0 %v1675
    %1698 = vmatprep.subr.mxu0 0.0
    %1699 = vmatpush1.msra.mxu0 %v1676
    %1700 = vmatprep.subr.mxu0 0.0
    %1701 = vmatpush1.msra.mxu0 0.0
    %1702 = vmatprep.subr.mxu0 0.0
    %1703 = vmatpush1.msra.mxu0 0.0
    %1704 = vmatprep.subr.mxu0 0.0
    %1705 = vmatpush1.msra.mxu0 0.0
    %1706 = vmatprep.subr.mxu0 0.0
    %1707 = vmatpush1.msra.mxu0 0.0
    %1708 = vmatprep.subr.mxu0 0.0
    %1709 = vmatpush1.msra.mxu0 0.0
    %1710 = vmatprep.subr.mxu0 0.0
    %1711 = vmatpush1.msra.mxu0 0.0
    %1712 = vmatprep.subr.mxu0 0.0
    %1713 = vmatpush1.msra.mxu0 0.0
    %1714 = vmatprep.subr.mxu0 0.0
    %1715 = vmatpush1.msra.mxu0 0.0
    %1716 = vmatprep.subr.mxu0 0.0
    %1717 = vmatpush1.msra.mxu0 0.0
    %1718 = vmatprep.subr.mxu0 0.0
    %1719 = vmatpush1.msra.mxu0 0.0
    %1720 = vmatprep.subr.mxu0 0.0
    %1721 = vmatpush1.msra.mxu0 0.0
    %1722 = vmatprep.subr.mxu0 0.0
    %1723 = vmatpush1.msra.mxu0 0.0
    %1724 = vmatprep.subr.mxu0 0.0
    %1725 = vmatpush1.msra.mxu0 0.0
    %1726 = vmatprep.subr.mxu0 0.0
    %1727 = vmatpush1.msra.mxu0 0.0
    %1728 = vmatprep.subr.mxu0 0.0
    %1729 = vmatpush1.msra.mxu0 0.0
    %1730 = vmatprep.subr.mxu0 0.0
    %1731 = vmatpush1.msra.mxu0 0.0
    %1732 = vmatprep.subr.mxu0 0.0
    %1733 = vmatpush1.msra.mxu0 0.0
    %1734 = vmatprep.subr.mxu0 0.0
    %1735 = vmatpush1.msra.mxu0 0.0
    %1736 = vmatprep.subr.mxu0 0.0
    %1737 = vmatpush1.msra.mxu0 0.0
    %1738 = vmatprep.subr.mxu0 0.0
    %1739 = vmatpush1.msra.mxu0 0.0
    %1740 = vmatprep.subr.mxu0 0.0
    %1741 = vmatpush1.msra.mxu0 0.0
    %1742 = vmatprep.subr.mxu0 0.0
    %1743 = vmatpush1.msra.mxu0 0.0
    %1744 = vmatprep.subr.mxu0 0.0
    %1745 = vmatpush1.msra.mxu0 0.0
    %1746 = vmatprep.subr.mxu0 0.0
    %1747 = vmatpush1.msra.mxu0 0.0
    %1748 = vmatprep.mubr.f32.mxu0 0.0
    %1749 = vmatmul.mubr.f32.gmra.mrb[0].mxu0 %v1569
    %v1750 = vpop.f32.mrb[0].mxu0
    %v1751 = vadd.f32 %v1682, %v1750
    %v1752 = vpop.f32.mrb[0].mxu0
    %1753 = vmatprep.mubr.f32.mxu0 0.0
    %1754 = vmatmul.mubr.f32.gmra.mrb[0].mxu0 %v1572
    %v1755 = vpop.f32.mrb[0].mxu0
    %v1756 = vadd.f32 %v1682, %v1755
    %v1757 = vpop.f32.mrb[0].mxu0
    %1758 = vmatprep.mubr.f32.mxu0 0.0
    %1759 = vmatmul.mubr.f32.gmra.mrb[0].mxu0 %v1575
    %v1760 = vpop.f32.mrb[0].mxu0
    %v1761 = vadd.f32 %v1682, %v1760
    %v1762 = vpop.f32.mrb[0].mxu0
    %1763 = vmatprep.mubr.f32.mxu0 0.0
    %1764 = vmatmul.mubr.f32.gmra.mrb[0].mxu0 %v1578
    %v1765 = vpop.f32.mrb[0].mxu0
    %v1766 = vadd.f32 %v1682, %v1765
    %v1767 = vpop.f32.mrb[0].mxu0
    %1768 = vdwg.mxu0
    %1769 = vst [vmem:[#allocation7] sm:$0xff] %v1751
    %1770 = vst [vmem:[#allocation7 + $0x8] sm:$0xff] %v1756
    %1771 = vst [vmem:[#allocation7 + $0x10] sm:$0xff] %v1761
    %1772 = vst [vmem:[#allocation7 + $0x18] sm:$0xff] %v1766
    %v1773 = vld [vmem:[#allocation13] sm:$0xff]
    %v1774 = vld [vmem:[#allocation13 + $0x8] sm:$0xff]
    %v1775 = vld [vmem:[#allocation13 + $0x10] sm:$0xff]
    %v1776 = vld [vmem:[#allocation13 + $0x18] sm:$0xff]
    %v1777 = vld [vmem:[#allocation13 + $0x20] sm:$0xff]
    %v1778 = vld [vmem:[#allocation13 + $0x28] sm:$0xff]
    %v1779 = vld [vmem:[#allocation13 + $0x30] sm:$0xff]
    %v1780 = vld [vmem:[#allocation13 + $0x38] sm:$0xff]
    %1781 = vst.msk [vmem:[#allocation2] sm:$0xff] %vm335, 0.0
    %1782 = vst.msk [vmem:[#allocation3] sm:$0xff] %vm335, 0.0
    %v1783 = vld [vmem:[#allocation6] sm:$0xf]
    %v1784 = vld [vmem:[#allocation7 + $0x1c] sm:$0xf]
    %v1786 = vrot.slane %v1784, 4
    %v1788 = vsel %vm104, %v1783, %v1786
    %v1789 = vld [vmem:[#allocation2] sm:$0xff]
    %v1790 = vsel %vm113, %v1789, 0.0
    %v1791 = vsel %vm113, 0.0, %v1789
    %1793 = vrot.lane.b32.xlu0 %v1791, 32
    %v1794 = vpop.permute.xlu0 %1793
    %v1796 = vsel %vm335, %v1790, %v1794
    %v1798 = vsel %vm352, %v1796, 0
    %1800 = vmatprep.subr.mxu0 0.0
    %1801 = vmatpush1.msra.mxu0 %v1773
    %1802 = vmatprep.subr.mxu0 0.0
    %1803 = vmatpush1.msra.mxu0 %v1774
    %1804 = vmatprep.subr.mxu0 0.0
    %1805 = vmatpush1.msra.mxu0 %v1775
    %1806 = vmatprep.subr.mxu0 0.0
    %1807 = vmatpush1.msra.mxu0 %v1776
    %1808 = vmatprep.subr.mxu0 0.0
    %1809 = vmatpush1.msra.mxu0 %v1777
    %1810 = vmatprep.subr.mxu0 0.0
    %1811 = vmatpush1.msra.mxu0 %v1778
    %1812 = vmatprep.subr.mxu0 0.0
    %1813 = vmatpush1.msra.mxu0 %v1779
    %1814 = vmatprep.subr.mxu0 0.0
    %1815 = vmatpush1.msra.mxu0 %v1780
    %1816 = vmatprep.subr.mxu0 0.0
    %1817 = vmatpush1.msra.mxu0 0.0
    %1818 = vmatprep.subr.mxu0 0.0
    %1819 = vmatpush1.msra.mxu0 0.0
    %1820 = vmatprep.subr.mxu0 0.0
    %1821 = vmatpush1.msra.mxu0 0.0
    %1822 = vmatprep.subr.mxu0 0.0
    %1823 = vmatpush1.msra.mxu0 0.0
    %1824 = vmatprep.subr.mxu0 0.0
    %1825 = vmatpush1.msra.mxu0 0.0
    %1826 = vmatprep.subr.mxu0 0.0
    %1827 = vmatpush1.msra.mxu0 0.0
    %1828 = vmatprep.subr.mxu0 0.0
    %1829 = vmatpush1.msra.mxu0 0.0
    %1830 = vmatprep.subr.mxu0 0.0
    %1831 = vmatpush1.msra.mxu0 0.0
    %1832 = vmatprep.subr.mxu0 0.0
    %1833 = vmatpush1.msra.mxu0 0.0
    %1834 = vmatprep.subr.mxu0 0.0
    %1835 = vmatpush1.msra.mxu0 0.0
    %1836 = vmatprep.subr.mxu0 0.0
    %1837 = vmatpush1.msra.mxu0 0.0
    %1838 = vmatprep.subr.mxu0 0.0
    %1839 = vmatpush1.msra.mxu0 0.0
    %1840 = vmatprep.subr.mxu0 0.0
    %1841 = vmatpush1.msra.mxu0 0.0
    %1842 = vmatprep.subr.mxu0 0.0
    %1843 = vmatpush1.msra.mxu0 0.0
    %1844 = vmatprep.subr.mxu0 0.0
    %1845 = vmatpush1.msra.mxu0 0.0
    %1846 = vmatprep.subr.mxu0 0.0
    %1847 = vmatpush1.msra.mxu0 0.0
    %1848 = vmatprep.subr.mxu0 0.0
    %1849 = vmatpush1.msra.mxu0 0.0
    %1850 = vmatprep.subr.mxu0 0.0
    %1851 = vmatpush1.msra.mxu0 0.0
    %1852 = vmatprep.subr.mxu0 0.0
    %1853 = vmatpush1.msra.mxu0 0.0
    %1854 = vmatprep.subr.mxu0 0.0
    %1855 = vmatpush1.msra.mxu0 0.0
    %1856 = vmatprep.subr.mxu0 0.0
    %1857 = vmatpush1.msra.mxu0 0.0
    %1858 = vmatprep.subr.mxu0 0.0
    %1859 = vmatpush1.msra.mxu0 0.0
    %1860 = vmatprep.subr.mxu0 0.0
    %1861 = vmatpush1.msra.mxu0 0.0
    %1862 = vmatprep.subr.mxu0 0.0
    %1863 = vmatpush1.msra.mxu0 0.0
    %1864 = vmatprep.mubr.f32.mxu0 0.0
    %1865 = vmatmul.mubr.f32.gmra.mrb[0].mxu0 %v1798
    %v1866 = vpop.f32.mrb[0].mxu0
    %v1867 = vadd.f32 0.0, %v1866
    %v1868 = vpop.f32.mrb[0].mxu0
    %1869 = vdwg.mxu0
    %v1870 = vadd.f32 %v1788, %v1867
    %v1871 = vtanh.pop %v1870
    %v1872 = vxor.u32 %v1870, 2147483648
    %v1873 = vmul.f32 %v1872, 1.442695
    %v1874 = vpow.pop %v1873
    %v1875 = vadd.f32 %v1874, 1.0
    %v1876 = vrcp.pop %v1875
    %v1877 = vmul.f32 1.0, %v1876
    %v1878 = vsel %vm110, %v1871, %v1877
    %v1879 = vld [vmem:[#allocation3] sm:$0xff]
    %1881 = vrot.lane.b32.xlu0 %v1879, 32
    %v1882 = vpop.permute.xlu0 %1881
    %v1884 = vmul.f32 %v1878, %v1882
    %1886 = vrot.lane.b32.xlu0 %v1878, 64
    %v1887 = vpop.permute.xlu0 %1886
    %v1889 = vmul.f32 %v1878, %v1887
    %1891 = vrot.lane.b32.xlu0 %v1889, 32
    %v1892 = vpop.permute.xlu0 %1891
    %v1894 = vadd.f32 %v1884, %v1892
    %v1895 = vtanh.pop %v1894
    %1897 = vrot.lane.b32.xlu0 %v1895, 64
    %v1898 = vpop.permute.xlu0 %1897
    %v1900 = vmul.f32 %v1878, %v1898
    %1902 = vrot.lane.b32.xlu0 %v1789, 96
    %v1903 = vpop.permute.xlu0 %1902
    %v1905 = vsel %vm463, %v1900, %v1903
    %v1906 = vsel %vm463, %v1894, %v1882
    %1908 = vrot.lane.b32.xlu0 %v1905, 32
    %v1909 = vpop.permute.xlu0 %1908
    %1911 = vst.msk [vmem:[#allocation2] sm:$0xff] %vm335, %v1909
    %1913 = vrot.lane.b32.xlu0 %v1906, 96
    %v1914 = vpop.permute.xlu0 %1913
    %1916 = vst.msk [vmem:[#allocation3] sm:$0xff] %vm335, %v1914
    %v1917 = vld [vmem:[#allocation6 + $0x4] sm:$0xf]
    %v1918 = vld [vmem:[#allocation7 + $0x18] sm:$0xf]
    %v1920 = vrot.slane %v1918, 4
    %v1922 = vsel %vm104, %v1917, %v1920
    %v1923 = vld [vmem:[#allocation2] sm:$0xff]
    %v1924 = vsel %vm113, %v1923, 0.0
    %v1925 = vsel %vm113, 0.0, %v1923
    %1927 = vrot.lane.b32.xlu0 %v1925, 32
    %v1928 = vpop.permute.xlu0 %1927
    %v1930 = vsel %vm335, %v1924, %v1928
    %v1932 = vsel %vm352, %v1930, 0
    %1934 = vmatprep.subr.mxu0 0.0
    %1935 = vmatpush1.msra.mxu0 %v1773
    %1936 = vmatprep.subr.mxu0 0.0
    %1937 = vmatpush1.msra.mxu0 %v1774
    %1938 = vmatprep.subr.mxu0 0.0
    %1939 = vmatpush1.msra.mxu0 %v1775
    %1940 = vmatprep.subr.mxu0 0.0
    %1941 = vmatpush1.msra.mxu0 %v1776
    %1942 = vmatprep.subr.mxu0 0.0
    %1943 = vmatpush1.msra.mxu0 %v1777
    %1944 = vmatprep.subr.mxu0 0.0
    %1945 = vmatpush1.msra.mxu0 %v1778
    %1946 = vmatprep.subr.mxu0 0.0
    %1947 = vmatpush1.msra.mxu0 %v1779
    %1948 = vmatprep.subr.mxu0 0.0
    %1949 = vmatpush1.msra.mxu0 %v1780
    %1950 = vmatprep.subr.mxu0 0.0
    %1951 = vmatpush1.msra.mxu0 0.0
    %1952 = vmatprep.subr.mxu0 0.0
    %1953 = vmatpush1.msra.mxu0 0.0
    %1954 = vmatprep.subr.mxu0 0.0
    %1955 = vmatpush1.msra.mxu0 0.0
    %1956 = vmatprep.subr.mxu0 0.0
    %1957 = vmatpush1.msra.mxu0 0.0
    %1958 = vmatprep.subr.mxu0 0.0
    %1959 = vmatpush1.msra.mxu0 0.0
    %1960 = vmatprep.subr.mxu0 0.0
    %1961 = vmatpush1.msra.mxu0 0.0
    %1962 = vmatprep.subr.mxu0 0.0
    %1963 = vmatpush1.msra.mxu0 0.0
    %1964 = vmatprep.subr.mxu0 0.0
    %1965 = vmatpush1.msra.mxu0 0.0
    %1966 = vmatprep.subr.mxu0 0.0
    %1967 = vmatpush1.msra.mxu0 0.0
    %1968 = vmatprep.subr.mxu0 0.0
    %1969 = vmatpush1.msra.mxu0 0.0
    %1970 = vmatprep.subr.mxu0 0.0
    %1971 = vmatpush1.msra.mxu0 0.0
    %1972 = vmatprep.subr.mxu0 0.0
    %1973 = vmatpush1.msra.mxu0 0.0
    %1974 = vmatprep.subr.mxu0 0.0
    %1975 = vmatpush1.msra.mxu0 0.0
    %1976 = vmatprep.subr.mxu0 0.0
    %1977 = vmatpush1.msra.mxu0 0.0
    %1978 = vmatprep.subr.mxu0 0.0
    %1979 = vmatpush1.msra.mxu0 0.0
    %1980 = vmatprep.subr.mxu0 0.0
    %1981 = vmatpush1.msra.mxu0 0.0
    %1982 = vmatprep.subr.mxu0 0.0
    %1983 = vmatpush1.msra.mxu0 0.0
    %1984 = vmatprep.subr.mxu0 0.0
    %1985 = vmatpush1.msra.mxu0 0.0
    %1986 = vmatprep.subr.mxu0 0.0
    %1987 = vmatpush1.msra.mxu0 0.0
    %1988 = vmatprep.subr.mxu0 0.0
    %1989 = vmatpush1.msra.mxu0 0.0
    %1990 = vmatprep.subr.mxu0 0.0
    %1991 = vmatpush1.msra.mxu0 0.0
    %1992 = vmatprep.subr.mxu0 0.0
    %1993 = vmatpush1.msra.mxu0 0.0
    %1994 = vmatprep.subr.mxu0 0.0
    %1995 = vmatpush1.msra.mxu0 0.0
    %1996 = vmatprep.subr.mxu0 0.0
    %1997 = vmatpush1.msra.mxu0 0.0
    %1998 = vmatprep.mubr.f32.mxu0 0.0
    %1999 = vmatmul.mubr.f32.gmra.mrb[0].mxu0 %v1932
    %v2000 = vpop.f32.mrb[0].mxu0
    %v2001 = vadd.f32 0.0, %v2000
    %v2002 = vpop.f32.mrb[0].mxu0
    %2003 = vdwg.mxu0
    %v2004 = vadd.f32 %v1922, %v2001
    %v2005 = vtanh.pop %v2004
    %v2006 = vxor.u32 %v2004, 2147483648
    %v2007 = vmul.f32 %v2006, 1.442695
    %v2008 = vpow.pop %v2007
    %v2009 = vadd.f32 %v2008, 1.0
    %v2010 = vrcp.pop %v2009
    %v2011 = vmul.f32 1.0, %v2010
    %v2012 = vsel %vm110, %v2005, %v2011
    %v2013 = vld [vmem:[#allocation3] sm:$0xff]
    %2015 = vrot.lane.b32.xlu0 %v2013, 32
    %v2016 = vpop.permute.xlu0 %2015
    %v2018 = vmul.f32 %v2012, %v2016
    %2020 = vrot.lane.b32.xlu0 %v2012, 64
    %v2021 = vpop.permute.xlu0 %2020
    %v2023 = vmul.f32 %v2012, %v2021
    %2025 = vrot.lane.b32.xlu0 %v2023, 32
    %v2026 = vpop.permute.xlu0 %2025
    %v2028 = vadd.f32 %v2018, %v2026
    %v2029 = vtanh.pop %v2028
    %2031 = vrot.lane.b32.xlu0 %v2029, 64
    %v2032 = vpop.permute.xlu0 %2031
    %v2034 = vmul.f32 %v2012, %v2032
    %2036 = vrot.lane.b32.xlu0 %v1923, 96
    %v2037 = vpop.permute.xlu0 %2036
    %v2039 = vsel %vm613, %v2034, %v2037
    %v2040 = vsel %vm613, %v2028, %v2016
    %2042 = vrot.lane.b32.xlu0 %v2039, 32
    %v2043 = vpop.permute.xlu0 %2042
    %2045 = vst.msk [vmem:[#allocation2] sm:$0xff] %vm335, %v2043
    %2047 = vrot.lane.b32.xlu0 %v2040, 96
    %v2048 = vpop.permute.xlu0 %2047
    %2050 = vst.msk [vmem:[#allocation3] sm:$0xff] %vm335, %v2048
    %v2051 = vld [vmem:[#allocation6 + $0x8] sm:$0xf]
    %v2052 = vld [vmem:[#allocation7 + $0x14] sm:$0xf]
    %v2054 = vrot.slane %v2052, 4
    %v2056 = vsel %vm104, %v2051, %v2054
    %v2057 = vld [vmem:[#allocation2] sm:$0xff]
    %v2058 = vsel %vm113, %v2057, 0.0
    %v2059 = vsel %vm113, 0.0, %v2057
    %2061 = vrot.lane.b32.xlu0 %v2059, 32
    %v2062 = vpop.permute.xlu0 %2061
    %v2064 = vsel %vm335, %v2058, %v2062
    %v2066 = vsel %vm352, %v2064, 0
    %2068 = vmatprep.subr.mxu0 0.0
    %2069 = vmatpush1.msra.mxu0 %v1773
    %2070 = vmatprep.subr.mxu0 0.0
    %2071 = vmatpush1.msra.mxu0 %v1774
    %2072 = vmatprep.subr.mxu0 0.0
    %2073 = vmatpush1.msra.mxu0 %v1775
    %2074 = vmatprep.subr.mxu0 0.0
    %2075 = vmatpush1.msra.mxu0 %v1776
    %2076 = vmatprep.subr.mxu0 0.0
    %2077 = vmatpush1.msra.mxu0 %v1777
    %2078 = vmatprep.subr.mxu0 0.0
    %2079 = vmatpush1.msra.mxu0 %v1778
    %2080 = vmatprep.subr.mxu0 0.0
    %2081 = vmatpush1.msra.mxu0 %v1779
    %2082 = vmatprep.subr.mxu0 0.0
    %2083 = vmatpush1.msra.mxu0 %v1780
    %2084 = vmatprep.subr.mxu0 0.0
    %2085 = vmatpush1.msra.mxu0 0.0
    %2086 = vmatprep.subr.mxu0 0.0
    %2087 = vmatpush1.msra.mxu0 0.0
    %2088 = vmatprep.subr.mxu0 0.0
    %2089 = vmatpush1.msra.mxu0 0.0
    %2090 = vmatprep.subr.mxu0 0.0
    %2091 = vmatpush1.msra.mxu0 0.0
    %2092 = vmatprep.subr.mxu0 0.0
    %2093 = vmatpush1.msra.mxu0 0.0
    %2094 = vmatprep.subr.mxu0 0.0
    %2095 = vmatpush1.msra.mxu0 0.0
    %2096 = vmatprep.subr.mxu0 0.0
    %2097 = vmatpush1.msra.mxu0 0.0
    %2098 = vmatprep.subr.mxu0 0.0
    %2099 = vmatpush1.msra.mxu0 0.0
    %2100 = vmatprep.subr.mxu0 0.0
    %2101 = vmatpush1.msra.mxu0 0.0
    %2102 = vmatprep.subr.mxu0 0.0
    %2103 = vmatpush1.msra.mxu0 0.0
    %2104 = vmatprep.subr.mxu0 0.0
    %2105 = vmatpush1.msra.mxu0 0.0
    %2106 = vmatprep.subr.mxu0 0.0
    %2107 = vmatpush1.msra.mxu0 0.0
    %2108 = vmatprep.subr.mxu0 0.0
    %2109 = vmatpush1.msra.mxu0 0.0
    %2110 = vmatprep.subr.mxu0 0.0
    %2111 = vmatpush1.msra.mxu0 0.0
    %2112 = vmatprep.subr.mxu0 0.0
    %2113 = vmatpush1.msra.mxu0 0.0
    %2114 = vmatprep.subr.mxu0 0.0
    %2115 = vmatpush1.msra.mxu0 0.0
    %2116 = vmatprep.subr.mxu0 0.0
    %2117 = vmatpush1.msra.mxu0 0.0
    %2118 = vmatprep.subr.mxu0 0.0
    %2119 = vmatpush1.msra.mxu0 0.0
    %2120 = vmatprep.subr.mxu0 0.0
    %2121 = vmatpush1.msra.mxu0 0.0
    %2122 = vmatprep.subr.mxu0 0.0
    %2123 = vmatpush1.msra.mxu0 0.0
    %2124 = vmatprep.subr.mxu0 0.0
    %2125 = vmatpush1.msra.mxu0 0.0
    %2126 = vmatprep.subr.mxu0 0.0
    %2127 = vmatpush1.msra.mxu0 0.0
    %2128 = vmatprep.subr.mxu0 0.0
    %2129 = vmatpush1.msra.mxu0 0.0
    %2130 = vmatprep.subr.mxu0 0.0
    %2131 = vmatpush1.msra.mxu0 0.0
    %2132 = vmatprep.mubr.f32.mxu0 0.0
    %2133 = vmatmul.mubr.f32.gmra.mrb[0].mxu0 %v2066
    %v2134 = vpop.f32.mrb[0].mxu0
    %v2135 = vadd.f32 0.0, %v2134
    %v2136 = vpop.f32.mrb[0].mxu0
    %2137 = vdwg.mxu0
    %v2138 = vadd.f32 %v2056, %v2135
    %v2139 = vtanh.pop %v2138
    %v2140 = vxor.u32 %v2138, 2147483648
    %v2141 = vmul.f32 %v2140, 1.442695
    %v2142 = vpow.pop %v2141
    %v2143 = vadd.f32 %v2142, 1.0
    %v2144 = vrcp.pop %v2143
    %v2145 = vmul.f32 1.0, %v2144
    %v2146 = vsel %vm110, %v2139, %v2145
    %v2147 = vld [vmem:[#allocation3] sm:$0xff]
    %2149 = vrot.lane.b32.xlu0 %v2147, 32
    %v2150 = vpop.permute.xlu0 %2149
    %v2152 = vmul.f32 %v2146, %v2150
    %2154 = vrot.lane.b32.xlu0 %v2146, 64
    %v2155 = vpop.permute.xlu0 %2154
    %v2157 = vmul.f32 %v2146, %v2155
    %2159 = vrot.lane.b32.xlu0 %v2157, 32
    %v2160 = vpop.permute.xlu0 %2159
    %v2162 = vadd.f32 %v2152, %v2160
    %v2163 = vtanh.pop %v2162
    %2165 = vrot.lane.b32.xlu0 %v2163, 64
    %v2166 = vpop.permute.xlu0 %2165
    %v2168 = vmul.f32 %v2146, %v2166
    %2170 = vrot.lane.b32.xlu0 %v2057, 96
    %v2171 = vpop.permute.xlu0 %2170
    %v2173 = vsel %vm761, %v2168, %v2171
    %v2174 = vsel %vm761, %v2162, %v2150
    %2176 = vrot.lane.b32.xlu0 %v2173, 32
    %v2177 = vpop.permute.xlu0 %2176
    %2179 = vst.msk [vmem:[#allocation2] sm:$0xff] %vm335, %v2177
    %2181 = vrot.lane.b32.xlu0 %v2174, 96
    %v2182 = vpop.permute.xlu0 %2181
    %2184 = vst.msk [vmem:[#allocation3] sm:$0xff] %vm335, %v2182
    %v2185 = vld [vmem:[#allocation6 + $0xc] sm:$0xf]
    %v2186 = vld [vmem:[#allocation7 + $0x10] sm:$0xf]
    %v2188 = vrot.slane %v2186, 4
    %v2190 = vsel %vm104, %v2185, %v2188
    %v2191 = vld [vmem:[#allocation2] sm:$0xff]
    %v2192 = vsel %vm113, %v2191, 0.0
    %v2193 = vsel %vm113, 0.0, %v2191
    %2195 = vrot.lane.b32.xlu0 %v2193, 32
    %v2196 = vpop.permute.xlu0 %2195
    %v2198 = vsel %vm335, %v2192, %v2196
    %v2200 = vsel %vm352, %v2198, 0
    %2202 = vmatprep.subr.mxu0 0.0
    %2203 = vmatpush1.msra.mxu0 %v1773
    %2204 = vmatprep.subr.mxu0 0.0
    %2205 = vmatpush1.msra.mxu0 %v1774
    %2206 = vmatprep.subr.mxu0 0.0
    %2207 = vmatpush1.msra.mxu0 %v1775
    %2208 = vmatprep.subr.mxu0 0.0
    %2209 = vmatpush1.msra.mxu0 %v1776
    %2210 = vmatprep.subr.mxu0 0.0
    %2211 = vmatpush1.msra.mxu0 %v1777
    %2212 = vmatprep.subr.mxu0 0.0
    %2213 = vmatpush1.msra.mxu0 %v1778
    %2214 = vmatprep.subr.mxu0 0.0
    %2215 = vmatpush1.msra.mxu0 %v1779
    %2216 = vmatprep.subr.mxu0 0.0
    %2217 = vmatpush1.msra.mxu0 %v1780
    %2218 = vmatprep.subr.mxu0 0.0
    %2219 = vmatpush1.msra.mxu0 0.0
    %2220 = vmatprep.subr.mxu0 0.0
    %2221 = vmatpush1.msra.mxu0 0.0
    %2222 = vmatprep.subr.mxu0 0.0
    %2223 = vmatpush1.msra.mxu0 0.0
    %2224 = vmatprep.subr.mxu0 0.0
    %2225 = vmatpush1.msra.mxu0 0.0
    %2226 = vmatprep.subr.mxu0 0.0
    %2227 = vmatpush1.msra.mxu0 0.0
    %2228 = vmatprep.subr.mxu0 0.0
    %2229 = vmatpush1.msra.mxu0 0.0
    %2230 = vmatprep.subr.mxu0 0.0
    %2231 = vmatpush1.msra.mxu0 0.0
    %2232 = vmatprep.subr.mxu0 0.0
    %2233 = vmatpush1.msra.mxu0 0.0
    %2234 = vmatprep.subr.mxu0 0.0
    %2235 = vmatpush1.msra.mxu0 0.0
    %2236 = vmatprep.subr.mxu0 0.0
    %2237 = vmatpush1.msra.mxu0 0.0
    %2238 = vmatprep.subr.mxu0 0.0
    %2239 = vmatpush1.msra.mxu0 0.0
    %2240 = vmatprep.subr.mxu0 0.0
    %2241 = vmatpush1.msra.mxu0 0.0
    %2242 = vmatprep.subr.mxu0 0.0
    %2243 = vmatpush1.msra.mxu0 0.0
    %2244 = vmatprep.subr.mxu0 0.0
    %2245 = vmatpush1.msra.mxu0 0.0
    %2246 = vmatprep.subr.mxu0 0.0
    %2247 = vmatpush1.msra.mxu0 0.0
    %2248 = vmatprep.subr.mxu0 0.0
    %2249 = vmatpush1.msra.mxu0 0.0
    %2250 = vmatprep.subr.mxu0 0.0
    %2251 = vmatpush1.msra.mxu0 0.0
    %2252 = vmatprep.subr.mxu0 0.0
    %2253 = vmatpush1.msra.mxu0 0.0
    %2254 = vmatprep.subr.mxu0 0.0
    %2255 = vmatpush1.msra.mxu0 0.0
    %2256 = vmatprep.subr.mxu0 0.0
    %2257 = vmatpush1.msra.mxu0 0.0
    %2258 = vmatprep.subr.mxu0 0.0
    %2259 = vmatpush1.msra.mxu0 0.0
    %2260 = vmatprep.subr.mxu0 0.0
    %2261 = vmatpush1.msra.mxu0 0.0
    %2262 = vmatprep.subr.mxu0 0.0
    %2263 = vmatpush1.msra.mxu0 0.0
    %2264 = vmatprep.subr.mxu0 0.0
    %2265 = vmatpush1.msra.mxu0 0.0
    %2266 = vmatprep.mubr.f32.mxu0 0.0
    %2267 = vmatmul.mubr.f32.gmra.mrb[0].mxu0 %v2200
    %v2268 = vpop.f32.mrb[0].mxu0
    %v2269 = vadd.f32 0.0, %v2268
    %v2270 = vpop.f32.mrb[0].mxu0
    %2271 = vdwg.mxu0
    %v2272 = vadd.f32 %v2190, %v2269
    %v2273 = vtanh.pop %v2272
    %v2274 = vxor.u32 %v2272, 2147483648
    %v2275 = vmul.f32 %v2274, 1.442695
    %v2276 = vpow.pop %v2275
    %v2277 = vadd.f32 %v2276, 1.0
    %v2278 = vrcp.pop %v2277
    %v2279 = vmul.f32 1.0, %v2278
    %v2280 = vsel %vm110, %v2273, %v2279
    %v2281 = vld [vmem:[#allocation3] sm:$0xff]
    %2283 = vrot.lane.b32.xlu0 %v2281, 32
    %v2284 = vpop.permute.xlu0 %2283
    %v2286 = vmul.f32 %v2280, %v2284
    %2288 = vrot.lane.b32.xlu0 %v2280, 64
    %v2289 = vpop.permute.xlu0 %2288
    %v2291 = vmul.f32 %v2280, %v2289
    %2293 = vrot.lane.b32.xlu0 %v2291, 32
    %v2294 = vpop.permute.xlu0 %2293
    %v2296 = vadd.f32 %v2286, %v2294
    %v2297 = vtanh.pop %v2296
    %2299 = vrot.lane.b32.xlu0 %v2297, 64
    %v2300 = vpop.permute.xlu0 %2299
    %v2302 = vmul.f32 %v2280, %v2300
    %2304 = vrot.lane.b32.xlu0 %v2191, 96
    %v2305 = vpop.permute.xlu0 %2304
    %v2307 = vsel %vm909, %v2302, %v2305
    %v2308 = vsel %vm909, %v2296, %v2284
    %2310 = vrot.lane.b32.xlu0 %v2307, 32
    %v2311 = vpop.permute.xlu0 %2310
    %2313 = vst.msk [vmem:[#allocation2] sm:$0xff] %vm335, %v2311
    %2315 = vrot.lane.b32.xlu0 %v2308, 96
    %v2316 = vpop.permute.xlu0 %2315
    %2318 = vst.msk [vmem:[#allocation3] sm:$0xff] %vm335, %v2316
    %v2319 = vld [vmem:[#allocation6 + $0x10] sm:$0xf]
    %v2320 = vld [vmem:[#allocation7 + $0xc] sm:$0xf]
    %v2322 = vrot.slane %v2320, 4
    %v2324 = vsel %vm104, %v2319, %v2322
    %v2325 = vld [vmem:[#allocation2] sm:$0xff]
    %v2326 = vsel %vm113, %v2325, 0.0
    %v2327 = vsel %vm113, 0.0, %v2325
    %2329 = vrot.lane.b32.xlu0 %v2327, 32
    %v2330 = vpop.permute.xlu0 %2329
    %v2332 = vsel %vm335, %v2326, %v2330
    %v2334 = vsel %vm352, %v2332, 0
    %2336 = vmatprep.subr.mxu0 0.0
    %2337 = vmatpush1.msra.mxu0 %v1773
    %2338 = vmatprep.subr.mxu0 0.0
    %2339 = vmatpush1.msra.mxu0 %v1774
    %2340 = vmatprep.subr.mxu0 0.0
    %2341 = vmatpush1.msra.mxu0 %v1775
    %2342 = vmatprep.subr.mxu0 0.0
    %2343 = vmatpush1.msra.mxu0 %v1776
    %2344 = vmatprep.subr.mxu0 0.0
    %2345 = vmatpush1.msra.mxu0 %v1777
    %2346 = vmatprep.subr.mxu0 0.0
    %2347 = vmatpush1.msra.mxu0 %v1778
    %2348 = vmatprep.subr.mxu0 0.0
    %2349 = vmatpush1.msra.mxu0 %v1779
    %2350 = vmatprep.subr.mxu0 0.0
    %2351 = vmatpush1.msra.mxu0 %v1780
    %2352 = vmatprep.subr.mxu0 0.0
    %2353 = vmatpush1.msra.mxu0 0.0
    %2354 = vmatprep.subr.mxu0 0.0
    %2355 = vmatpush1.msra.mxu0 0.0
    %2356 = vmatprep.subr.mxu0 0.0
    %2357 = vmatpush1.msra.mxu0 0.0
    %2358 = vmatprep.subr.mxu0 0.0
    %2359 = vmatpush1.msra.mxu0 0.0
    %2360 = vmatprep.subr.mxu0 0.0
    %2361 = vmatpush1.msra.mxu0 0.0
    %2362 = vmatprep.subr.mxu0 0.0
    %2363 = vmatpush1.msra.mxu0 0.0
    %2364 = vmatprep.subr.mxu0 0.0
    %2365 = vmatpush1.msra.mxu0 0.0
    %2366 = vmatprep.subr.mxu0 0.0
    %2367 = vmatpush1.msra.mxu0 0.0
    %2368 = vmatprep.subr.mxu0 0.0
    %2369 = vmatpush1.msra.mxu0 0.0
    %2370 = vmatprep.subr.mxu0 0.0
    %2371 = vmatpush1.msra.mxu0 0.0
    %2372 = vmatprep.subr.mxu0 0.0
    %2373 = vmatpush1.msra.mxu0 0.0
    %2374 = vmatprep.subr.mxu0 0.0
    %2375 = vmatpush1.msra.mxu0 0.0
    %2376 = vmatprep.subr.mxu0 0.0
    %2377 = vmatpush1.msra.mxu0 0.0
    %2378 = vmatprep.subr.mxu0 0.0
    %2379 = vmatpush1.msra.mxu0 0.0
    %2380 = vmatprep.subr.mxu0 0.0
    %2381 = vmatpush1.msra.mxu0 0.0
    %2382 = vmatprep.subr.mxu0 0.0
    %2383 = vmatpush1.msra.mxu0 0.0
    %2384 = vmatprep.subr.mxu0 0.0
    %2385 = vmatpush1.msra.mxu0 0.0
    %2386 = vmatprep.subr.mxu0 0.0
    %2387 = vmatpush1.msra.mxu0 0.0
    %2388 = vmatprep.subr.mxu0 0.0
    %2389 = vmatpush1.msra.mxu0 0.0
    %2390 = vmatprep.subr.mxu0 0.0
    %2391 = vmatpush1.msra.mxu0 0.0
    %2392 = vmatprep.subr.mxu0 0.0
    %2393 = vmatpush1.msra.mxu0 0.0
    %2394 = vmatprep.subr.mxu0 0.0
    %2395 = vmatpush1.msra.mxu0 0.0
    %2396 = vmatprep.subr.mxu0 0.0
    %2397 = vmatpush1.msra.mxu0 0.0
    %2398 = vmatprep.subr.mxu0 0.0
    %2399 = vmatpush1.msra.mxu0 0.0
    %2400 = vmatprep.mubr.f32.mxu0 0.0
    %2401 = vmatmul.mubr.f32.gmra.mrb[0].mxu0 %v2334
    %v2402 = vpop.f32.mrb[0].mxu0
    %v2403 = vadd.f32 0.0, %v2402
    %v2404 = vpop.f32.mrb[0].mxu0
    %2405 = vdwg.mxu0
    %v2406 = vadd.f32 %v2324, %v2403
    %v2407 = vtanh.pop %v2406
    %v2408 = vxor.u32 %v2406, 2147483648
    %v2409 = vmul.f32 %v2408, 1.442695
    %v2410 = vpow.pop %v2409
    %v2411 = vadd.f32 %v2410, 1.0
    %v2412 = vrcp.pop %v2411
    %v2413 = vmul.f32 1.0, %v2412
    %v2414 = vsel %vm110, %v2407, %v2413
    %v2415 = vld [vmem:[#allocation3] sm:$0xff]
    %2417 = vrot.lane.b32.xlu0 %v2415, 32
    %v2418 = vpop.permute.xlu0 %2417
    %v2420 = vmul.f32 %v2414, %v2418
    %2422 = vrot.lane.b32.xlu0 %v2414, 64
    %v2423 = vpop.permute.xlu0 %2422
    %v2425 = vmul.f32 %v2414, %v2423
    %2427 = vrot.lane.b32.xlu0 %v2425, 32
    %v2428 = vpop.permute.xlu0 %2427
    %v2430 = vadd.f32 %v2420, %v2428
    %v2431 = vtanh.pop %v2430
    %2433 = vrot.lane.b32.xlu0 %v2431, 64
    %v2434 = vpop.permute.xlu0 %2433
    %v2436 = vmul.f32 %v2414, %v2434
    %2438 = vrot.lane.b32.xlu0 %v2325, 96
    %v2439 = vpop.permute.xlu0 %2438
    %v2441 = vsel %vm1057, %v2436, %v2439
    %v2442 = vsel %vm1057, %v2430, %v2418
    %2444 = vrot.lane.b32.xlu0 %v2441, 32
    %v2445 = vpop.permute.xlu0 %2444
    %2447 = vst.msk [vmem:[#allocation2] sm:$0xff] %vm335, %v2445
    %2449 = vrot.lane.b32.xlu0 %v2442, 96
    %v2450 = vpop.permute.xlu0 %2449
    %2452 = vst.msk [vmem:[#allocation3] sm:$0xff] %vm335, %v2450
    %v2453 = vld [vmem:[#allocation6 + $0x14] sm:$0xf]
    %v2454 = vld [vmem:[#allocation7 + $0x8] sm:$0xf]
    %v2456 = vrot.slane %v2454, 4
    %v2458 = vsel %vm104, %v2453, %v2456
    %v2459 = vld [vmem:[#allocation2] sm:$0xff]
    %v2460 = vsel %vm113, %v2459, 0.0
    %v2461 = vsel %vm113, 0.0, %v2459
    %2463 = vrot.lane.b32.xlu0 %v2461, 32
    %v2464 = vpop.permute.xlu0 %2463
    %v2466 = vsel %vm335, %v2460, %v2464
    %v2468 = vsel %vm352, %v2466, 0
    %2470 = vmatprep.subr.mxu0 0.0
    %2471 = vmatpush1.msra.mxu0 %v1773
    %2472 = vmatprep.subr.mxu0 0.0
    %2473 = vmatpush1.msra.mxu0 %v1774
    %2474 = vmatprep.subr.mxu0 0.0
    %2475 = vmatpush1.msra.mxu0 %v1775
    %2476 = vmatprep.subr.mxu0 0.0
    %2477 = vmatpush1.msra.mxu0 %v1776
    %2478 = vmatprep.subr.mxu0 0.0
    %2479 = vmatpush1.msra.mxu0 %v1777
    %2480 = vmatprep.subr.mxu0 0.0
    %2481 = vmatpush1.msra.mxu0 %v1778
    %2482 = vmatprep.subr.mxu0 0.0
    %2483 = vmatpush1.msra.mxu0 %v1779
    %2484 = vmatprep.subr.mxu0 0.0
    %2485 = vmatpush1.msra.mxu0 %v1780
    %2486 = vmatprep.subr.mxu0 0.0
    %2487 = vmatpush1.msra.mxu0 0.0
    %2488 = vmatprep.subr.mxu0 0.0
    %2489 = vmatpush1.msra.mxu0 0.0
    %2490 = vmatprep.subr.mxu0 0.0
    %2491 = vmatpush1.msra.mxu0 0.0
    %2492 = vmatprep.subr.mxu0 0.0
    %2493 = vmatpush1.msra.mxu0 0.0
    %2494 = vmatprep.subr.mxu0 0.0
    %2495 = vmatpush1.msra.mxu0 0.0
    %2496 = vmatprep.subr.mxu0 0.0
    %2497 = vmatpush1.msra.mxu0 0.0
    %2498 = vmatprep.subr.mxu0 0.0
    %2499 = vmatpush1.msra.mxu0 0.0
    %2500 = vmatprep.subr.mxu0 0.0
    %2501 = vmatpush1.msra.mxu0 0.0
    %2502 = vmatprep.subr.mxu0 0.0
    %2503 = vmatpush1.msra.mxu0 0.0
    %2504 = vmatprep.subr.mxu0 0.0
    %2505 = vmatpush1.msra.mxu0 0.0
    %2506 = vmatprep.subr.mxu0 0.0
    %2507 = vmatpush1.msra.mxu0 0.0
    %2508 = vmatprep.subr.mxu0 0.0
    %2509 = vmatpush1.msra.mxu0 0.0
    %2510 = vmatprep.subr.mxu0 0.0
    %2511 = vmatpush1.msra.mxu0 0.0
    %2512 = vmatprep.subr.mxu0 0.0
    %2513 = vmatpush1.msra.mxu0 0.0
    %2514 = vmatprep.subr.mxu0 0.0
    %2515 = vmatpush1.msra.mxu0 0.0
    %2516 = vmatprep.subr.mxu0 0.0
    %2517 = vmatpush1.msra.mxu0 0.0
    %2518 = vmatprep.subr.mxu0 0.0
    %2519 = vmatpush1.msra.mxu0 0.0
    %2520 = vmatprep.subr.mxu0 0.0
    %2521 = vmatpush1.msra.mxu0 0.0
    %2522 = vmatprep.subr.mxu0 0.0
    %2523 = vmatpush1.msra.mxu0 0.0
    %2524 = vmatprep.subr.mxu0 0.0
    %2525 = vmatpush1.msra.mxu0 0.0
    %2526 = vmatprep.subr.mxu0 0.0
    %2527 = vmatpush1.msra.mxu0 0.0
    %2528 = vmatprep.subr.mxu0 0.0
    %2529 = vmatpush1.msra.mxu0 0.0
    %2530 = vmatprep.subr.mxu0 0.0
    %2531 = vmatpush1.msra.mxu0 0.0
    %2532 = vmatprep.subr.mxu0 0.0
    %2533 = vmatpush1.msra.mxu0 0.0
    %2534 = vmatprep.mubr.f32.mxu0 0.0
    %2535 = vmatmul.mubr.f32.gmra.mrb[0].mxu0 %v2468
    %v2536 = vpop.f32.mrb[0].mxu0
    %v2537 = vadd.f32 0.0, %v2536
    %v2538 = vpop.f32.mrb[0].mxu0
    %2539 = vdwg.mxu0
    %v2540 = vadd.f32 %v2458, %v2537
    %v2541 = vtanh.pop %v2540
    %v2542 = vxor.u32 %v2540, 2147483648
    %v2543 = vmul.f32 %v2542, 1.442695
    %v2544 = vpow.pop %v2543
    %v2545 = vadd.f32 %v2544, 1.0
    %v2546 = vrcp.pop %v2545
    %v2547 = vmul.f32 1.0, %v2546
    %v2548 = vsel %vm110, %v2541, %v2547
    %v2549 = vld [vmem:[#allocation3] sm:$0xff]
    %2551 = vrot.lane.b32.xlu0 %v2549, 32
    %v2552 = vpop.permute.xlu0 %2551
    %v2554 = vmul.f32 %v2548, %v2552
    %2556 = vrot.lane.b32.xlu0 %v2548, 64
    %v2557 = vpop.permute.xlu0 %2556
    %v2559 = vmul.f32 %v2548, %v2557
    %2561 = vrot.lane.b32.xlu0 %v2559, 32
    %v2562 = vpop.permute.xlu0 %2561
    %v2564 = vadd.f32 %v2554, %v2562
    %v2565 = vtanh.pop %v2564
    %2567 = vrot.lane.b32.xlu0 %v2565, 64
    %v2568 = vpop.permute.xlu0 %2567
    %v2570 = vmul.f32 %v2548, %v2568
    %2572 = vrot.lane.b32.xlu0 %v2459, 96
    %v2573 = vpop.permute.xlu0 %2572
    %v2575 = vsel %vm1205, %v2570, %v2573
    %v2576 = vsel %vm1205, %v2564, %v2552
    %2578 = vrot.lane.b32.xlu0 %v2575, 32
    %v2579 = vpop.permute.xlu0 %2578
    %2581 = vst.msk [vmem:[#allocation2] sm:$0xff] %vm335, %v2579
    %2583 = vrot.lane.b32.xlu0 %v2576, 96
    %v2584 = vpop.permute.xlu0 %2583
    %2586 = vst.msk [vmem:[#allocation3] sm:$0xff] %vm335, %v2584
    %v2587 = vld [vmem:[#allocation6 + $0x18] sm:$0xf]
    %v2588 = vld [vmem:[#allocation7 + $0x4] sm:$0xf]
    %v2590 = vrot.slane %v2588, 4
    %v2592 = vsel %vm104, %v2587, %v2590
    %v2593 = vld [vmem:[#allocation2] sm:$0xff]
    %v2594 = vsel %vm113, %v2593, 0.0
    %v2595 = vsel %vm113, 0.0, %v2593
    %2597 = vrot.lane.b32.xlu0 %v2595, 32
    %v2598 = vpop.permute.xlu0 %2597
    %v2600 = vsel %vm335, %v2594, %v2598
    %v2602 = vsel %vm352, %v2600, 0
    %2604 = vmatprep.subr.mxu0 0.0
    %2605 = vmatpush1.msra.mxu0 %v1773
    %2606 = vmatprep.subr.mxu0 0.0
    %2607 = vmatpush1.msra.mxu0 %v1774
    %2608 = vmatprep.subr.mxu0 0.0
    %2609 = vmatpush1.msra.mxu0 %v1775
    %2610 = vmatprep.subr.mxu0 0.0
    %2611 = vmatpush1.msra.mxu0 %v1776
    %2612 = vmatprep.subr.mxu0 0.0
    %2613 = vmatpush1.msra.mxu0 %v1777
    %2614 = vmatprep.subr.mxu0 0.0
    %2615 = vmatpush1.msra.mxu0 %v1778
    %2616 = vmatprep.subr.mxu0 0.0
    %2617 = vmatpush1.msra.mxu0 %v1779
    %2618 = vmatprep.subr.mxu0 0.0
    %2619 = vmatpush1.msra.mxu0 %v1780
    %2620 = vmatprep.subr.mxu0 0.0
    %2621 = vmatpush1.msra.mxu0 0.0
    %2622 = vmatprep.subr.mxu0 0.0
    %2623 = vmatpush1.msra.mxu0 0.0
    %2624 = vmatprep.subr.mxu0 0.0
    %2625 = vmatpush1.msra.mxu0 0.0
    %2626 = vmatprep.subr.mxu0 0.0
    %2627 = vmatpush1.msra.mxu0 0.0
    %2628 = vmatprep.subr.mxu0 0.0
    %2629 = vmatpush1.msra.mxu0 0.0
    %2630 = vmatprep.subr.mxu0 0.0
    %2631 = vmatpush1.msra.mxu0 0.0
    %2632 = vmatprep.subr.mxu0 0.0
    %2633 = vmatpush1.msra.mxu0 0.0
    %2634 = vmatprep.subr.mxu0 0.0
    %2635 = vmatpush1.msra.mxu0 0.0
    %2636 = vmatprep.subr.mxu0 0.0
    %2637 = vmatpush1.msra.mxu0 0.0
    %2638 = vmatprep.subr.mxu0 0.0
    %2639 = vmatpush1.msra.mxu0 0.0
    %2640 = vmatprep.subr.mxu0 0.0
    %2641 = vmatpush1.msra.mxu0 0.0
    %2642 = vmatprep.subr.mxu0 0.0
    %2643 = vmatpush1.msra.mxu0 0.0
    %2644 = vmatprep.subr.mxu0 0.0
    %2645 = vmatpush1.msra.mxu0 0.0
    %2646 = vmatprep.subr.mxu0 0.0
    %2647 = vmatpush1.msra.mxu0 0.0
    %2648 = vmatprep.subr.mxu0 0.0
    %2649 = vmatpush1.msra.mxu0 0.0
    %2650 = vmatprep.subr.mxu0 0.0
    %2651 = vmatpush1.msra.mxu0 0.0
    %2652 = vmatprep.subr.mxu0 0.0
    %2653 = vmatpush1.msra.mxu0 0.0
    %2654 = vmatprep.subr.mxu0 0.0
    %2655 = vmatpush1.msra.mxu0 0.0
    %2656 = vmatprep.subr.mxu0 0.0
    %2657 = vmatpush1.msra.mxu0 0.0
    %2658 = vmatprep.subr.mxu0 0.0
    %2659 = vmatpush1.msra.mxu0 0.0
    %2660 = vmatprep.subr.mxu0 0.0
    %2661 = vmatpush1.msra.mxu0 0.0
    %2662 = vmatprep.subr.mxu0 0.0
    %2663 = vmatpush1.msra.mxu0 0.0
    %2664 = vmatprep.subr.mxu0 0.0
    %2665 = vmatpush1.msra.mxu0 0.0
    %2666 = vmatprep.subr.mxu0 0.0
    %2667 = vmatpush1.msra.mxu0 0.0
    %2668 = vmatprep.mubr.f32.mxu0 0.0
    %2669 = vmatmul.mubr.f32.gmra.mrb[0].mxu0 %v2602
    %v2670 = vpop.f32.mrb[0].mxu0
    %v2671 = vadd.f32 0.0, %v2670
    %v2672 = vpop.f32.mrb[0].mxu0
    %2673 = vdwg.mxu0
    %v2674 = vadd.f32 %v2592, %v2671
    %v2675 = vtanh.pop %v2674
    %v2676 = vxor.u32 %v2674, 2147483648
    %v2677 = vmul.f32 %v2676, 1.442695
    %v2678 = vpow.pop %v2677
    %v2679 = vadd.f32 %v2678, 1.0
    %v2680 = vrcp.pop %v2679
    %v2681 = vmul.f32 1.0, %v2680
    %v2682 = vsel %vm110, %v2675, %v2681
    %v2683 = vld [vmem:[#allocation3] sm:$0xff]
    %2685 = vrot.lane.b32.xlu0 %v2683, 32
    %v2686 = vpop.permute.xlu0 %2685
    %v2688 = vmul.f32 %v2682, %v2686
    %2690 = vrot.lane.b32.xlu0 %v2682, 64
    %v2691 = vpop.permute.xlu0 %2690
    %v2693 = vmul.f32 %v2682, %v2691
    %2695 = vrot.lane.b32.xlu0 %v2693, 32
    %v2696 = vpop.permute.xlu0 %2695
    %v2698 = vadd.f32 %v2688, %v2696
    %v2699 = vtanh.pop %v2698
    %2701 = vrot.lane.b32.xlu0 %v2699, 64
    %v2702 = vpop.permute.xlu0 %2701
    %v2704 = vmul.f32 %v2682, %v2702
    %2706 = vrot.lane.b32.xlu0 %v2593, 96
    %v2707 = vpop.permute.xlu0 %2706
    %v2709 = vsel %vm1353, %v2704, %v2707
    %v2710 = vsel %vm1353, %v2698, %v2686
    %2712 = vrot.lane.b32.xlu0 %v2709, 32
    %v2713 = vpop.permute.xlu0 %2712
    %2715 = vst.msk [vmem:[#allocation2] sm:$0xff] %vm335, %v2713
    %2717 = vrot.lane.b32.xlu0 %v2710, 96
    %v2718 = vpop.permute.xlu0 %2717
    %2720 = vst.msk [vmem:[#allocation3] sm:$0xff] %vm335, %v2718
    %v2721 = vld [vmem:[#allocation6 + $0x1c] sm:$0xf]
    %v2722 = vld [vmem:[#allocation7] sm:$0xf]
    %v2724 = vrot.slane %v2722, 4
    %v2726 = vsel %vm104, %v2721, %v2724
    %v2727 = vld [vmem:[#allocation2] sm:$0xff]
    %v2728 = vsel %vm113, %v2727, 0.0
    %v2729 = vsel %vm113, 0.0, %v2727
    %2731 = vrot.lane.b32.xlu0 %v2729, 32
    %v2732 = vpop.permute.xlu0 %2731
    %v2734 = vsel %vm335, %v2728, %v2732
    %v2736 = vsel %vm352, %v2734, 0
    %2738 = vmatprep.subr.mxu0 0.0
    %2739 = vmatpush1.msra.mxu0 %v1773
    %2740 = vmatprep.subr.mxu0 0.0
    %2741 = vmatpush1.msra.mxu0 %v1774
    %2742 = vmatprep.subr.mxu0 0.0
    %2743 = vmatpush1.msra.mxu0 %v1775
    %2744 = vmatprep.subr.mxu0 0.0
    %2745 = vmatpush1.msra.mxu0 %v1776
    %2746 = vmatprep.subr.mxu0 0.0
    %2747 = vmatpush1.msra.mxu0 %v1777
    %2748 = vmatprep.subr.mxu0 0.0
    %2749 = vmatpush1.msra.mxu0 %v1778
    %2750 = vmatprep.subr.mxu0 0.0
    %2751 = vmatpush1.msra.mxu0 %v1779
    %2752 = vmatprep.subr.mxu0 0.0
    %2753 = vmatpush1.msra.mxu0 %v1780
    %2754 = vmatprep.subr.mxu0 0.0
    %2755 = vmatpush1.msra.mxu0 0.0
    %2756 = vmatprep.subr.mxu0 0.0
    %2757 = vmatpush1.msra.mxu0 0.0
    %2758 = vmatprep.subr.mxu0 0.0
    %2759 = vmatpush1.msra.mxu0 0.0
    %2760 = vmatprep.subr.mxu0 0.0
    %2761 = vmatpush1.msra.mxu0 0.0
    %2762 = vmatprep.subr.mxu0 0.0
    %2763 = vmatpush1.msra.mxu0 0.0
    %2764 = vmatprep.subr.mxu0 0.0
    %2765 = vmatpush1.msra.mxu0 0.0
    %2766 = vmatprep.subr.mxu0 0.0
    %2767 = vmatpush1.msra.mxu0 0.0
    %2768 = vmatprep.subr.mxu0 0.0
    %2769 = vmatpush1.msra.mxu0 0.0
    %2770 = vmatprep.subr.mxu0 0.0
    %2771 = vmatpush1.msra.mxu0 0.0
    %2772 = vmatprep.subr.mxu0 0.0
    %2773 = vmatpush1.msra.mxu0 0.0
    %2774 = vmatprep.subr.mxu0 0.0
    %2775 = vmatpush1.msra.mxu0 0.0
    %2776 = vmatprep.subr.mxu0 0.0
    %2777 = vmatpush1.msra.mxu0 0.0
    %2778 = vmatprep.subr.mxu0 0.0
    %2779 = vmatpush1.msra.mxu0 0.0
    %2780 = vmatprep.subr.mxu0 0.0
    %2781 = vmatpush1.msra.mxu0 0.0
    %2782 = vmatprep.subr.mxu0 0.0
    %2783 = vmatpush1.msra.mxu0 0.0
    %2784 = vmatprep.subr.mxu0 0.0
    %2785 = vmatpush1.msra.mxu0 0.0
    %2786 = vmatprep.subr.mxu0 0.0
    %2787 = vmatpush1.msra.mxu0 0.0
    %2788 = vmatprep.subr.mxu0 0.0
    %2789 = vmatpush1.msra.mxu0 0.0
    %2790 = vmatprep.subr.mxu0 0.0
    %2791 = vmatpush1.msra.mxu0 0.0
    %2792 = vmatprep.subr.mxu0 0.0
    %2793 = vmatpush1.msra.mxu0 0.0
    %2794 = vmatprep.subr.mxu0 0.0
    %2795 = vmatpush1.msra.mxu0 0.0
    %2796 = vmatprep.subr.mxu0 0.0
    %2797 = vmatpush1.msra.mxu0 0.0
    %2798 = vmatprep.subr.mxu0 0.0
    %2799 = vmatpush1.msra.mxu0 0.0
    %2800 = vmatprep.subr.mxu0 0.0
    %2801 = vmatpush1.msra.mxu0 0.0
    %2802 = vmatprep.mubr.f32.mxu0 0.0
    %2803 = vmatmul.mubr.f32.gmra.mrb[0].mxu0 %v2736
    %v2804 = vpop.f32.mrb[0].mxu0
    %v2805 = vadd.f32 0.0, %v2804
    %v2806 = vpop.f32.mrb[0].mxu0
    %2807 = vdwg.mxu0
    %v2808 = vadd.f32 %v2726, %v2805
    %v2809 = vtanh.pop %v2808
    %v2810 = vxor.u32 %v2808, 2147483648
    %v2811 = vmul.f32 %v2810, 1.442695
    %v2812 = vpow.pop %v2811
    %v2813 = vadd.f32 %v2812, 1.0
    %v2814 = vrcp.pop %v2813
    %v2815 = vmul.f32 1.0, %v2814
    %v2816 = vsel %vm110, %v2809, %v2815
    %v2817 = vld [vmem:[#allocation3] sm:$0xff]
    %2819 = vrot.lane.b32.xlu0 %v2817, 32
    %v2820 = vpop.permute.xlu0 %2819
    %v2822 = vmul.f32 %v2816, %v2820
    %2824 = vrot.lane.b32.xlu0 %v2816, 64
    %v2825 = vpop.permute.xlu0 %2824
    %v2827 = vmul.f32 %v2816, %v2825
    %2829 = vrot.lane.b32.xlu0 %v2827, 32
    %v2830 = vpop.permute.xlu0 %2829
    %v2832 = vadd.f32 %v2822, %v2830
    %v2833 = vtanh.pop %v2832
    %2835 = vrot.lane.b32.xlu0 %v2833, 64
    %v2836 = vpop.permute.xlu0 %2835
    %v2838 = vmul.f32 %v2816, %v2836
    %2840 = vrot.lane.b32.xlu0 %v2727, 96
    %v2841 = vpop.permute.xlu0 %2840
    %v2843 = vsel %vm1501, %v2838, %v2841
    %v2844 = vsel %vm1501, %v2832, %v2820
    %2846 = vrot.lane.b32.xlu0 %v2843, 32
    %v2847 = vpop.permute.xlu0 %2846
    %2849 = vst.msk [vmem:[#allocation2] sm:$0xff] %vm335, %v2847
    %2851 = vrot.lane.b32.xlu0 %v2844, 96
    %v2852 = vpop.permute.xlu0 %2851
    %2854 = vst.msk [vmem:[#allocation3] sm:$0xff] %vm335, %v2852
    %v2855 = vld [vmem:[#allocation2] sm:$0xff]
    %v2857 = vrot.slane %v2855, 4
    %2858 = vrot.lane.b32.xlu0 %v2857, 32
    %v2859 = vpop.permute.xlu0 %2858
    %v2861 = vsel %vm335, %v2855, %v2859
    %v2862 = vld [vmem:[%s12] sm:$0xff]
    %v2863 = vld [vmem:[%s12 + $0x8] sm:$0xff]
    %v2864 = vld [vmem:[%s12 + $0x10] sm:$0xff]
    %v2865 = vld [vmem:[%s12 + $0x18] sm:$0xff]
    %v2866 = vld [vmem:[%s12 + $0x20] sm:$0xff]
    %v2867 = vld [vmem:[%s12 + $0x28] sm:$0xff]
    %v2868 = vld [vmem:[%s12 + $0x30] sm:$0xff]
    %v2869 = vld [vmem:[%s12 + $0x38] sm:$0xff]
    %v2870 = vld [vmem:[%s13] sm:$0x1]
    %v2872 = vlaneseq
    %v2873 = vshrl.u32 %v2872, 7
    %v2874 = vsub.s32 0, %v2873
    %v2875 = vrot.slane %v2870, %v2874
    %v2878 = vsel %vm352, %v2861, 0
    %2880 = vmatprep.subr.mxu0 0.0
    %2881 = vmatpush1.msra.mxu0 %v2862
    %2882 = vmatprep.subr.mxu0 0.0
    %2883 = vmatpush1.msra.mxu0 %v2863
    %2884 = vmatprep.subr.mxu0 0.0
    %2885 = vmatpush1.msra.mxu0 %v2864
    %2886 = vmatprep.subr.mxu0 0.0
    %2887 = vmatpush1.msra.mxu0 %v2865
    %2888 = vmatprep.subr.mxu0 0.0
    %2889 = vmatpush1.msra.mxu0 %v2866
    %2890 = vmatprep.subr.mxu0 0.0
    %2891 = vmatpush1.msra.mxu0 %v2867
    %2892 = vmatprep.subr.mxu0 0.0
    %2893 = vmatpush1.msra.mxu0 %v2868
    %2894 = vmatprep.subr.mxu0 0.0
    %2895 = vmatpush1.msra.mxu0 %v2869
    %2896 = vmatprep.subr.mxu0 0.0
    %2897 = vmatpush1.msra.mxu0 0.0
    %2898 = vmatprep.subr.mxu0 0.0
    %2899 = vmatpush1.msra.mxu0 0.0
    %2900 = vmatprep.subr.mxu0 0.0
    %2901 = vmatpush1.msra.mxu0 0.0
    %2902 = vmatprep.subr.mxu0 0.0
    %2903 = vmatpush1.msra.mxu0 0.0
    %2904 = vmatprep.subr.mxu0 0.0
    %2905 = vmatpush1.msra.mxu0 0.0
    %2906 = vmatprep.subr.mxu0 0.0
    %2907 = vmatpush1.msra.mxu0 0.0
    %2908 = vmatprep.subr.mxu0 0.0
    %2909 = vmatpush1.msra.mxu0 0.0
    %2910 = vmatprep.subr.mxu0 0.0
    %2911 = vmatpush1.msra.mxu0 0.0
    %2912 = vmatprep.subr.mxu0 0.0
    %2913 = vmatpush1.msra.mxu0 0.0
    %2914 = vmatprep.subr.mxu0 0.0
    %2915 = vmatpush1.msra.mxu0 0.0
    %2916 = vmatprep.subr.mxu0 0.0
    %2917 = vmatpush1.msra.mxu0 0.0
    %2918 = vmatprep.subr.mxu0 0.0
    %2919 = vmatpush1.msra.mxu0 0.0
    %2920 = vmatprep.subr.mxu0 0.0
    %2921 = vmatpush1.msra.mxu0 0.0
    %2922 = vmatprep.subr.mxu0 0.0
    %2923 = vmatpush1.msra.mxu0 0.0
    %2924 = vmatprep.subr.mxu0 0.0
    %2925 = vmatpush1.msra.mxu0 0.0
    %2926 = vmatprep.subr.mxu0 0.0
    %2927 = vmatpush1.msra.mxu0 0.0
    %2928 = vmatprep.subr.mxu0 0.0
    %2929 = vmatpush1.msra.mxu0 0.0
    %2930 = vmatprep.subr.mxu0 0.0
    %2931 = vmatpush1.msra.mxu0 0.0
    %2932 = vmatprep.subr.mxu0 0.0
    %2933 = vmatpush1.msra.mxu0 0.0
    %2934 = vmatprep.subr.mxu0 0.0
    %2935 = vmatpush1.msra.mxu0 0.0
    %2936 = vmatprep.subr.mxu0 0.0
    %2937 = vmatpush1.msra.mxu0 0.0
    %2938 = vmatprep.subr.mxu0 0.0
    %2939 = vmatpush1.msra.mxu0 0.0
    %2940 = vmatprep.subr.mxu0 0.0
    %2941 = vmatpush1.msra.mxu0 0.0
    %2942 = vmatprep.subr.mxu0 0.0
    %2943 = vmatpush1.msra.mxu0 0.0
    %2944 = vmatprep.mubr.f32.mxu0 0.0
    %2945 = vmatmul.mubr.f32.gmra.mrb[0].mxu0 %v2878
    %v2946 = vpop.f32.mrb[0].mxu0
    %v2947 = vadd.f32 %v2875, %v2946
    %v2948 = vpop.f32.mrb[0].mxu0
    %2949 = vdwg.mxu0
    %vm2950 = vcmask 11264
    %2951 = vst.msk [vmem:[%s14] sm:$0xf] %vm2950, %v2947
    // Predicated region
    $region74: #{tpu_custom_call.1} parent=1 // pred_check
      _
    $region75: #{tpu_custom_call.1} parent=1 // pred_check_branch
      %2953 = sbr.rel (0) target = $region77
    $region76: #{tpu_custom_call.1} parent=1 // pred_region
      _
    $region77: #{tpu_custom_call.1} parent=1 // pred_fallthru
      _
    // Predicated region
    $region78: #{tpu_custom_call.1} parent=1 // pred_check
      _
    $region79: #{tpu_custom_call.1} parent=1 // pred_check_branch
      %2955 = sbr.rel (0) target = $region81
    $region80: #{tpu_custom_call.1} parent=1 // pred_region
      _
    $region81: #{tpu_custom_call.1} parent=1 // pred_fallthru
      _
    %2956 = vsyncpa [#allocation9], 1
    %2957 = vsyncpa [#allocation11], 1
    %2958 = vsyncpa [#allocation14], 1

</llo_original>
